<compile_context>
chip_gen: v7x
topology: tpu7x:2x2x1
jax: 0.10.0
libtpu: 0.0.40
codegen_flags: <defaults>
</compile_context>

<pallas_src>
import numpy as np
import jax
import jax.numpy as jnp
from jax.experimental import pallas as pl
from jax.experimental.pallas import tpu as pltpu

# ----------------------------- configuration -------------------------------
MAX_SEQ_LEN = 16          # max mel-side sequence length
D_MODEL     = 32
PH_LAYERS   = 1
PH_HEAD     = 2
PH_FILTER   = 64          # phoneme_side_conv1d_filter_size
MEL_LAYERS  = 1
MEL_HEAD    = 2
MEL_FILTER  = 64          # mel_side_conv1d_filter_size
D_K = D_V   = 64          # hard-coded in the reference module
K1, K2      = 3, 1        # fft_conv1d_kernel
P1, P2      = 1, 0        # fft_conv1d_padding
DP_FILTER   = 32          # duration_predictor_filter_size
DP_KERNEL   = 3
DP_PAD      = (DP_KERNEL - 1) // 2
N_MELS      = 8
N_PHNS      = 85          # len(symbols) + 1  (synthetic vocabulary)
LN_EPS      = 1e-5
LANE        = 128         # lane-dense width for narrow output projections
MXU_DTYPE   = jnp.bfloat16  # MXU operand dtype (f32 accumulation everywhere)

assert PH_HEAD == MEL_HEAD and PH_FILTER == MEL_FILTER  # layers are stacked


# --------------------------- in-kernel helpers ------------------------------
def _one_hot(idx_col, n):
    """(R,1) int32 -> (R,n) f32 one-hot (gathers realized as small matmuls)."""
    iota = jax.lax.broadcasted_iota(jnp.int32, (idx_col.shape[0], n), 1)
    return (idx_col == iota).astype(jnp.float32)


def _layernorm(y, g, b):
    """LayerNorm over the last axis (fp32)."""
    mu = jnp.mean(y, axis=-1, keepdims=True)
    var = jnp.mean(jnp.square(y - mu), axis=-1, keepdims=True)
    return (y - mu) * jax.lax.rsqrt(var + LN_EPS) * g + b


def _key_pad_negmask(npad):
    """(T,1) non-pad indicator -> (T,T) additive key-pad mask (0 / -1e9).

    Outer product via dot_general places the per-key flag on the lane axis
    without any transpose / relayout.
    """
    ones_col = jnp.ones_like(npad)
    return jax.lax.dot_general(ones_col, npad - 1.0, (((1,), (1,)), ((), ())),
                               preferred_element_type=jnp.float32) * 1e9


def _conv1d_im2col(x, w_flat, b_row, ksize, pad):
    """'same' 1-D conv as one matmul.

    x: (T, Cin) f32; w_flat: (ksize*Cin, Cout) bf16 (taps stacked along rows);
    b_row: (1, Cout) f32.  The (T, K*Cin) im2col matrix is built with sublane
    rolls + boundary masks (no pad-concat, no overlapping slices).
    """
    t, cin = x.shape
    if ksize == 1:
        xcat = x
    else:
        row = jax.lax.broadcasted_iota(jnp.int32, (t, cin), 0)
        pieces = []
        for tap in range(ksize):
            off = tap - pad                      # piece[t] = x[t + off] or 0
            if off == 0:
                pieces.append(x)
            else:
                rolled = pltpu.roll(x, shift=(-off) % t, axis=0)
                ok = jnp.logical_and(row + off >= 0, row + off < t)
                pieces.append(jnp.where(ok, rolled, 0.0))
        xcat = jnp.concatenate(pieces, axis=-1)  # (T, ksize*Cin)
    h = jnp.dot(xcat.astype(w_flat.dtype), w_flat,
                preferred_element_type=jnp.float32)
    return h + b_row


def _fft_layer(x, npad, negmask, wqkv, bqkv, wo, rows, w1, b1, w2, n_head):
    """One FFT block (MHA + add&LN + conv-FFN + add&LN) on a (T, D) value."""
    hd = n_head * D_K
    scale = 1.0 / float(np.sqrt(D_K))
    bo, ln1_g, ln1_b = rows[0:1, :], rows[1:2, :], rows[2:3, :]
    b2, ln2_g, ln2_b = rows[3:4, :], rows[4:5, :], rows[5:6, :]

    # fused QKV projection (single MXU push)
    qkv = jnp.dot(x.astype(wqkv.dtype), wqkv,
                  preferred_element_type=jnp.float32) + bqkv      # (T, 3*hd)

    # per-head attention; heads accumulated through wo slices (no lane concat)
    attn = bo
    for h in range(n_head):
        qh = qkv[:, h * D_K:(h + 1) * D_K]
        kh = qkv[:, hd + h * D_K:hd + (h + 1) * D_K]
        vh = qkv[:, 2 * hd + h * D_K:2 * hd + (h + 1) * D_K]
        s = jax.lax.dot_general(qh.astype(MXU_DTYPE), kh.astype(MXU_DTYPE),
                                (((1,), (1,)), ((), ())),
                                preferred_element_type=jnp.float32) * scale
        s = s + negmask                           # mask on f32 scores
        s = s - jnp.max(s, axis=-1, keepdims=True)
        e = jnp.exp(s)
        p = e * pl.reciprocal(jnp.sum(e, axis=-1, keepdims=True), approx=True)
        ctx = jnp.dot(p.astype(MXU_DTYPE), vh.astype(MXU_DTYPE),
                      preferred_element_type=jnp.float32)
        attn = attn + jnp.dot(ctx.astype(wo.dtype),
                              wo[h * D_V:(h + 1) * D_V, :],
                              preferred_element_type=jnp.float32)

    h0 = _layernorm(attn + x, ln1_g, ln1_b) * npad                # (T, D)

    # position-wise conv feed-forward
    h1 = jnp.maximum(_conv1d_im2col(h0, w1, b1, K1, P1), 0.0)
    h2 = _conv1d_im2col(h1, w2, b2, K2, P2)
    return _layernorm(h2 + h0, ln2_g, ln2_b) * npad


# ------------------------------ fused kernel --------------------------------
def _fastspeech_kernel(seq_ref, pos_ref, src_ref, posm_ref,       # int32 blocks
                       emb_ref, postab_ref,                        # tables
                       wqkv_ref, bqkv_ref, wo_ref, rows_ref,       # stacked FFT
                       w1_ref, b1_ref, w2_ref,
                       dpw1_ref, dpw2_ref, dprows_ref, dpwl_ref, dpbl_ref,
                       melw_ref, melb_ref,
                       mel_ref, dur_ref):
    """Whole FastSpeech forward for one batch element."""
    t_in = seq_ref.shape[0]
    n_pos = postab_ref.shape[0]
    postab = postab_ref[...]                                      # (n_pos, D)

    # -------- phoneme side: embedding + pos-enc + masks (all in-kernel) -----
    seq_col = seq_ref[...]                                         # (T,1) i32
    pos_col = pos_ref[...]                                         # (T,1) i32
    x = (jnp.dot(_one_hot(seq_col, N_PHNS), emb_ref[...],
                 preferred_element_type=jnp.float32) +
         jnp.dot(_one_hot(pos_col, n_pos), postab,
                 preferred_element_type=jnp.float32))              # (T, D)
    npad = (pos_col != 0).astype(jnp.float32)                      # (T,1)
    negm = _key_pad_negmask(npad)                                  # (T,T)

    for li in range(PH_LAYERS):
        x = _fft_layer(x, npad, negm,
                       wqkv_ref[li], bqkv_ref[li], wo_ref[li], rows_ref[li],
                       w1_ref[li], b1_ref[li], w2_ref[li], PH_HEAD)

    # ----------------------------- duration predictor -----------------------
    # padded rows of x are already zero (FFT output is masked), matching the
    # reference's `input *= input_mask`.
    dpr = dprows_ref[...]                                          # (6, DPF)
    h = jnp.maximum(_conv1d_im2col(x, dpw1_ref[...], dpr[0:1, :],
                                   DP_KERNEL, DP_PAD), 0.0)
    h = _layernorm(h, dpr[1:2, :], dpr[2:3, :])
    h = jnp.maximum(_conv1d_im2col(h, dpw2_ref[...], dpr[3:4, :],
                                   DP_KERNEL, DP_PAD), 0.0)
    h = _layernorm(h, dpr[4:5, :], dpr[5:6, :])
    dur = jnp.dot(h.astype(MXU_DTYPE), dpwl_ref[...],
                  preferred_element_type=jnp.float32) + dpbl_ref[...]
    dur_ref[...] = (dur * npad).astype(dur_ref.dtype)   # (T, LANE) lane-dense

    # ---------- length regulation (teacher durations; indices prebuilt) -----
    src_col = src_ref[...]                                         # (L,1) i32
    posm_col = posm_ref[...]                                       # (L,1) i32
    npad_m = (posm_col != 0).astype(jnp.float32)                   # (L,1)
    y = (jnp.dot(_one_hot(src_col, t_in), x,
                 preferred_element_type=jnp.float32) * npad_m +
         jnp.dot(_one_hot(posm_col, n_pos), postab,
                 preferred_element_type=jnp.float32))              # (L, D)
    negm_m = _key_pad_negmask(npad_m)

    # ------------------------------- mel side -------------------------------
    for li in range(MEL_LAYERS):
        k = PH_LAYERS + li
        y = _fft_layer(y, npad_m, negm_m,
                       wqkv_ref[k], bqkv_ref[k], wo_ref[k], rows_ref[k],
                       w1_ref[k], b1_ref[k], w2_ref[k], MEL_HEAD)

    mel = jnp.dot(y.astype(MXU_DTYPE), melw_ref[...],
                  preferred_element_type=jnp.float32) + melb_ref[...]
    mel_ref[...] = mel.astype(mel_ref.dtype)            # (L, LANE) lane-dense


# ------------------------------ kernel wrapper -------------------------------
def _call_fused(params, seq3, pos3, src3, posm3):
    bsz, t_in, _ = seq3.shape
    l_out = src3.shape[1]
    fft, dur = params["fft"], params["dur"]

    def full(arr):
        nd = arr.ndim
        return pl.BlockSpec(arr.shape, lambda i, _n=nd: (0,) * _n)

    in_specs = [
        pl.BlockSpec((None, t_in, 1), lambda i: (i, 0, 0)),   # seq
        pl.BlockSpec((None, t_in, 1), lambda i: (i, 0, 0)),   # pos
        pl.BlockSpec((None, l_out, 1), lambda i: (i, 0, 0)),  # src indices
        pl.BlockSpec((None, l_out, 1), lambda i: (i, 0, 0)),  # pos_mel
        full(params["word_emb"]), full(params["pos_table"]),
        full(fft["wqkv"]), full(fft["bqkv"]), full(fft["wo"]), full(fft["rows"]),
        full(fft["w1"]), full(fft["b1"]), full(fft["w2"]),
        full(dur["w1"]), full(dur["w2"]), full(dur["rows"]),
        full(dur["wl"]), full(dur["bl"]),
        full(params["mel_w_pad"]), full(params["mel_b_pad"]),
    ]
    out_specs = [
        pl.BlockSpec((None, l_out, LANE), lambda i: (i, 0, 0)),
        pl.BlockSpec((None, t_in, LANE), lambda i: (i, 0, 0)),
    ]
    out_shape = [
        jax.ShapeDtypeStruct((bsz, l_out, LANE), jnp.float32),
        jax.ShapeDtypeStruct((bsz, t_in, LANE), jnp.float32),
    ]
    mel_pad, dur_pad = pl.pallas_call(
        _fastspeech_kernel,
        grid=(bsz,),
        in_specs=in_specs,
        out_specs=out_specs,
        out_shape=out_shape,
        compiler_params=pltpu.CompilerParams(
            dimension_semantics=("parallel",),   # batch -> 2 TCs on v7x
            vmem_limit_bytes=16 * 1024 * 1024),  # total footprint << 1 MiB
    )(seq3, pos3, src3, posm3,
      params["word_emb"], params["pos_table"],
      fft["wqkv"], fft["bqkv"], fft["wo"], fft["rows"],
      fft["w1"], fft["b1"], fft["w2"],
      dur["w1"], dur["w2"], dur["rows"], dur["wl"], dur["bl"],
      params["mel_w_pad"], params["mel_b_pad"])
    return mel_pad, dur_pad


def fastspeech_forward(params, seq, pos, duration_target, alpha=1.0):
    """FastSpeech forward (teacher-forced durations, eval mode)."""
    bsz, t_in = seq.shape
    l_out = MAX_SEQ_LEN

    # length-regulation gather indices from teacher durations (tiny JAX glue).
    # TODO(synk): dynamic-length outputs are not expressible in JAX; the output
    # length is fixed to max_seq_len (the reference module clips to it anyway).
    repeats = jnp.round(duration_target.astype(jnp.float32) * alpha).astype(jnp.int32)
    cum = jnp.cumsum(repeats, axis=1)                              # (B, T)
    total = cum[:, -1]                                             # (B,)
    t_idx = jnp.arange(l_out, dtype=jnp.int32)                     # (L,)
    src = jnp.sum((cum[:, None, :] <= t_idx[None, :, None]).astype(jnp.int32),
                  axis=-1)
    src = jnp.clip(src, 0, t_in - 1)                               # (B, L)
    valid = t_idx[None, :] < total[:, None]
    pos_mel = jnp.where(valid, t_idx[None, :] + 1, 0).astype(jnp.int32)

    mel_pad, dur_pad = _call_fused(
        params,
        seq.astype(jnp.int32)[..., None], pos.astype(jnp.int32)[..., None],
        src[..., None], pos_mel[..., None])

    mel = mel_pad[:, :, :N_MELS]                                   # un-pad lanes
    duration = dur_pad[:, :, 0]                                    # (B, T)
    mel_mask = (pos_mel != 0).astype(jnp.float32)[..., None]       # (B, L, 1)
    return mel, mel_mask, duration


# ------------------------------ model pieces --------------------------------
def sinusoid_table(n_pos, d_model):
    pos = np.arange(n_pos)[:, None].astype(np.float64)
    i = np.arange(d_model)[None, :]
    angle = pos / np.power(10000.0, 2.0 * (i // 2) / d_model)
    tab = np.zeros((n_pos, d_model), np.float64)
    tab[:, 0::2] = np.sin(angle[:, 0::2])
    tab[:, 1::2] = np.cos(angle[:, 1::2])
    tab[0] = 0.0                                       # padding_idx = 0
    return jnp.asarray(tab, jnp.float32)


class KeyGen:
    def __init__(self, key):
        self.key = key

    def __call__(self):
        self.key, sub = jax.random.split(self.key)
        return sub


def init_params(key):
    """Parameters in kernel-ready layout.

    QKV weights concatenated; conv weights flattened to (K*Cin, Cout); bias /
    LayerNorm rows packed into one (6, C) block per sub-module; the two FFT
    layers stacked on a leading axis (0 = phoneme side, 1 = mel side); narrow
    projections zero-padded to LANE columns; MXU weights stored in bf16.
    """
    kg = KeyGen(key)

    def nrm(shape, scale=0.02):
        return (scale * jax.random.normal(kg(), shape)).astype(jnp.float32)

    hd = PH_HEAD * D_K
    zeros_d, ones_d = jnp.zeros((D_MODEL,)), jnp.ones((D_MODEL,))

    def fft_layer():
        wqkv = jnp.concatenate([nrm((D_MODEL, hd)), nrm((D_MODEL, hd)),
                                nrm((D_MODEL, hd))], axis=1)
        rows = jnp.stack([zeros_d, ones_d, zeros_d,      # bo, ln1_g, ln1_b
                          zeros_d, ones_d, zeros_d])     # b2, ln2_g, ln2_b
        return dict(
            wqkv=wqkv, bqkv=jnp.zeros((1, 3 * hd), jnp.float32),
            wo=nrm((hd, D_MODEL)), rows=rows,
            w1=nrm((K1, D_MODEL, PH_FILTER)).reshape(K1 * D_MODEL, PH_FILTER),
            b1=jnp.zeros((1, PH_FILTER), jnp.float32),
            w2=nrm((K2, PH_FILTER, D_MODEL)).reshape(K2 * PH_FILTER, D_MODEL))

    layers = [fft_layer() for _ in range(PH_LAYERS + MEL_LAYERS)]
    fft = dict(
        wqkv=jnp.stack([l["wqkv"] for l in layers]).astype(MXU_DTYPE),
        bqkv=jnp.stack([l["bqkv"] for l in layers]),
        wo=jnp.stack([l["wo"] for l in layers]).astype(MXU_DTYPE),
        rows=jnp.stack([l["rows"] for l in layers]),
        w1=jnp.stack([l["w1"] for l in layers]).astype(MXU_DTYPE),
        b1=jnp.stack([l["b1"] for l in layers]),
        w2=jnp.stack([l["w2"] for l in layers]).astype(MXU_DTYPE),
    )

    zeros_f, ones_f = jnp.zeros((DP_FILTER,)), jnp.ones((DP_FILTER,))
    dur = dict(
        w1=nrm((DP_KERNEL, D_MODEL, DP_FILTER))
            .reshape(DP_KERNEL * D_MODEL, DP_FILTER).astype(MXU_DTYPE),
        w2=nrm((DP_KERNEL, DP_FILTER, DP_FILTER))
            .reshape(DP_KERNEL * DP_FILTER, DP_FILTER).astype(MXU_DTYPE),
        rows=jnp.stack([zeros_f, ones_f, zeros_f,        # b1, ln1_g, ln1_b
                        zeros_f, ones_f, zeros_f]),      # b2, ln2_g, ln2_b
        wl=jnp.pad(nrm((DP_FILTER, 1)), ((0, 0), (0, LANE - 1))).astype(MXU_DTYPE),
        bl=jnp.zeros((1, LANE), jnp.float32),
    )

    return dict(
        word_emb=nrm((N_PHNS, D_MODEL)).at[0].set(0.0),
        pos_table=sinusoid_table(MAX_SEQ_LEN + 1, D_MODEL),
        fft=fft,
        dur=dur,
        mel_w_pad=jnp.pad(nrm((D_MODEL, N_MELS)),
                          ((0, 0), (0, LANE - N_MELS))).astype(MXU_DTYPE),
        mel_b_pad=jnp.zeros((1, LANE), jnp.float32),
    )


# --------------------------------- main --------------------------------------
if __name__ == "__main__":
    key = jax.random.PRNGKey(0)
    k_params, k_tok = jax.random.split(key)
    params = init_params(k_params)

    B, T_IN = 2, 8
    lens = jnp.array([8, 6], jnp.int32)
    idx = jnp.arange(T_IN, dtype=jnp.int32)[None, :]
    valid = idx < lens[:, None]

    tok = jax.random.randint(k_tok, (B, T_IN), 1, N_PHNS, dtype=jnp.int32)
    seq = jnp.where(valid, tok, 0)                         # (B, T_in) phoneme ids
    pos = jnp.where(valid, idx + 1, 0).astype(jnp.int32)   # 1-based positions
    duration_target = jnp.where(
        valid,
        jnp.array([[2, 2, 2, 2, 2, 2, 2, 2],
                   [3, 2, 3, 2, 2, 2, 0, 0]], jnp.int32),
        0)

    fwd = jax.jit(fastspeech_forward)
    mel, mel_mask, duration = fwd(params, seq, pos, duration_target, 1.0)
    jax.block_until_ready((mel, mel_mask, duration))

    assert mel.shape == (B, MAX_SEQ_LEN, N_MELS)
    assert mel_mask.shape == (B, MAX_SEQ_LEN, 1)
    assert duration.shape == (B, T_IN)
    assert bool(jnp.all(jnp.isfinite(mel)))
    assert bool(jnp.all(jnp.isfinite(duration)))
    print("KERNEL_OK")
</pallas_src>

<mosaic_0001>
module attributes {stable_mosaic.version = 11 : i64} {
  func.func @_fastspeech_kernel(%arg0: i32, %arg1: memref<1x8x1xi32, #tpu.memory_space<vmem>>, %arg2: memref<1x8x1xi32, #tpu.memory_space<vmem>>, %arg3: memref<1x16x1xi32, #tpu.memory_space<vmem>>, %arg4: memref<1x16x1xi32, #tpu.memory_space<vmem>>, %arg5: memref<85x32xf32, #tpu.memory_space<vmem>>, %arg6: memref<17x32xf32, #tpu.memory_space<vmem>>, %arg7: memref<2x32x384xbf16, #tpu.memory_space<vmem>>, %arg8: memref<2x1x384xf32, #tpu.memory_space<vmem>>, %arg9: memref<2x128x32xbf16, #tpu.memory_space<vmem>>, %arg10: memref<2x6x32xf32, #tpu.memory_space<vmem>>, %arg11: memref<2x96x64xbf16, #tpu.memory_space<vmem>>, %arg12: memref<2x1x64xf32, #tpu.memory_space<vmem>>, %arg13: memref<2x64x32xbf16, #tpu.memory_space<vmem>>, %arg14: memref<96x32xbf16, #tpu.memory_space<vmem>>, %arg15: memref<96x32xbf16, #tpu.memory_space<vmem>>, %arg16: memref<6x32xf32, #tpu.memory_space<vmem>>, %arg17: memref<32x128xbf16, #tpu.memory_space<vmem>>, %arg18: memref<1x128xf32, #tpu.memory_space<vmem>>, %arg19: memref<32x128xbf16, #tpu.memory_space<vmem>>, %arg20: memref<1x128xf32, #tpu.memory_space<vmem>>, %arg21: memref<1x16x128xf32, #tpu.memory_space<vmem>>, %arg22: memref<1x8x128xf32, #tpu.memory_space<vmem>>) attributes {dimension_semantics = [#tpu.dimension_semantics<parallel>], iteration_bounds = array<i64: 2>, scalar_prefetch = 0 : i64, scratch_operands = 0 : i64, tpu.core_type = #tpu.core_type<tc>, window_params = [{transform_indices = @transform_0, window_bounds = array<i64: 1, 8, 1>}, {transform_indices = @transform_1, window_bounds = array<i64: 1, 8, 1>}, {transform_indices = @transform_2, window_bounds = array<i64: 1, 16, 1>}, {transform_indices = @transform_3, window_bounds = array<i64: 1, 16, 1>}, {pipeline_mode = #tpu.pipeline_mode<synchronous>, transform_indices = @transform_4, window_bounds = array<i64: 85, 32>}, {pipeline_mode = #tpu.pipeline_mode<synchronous>, transform_indices = @transform_5, window_bounds = array<i64: 17, 32>}, {pipeline_mode = #tpu.pipeline_mode<synchronous>, transform_indices = @transform_6, window_bounds = array<i64: 2, 32, 384>}, {pipeline_mode = #tpu.pipeline_mode<synchronous>, transform_indices = @transform_7, window_bounds = array<i64: 2, 1, 384>}, {pipeline_mode = #tpu.pipeline_mode<synchronous>, transform_indices = @transform_8, window_bounds = array<i64: 2, 128, 32>}, {pipeline_mode = #tpu.pipeline_mode<synchronous>, transform_indices = @transform_9, window_bounds = array<i64: 2, 6, 32>}, {pipeline_mode = #tpu.pipeline_mode<synchronous>, transform_indices = @transform_10, window_bounds = array<i64: 2, 96, 64>}, {pipeline_mode = #tpu.pipeline_mode<synchronous>, transform_indices = @transform_11, window_bounds = array<i64: 2, 1, 64>}, {pipeline_mode = #tpu.pipeline_mode<synchronous>, transform_indices = @transform_12, window_bounds = array<i64: 2, 64, 32>}, {pipeline_mode = #tpu.pipeline_mode<synchronous>, transform_indices = @transform_13, window_bounds = array<i64: 96, 32>}, {pipeline_mode = #tpu.pipeline_mode<synchronous>, transform_indices = @transform_14, window_bounds = array<i64: 96, 32>}, {pipeline_mode = #tpu.pipeline_mode<synchronous>, transform_indices = @transform_15, window_bounds = array<i64: 6, 32>}, {pipeline_mode = #tpu.pipeline_mode<synchronous>, transform_indices = @transform_16, window_bounds = array<i64: 32, 128>}, {pipeline_mode = #tpu.pipeline_mode<synchronous>, transform_indices = @transform_17, window_bounds = array<i64: 1, 128>}, {pipeline_mode = #tpu.pipeline_mode<synchronous>, transform_indices = @transform_18, window_bounds = array<i64: 32, 128>}, {pipeline_mode = #tpu.pipeline_mode<synchronous>, transform_indices = @transform_19, window_bounds = array<i64: 1, 128>}, {transform_indices = @transform_20, window_bounds = array<i64: 1, 16, 128>}, {transform_indices = @transform_21, window_bounds = array<i64: 1, 8, 128>}]} {
    %c0 = arith.constant 0 : index
    %c0_0 = arith.constant 0 : index
    %0 = vector.load %arg6[%c0, %c0_0] : memref<17x32xf32, #tpu.memory_space<vmem>>, vector<17x32xf32>
    %c0_1 = arith.constant 0 : index
    %c0_2 = arith.constant 0 : index
    %c0_3 = arith.constant 0 : index
    %1 = vector.load %arg1[%c0_1, %c0_2, %c0_3] : memref<1x8x1xi32, #tpu.memory_space<vmem>>, vector<1x8x1xi32>
    %2 = vector.shape_cast %1 : vector<1x8x1xi32> to vector<8x1xi32>
    %c0_4 = arith.constant 0 : index
    %c0_5 = arith.constant 0 : index
    %c0_6 = arith.constant 0 : index
    %3 = vector.load %arg2[%c0_4, %c0_5, %c0_6] : memref<1x8x1xi32, #tpu.memory_space<vmem>>, vector<1x8x1xi32>
    %4 = vector.shape_cast %3 : vector<1x8x1xi32> to vector<8x1xi32>
    %5 = tpu.iota {dimensions = array<i32: 1>} : vector<8x85xi32>
    %6 = vector.broadcast %2 : vector<8x1xi32> to vector<8x85xi32>
    %7 = arith.cmpi eq, %6, %5 : vector<8x85xi32>
    %8 = arith.extui %7 : vector<8x85xi1> to vector<8x85xi32>
    %9 = arith.sitofp %8 : vector<8x85xi32> to vector<8x85xf32>
    %c0_7 = arith.constant 0 : index
    %c0_8 = arith.constant 0 : index
    %10 = vector.load %arg5[%c0_7, %c0_8] : memref<85x32xf32, #tpu.memory_space<vmem>>, vector<85x32xf32>
    %cst = arith.constant dense<0.000000e+00> : vector<8x32xf32>
    %11 = tpu.matmul %9, %10, %cst {dimension_numbers = #tpu.dot_dimension_numbers<[1], [0], [0], [1], [0, 0, 1, 1], [], []>} : vector<8x85xf32>, vector<85x32xf32>, vector<8x32xf32> -> vector<8x32xf32>
    %12 = tpu.iota {dimensions = array<i32: 1>} : vector<8x17xi32>
    %13 = vector.broadcast %4 : vector<8x1xi32> to vector<8x17xi32>
    %14 = arith.cmpi eq, %13, %12 : vector<8x17xi32>
    %15 = arith.extui %14 : vector<8x17xi1> to vector<8x17xi32>
    %16 = arith.sitofp %15 : vector<8x17xi32> to vector<8x17xf32>
    %cst_9 = arith.constant dense<0.000000e+00> : vector<8x32xf32>
    %17 = tpu.matmul %16, %0, %cst_9 {dimension_numbers = #tpu.dot_dimension_numbers<[1], [0], [0], [1], [0, 0, 1, 1], [], []>} : vector<8x17xf32>, vector<17x32xf32>, vector<8x32xf32> -> vector<8x32xf32>
    %18 = arith.addf %11, %17 : vector<8x32xf32>
    %c0_i32 = arith.constant 0 : i32
    %19 = vector.broadcast %c0_i32 : i32 to vector<8x1xi32>
    %20 = arith.cmpi ne, %4, %19 : vector<8x1xi32>
    %21 = arith.extui %20 : vector<8x1xi1> to vector<8x1xi32>
    %22 = arith.sitofp %21 : vector<8x1xi32> to vector<8x1xf32>
    %cst_10 = arith.constant 1.000000e+00 : f32
    %23 = vector.broadcast %cst_10 : f32 to vector<8x1xf32>
    %cst_11 = arith.constant 1.000000e+00 : f32
    %24 = vector.broadcast %cst_11 : f32 to vector<8x1xf32>
    %25 = arith.subf %22, %24 : vector<8x1xf32>
    %cst_12 = arith.constant dense<0.000000e+00> : vector<8x8xf32>
    %26 = tpu.matmul %23, %25, %cst_12 {dimension_numbers = #tpu.dot_dimension_numbers<[1], [1], [0], [0], [0, 0, 1, 0], [], []>} : vector<8x1xf32>, vector<8x1xf32>, vector<8x8xf32> -> vector<8x8xf32>
    %cst_13 = arith.constant 1.000000e+09 : f32
    %27 = vector.broadcast %cst_13 : f32 to vector<8x8xf32>
    %28 = arith.mulf %26, %27 : vector<8x8xf32>
    %c0_14 = arith.constant 0 : index
    %c0_15 = arith.constant 0 : index
    %c0_16 = arith.constant 0 : index
    %29 = vector.load %arg7[%c0_14, %c0_15, %c0_16] : memref<2x32x384xbf16, #tpu.memory_space<vmem>>, vector<1x32x384xbf16>
    %30 = vector.shape_cast %29 : vector<1x32x384xbf16> to vector<32x384xbf16>
    %c0_17 = arith.constant 0 : index
    %c0_18 = arith.constant 0 : index
    %c0_19 = arith.constant 0 : index
    %31 = vector.load %arg8[%c0_17, %c0_18, %c0_19] : memref<2x1x384xf32, #tpu.memory_space<vmem>>, vector<1x1x384xf32>
    %32 = vector.shape_cast %31 : vector<1x1x384xf32> to vector<1x384xf32>
    %c0_20 = arith.constant 0 : index
    %c0_21 = arith.constant 0 : index
    %c0_22 = arith.constant 0 : index
    %33 = vector.load %arg9[%c0_20, %c0_21, %c0_22] : memref<2x128x32xbf16, #tpu.memory_space<vmem>>, vector<1x128x32xbf16>
    %34 = vector.shape_cast %33 : vector<1x128x32xbf16> to vector<128x32xbf16>
    %c0_23 = arith.constant 0 : index
    %c0_24 = arith.constant 0 : index
    %c0_25 = arith.constant 0 : index
    %35 = vector.load %arg10[%c0_23, %c0_24, %c0_25] : memref<2x6x32xf32, #tpu.memory_space<vmem>>, vector<1x6x32xf32>
    %36 = vector.shape_cast %35 : vector<1x6x32xf32> to vector<6x32xf32>
    %c0_26 = arith.constant 0 : index
    %c0_27 = arith.constant 0 : index
    %c0_28 = arith.constant 0 : index
    %37 = vector.load %arg11[%c0_26, %c0_27, %c0_28] : memref<2x96x64xbf16, #tpu.memory_space<vmem>>, vector<1x96x64xbf16>
    %38 = vector.shape_cast %37 : vector<1x96x64xbf16> to vector<96x64xbf16>
    %c0_29 = arith.constant 0 : index
    %c0_30 = arith.constant 0 : index
    %c0_31 = arith.constant 0 : index
    %39 = vector.load %arg12[%c0_29, %c0_30, %c0_31] : memref<2x1x64xf32, #tpu.memory_space<vmem>>, vector<1x1x64xf32>
    %40 = vector.shape_cast %39 : vector<1x1x64xf32> to vector<1x64xf32>
    %c0_32 = arith.constant 0 : index
    %c0_33 = arith.constant 0 : index
    %c0_34 = arith.constant 0 : index
    %41 = vector.load %arg13[%c0_32, %c0_33, %c0_34] : memref<2x64x32xbf16, #tpu.memory_space<vmem>>, vector<1x64x32xbf16>
    %42 = vector.shape_cast %41 : vector<1x64x32xbf16> to vector<64x32xbf16>
    %43 = vector.extract_strided_slice %36 {offsets = [0, 0], sizes = [1, 32], strides = [1, 1]} : vector<6x32xf32> to vector<1x32xf32>
    %44 = vector.extract_strided_slice %36 {offsets = [1, 0], sizes = [1, 32], strides = [1, 1]} : vector<6x32xf32> to vector<1x32xf32>
    %45 = vector.extract_strided_slice %36 {offsets = [2, 0], sizes = [1, 32], strides = [1, 1]} : vector<6x32xf32> to vector<1x32xf32>
    %46 = vector.extract_strided_slice %36 {offsets = [3, 0], sizes = [1, 32], strides = [1, 1]} : vector<6x32xf32> to vector<1x32xf32>
    %47 = vector.extract_strided_slice %36 {offsets = [4, 0], sizes = [1, 32], strides = [1, 1]} : vector<6x32xf32> to vector<1x32xf32>
    %48 = vector.extract_strided_slice %36 {offsets = [5, 0], sizes = [1, 32], strides = [1, 1]} : vector<6x32xf32> to vector<1x32xf32>
    %49 = arith.truncf %18 : vector<8x32xf32> to vector<8x32xbf16>
    %cst_35 = arith.constant dense<0.000000e+00> : vector<8x384xf32>
    %50 = tpu.matmul %49, %30, %cst_35 {dimension_numbers = #tpu.dot_dimension_numbers<[1], [0], [0], [1], [0, 0, 1, 1], [], []>} : vector<8x32xbf16>, vector<32x384xbf16>, vector<8x384xf32> -> vector<8x384xf32>
    %51 = vector.broadcast %32 : vector<1x384xf32> to vector<8x384xf32>
    %52 = arith.addf %50, %51 : vector<8x384xf32>
    %53 = vector.extract_strided_slice %52 {offsets = [0, 0], sizes = [8, 64], strides = [1, 1]} : vector<8x384xf32> to vector<8x64xf32>
    %54 = vector.extract_strided_slice %52 {offsets = [0, 128], sizes = [8, 64], strides = [1, 1]} : vector<8x384xf32> to vector<8x64xf32>
    %55 = vector.extract_strided_slice %52 {offsets = [0, 256], sizes = [8, 64], strides = [1, 1]} : vector<8x384xf32> to vector<8x64xf32>
    %56 = arith.truncf %53 : vector<8x64xf32> to vector<8x64xbf16>
    %57 = arith.truncf %54 : vector<8x64xf32> to vector<8x64xbf16>
    %cst_36 = arith.constant dense<0.000000e+00> : vector<8x8xf32>
    %58 = tpu.matmul %56, %57, %cst_36 {dimension_numbers = #tpu.dot_dimension_numbers<[1], [1], [0], [0], [0, 0, 1, 0], [], []>} : vector<8x64xbf16>, vector<8x64xbf16>, vector<8x8xf32> -> vector<8x8xf32>
    %cst_37 = arith.constant 1.250000e-01 : f32
    %59 = vector.broadcast %cst_37 : f32 to vector<8x8xf32>
    %60 = arith.mulf %58, %59 : vector<8x8xf32>
    %61 = arith.addf %60, %28 : vector<8x8xf32>
    %cst_38 = arith.constant dense<0xFF800000> : vector<8xf32>
    %62 = vector.multi_reduction <maximumf>, %61, %cst_38 [1] : vector<8x8xf32> to vector<8xf32>
    %63 = vector.shape_cast %62 : vector<8xf32> to vector<8x1xf32>
    %64 = vector.broadcast %63 : vector<8x1xf32> to vector<8x8xf32>
    %65 = arith.subf %61, %64 : vector<8x8xf32>
    %66 = math.exp %65 : vector<8x8xf32>
    %cst_39 = arith.constant dense<0.000000e+00> : vector<8xf32>
    %67 = vector.multi_reduction <add>, %66, %cst_39 [1] : vector<8x8xf32> to vector<8xf32>
    %68 = vector.shape_cast %67 : vector<8xf32> to vector<8x1xf32>
    %69 = tpu.reciprocal %68 {approx = true} : vector<8x1xf32> -> vector<8x1xf32>
    %70 = vector.broadcast %69 : vector<8x1xf32> to vector<8x8xf32>
    %71 = arith.mulf %66, %70 : vector<8x8xf32>
    %72 = arith.truncf %71 : vector<8x8xf32> to vector<8x8xbf16>
    %73 = arith.truncf %55 : vector<8x64xf32> to vector<8x64xbf16>
    %cst_40 = arith.constant dense<0.000000e+00> : vector<8x64xf32>
    %74 = tpu.matmul %72, %73, %cst_40 {dimension_numbers = #tpu.dot_dimension_numbers<[1], [0], [0], [1], [0, 0, 1, 1], [], []>} : vector<8x8xbf16>, vector<8x64xbf16>, vector<8x64xf32> -> vector<8x64xf32>
    %75 = arith.truncf %74 : vector<8x64xf32> to vector<8x64xbf16>
    %76 = vector.extract_strided_slice %34 {offsets = [0, 0], sizes = [64, 32], strides = [1, 1]} : vector<128x32xbf16> to vector<64x32xbf16>
    %cst_41 = arith.constant dense<0.000000e+00> : vector<8x32xf32>
    %77 = tpu.matmul %75, %76, %cst_41 {dimension_numbers = #tpu.dot_dimension_numbers<[1], [0], [0], [1], [0, 0, 1, 1], [], []>} : vector<8x64xbf16>, vector<64x32xbf16>, vector<8x32xf32> -> vector<8x32xf32>
    %78 = vector.broadcast %43 : vector<1x32xf32> to vector<8x32xf32>
    %79 = arith.addf %78, %77 : vector<8x32xf32>
    %80 = vector.extract_strided_slice %52 {offsets = [0, 64], sizes = [8, 64], strides = [1, 1]} : vector<8x384xf32> to vector<8x64xf32>
    %81 = vector.extract_strided_slice %52 {offsets = [0, 192], sizes = [8, 64], strides = [1, 1]} : vector<8x384xf32> to vector<8x64xf32>
    %82 = vector.extract_strided_slice %52 {offsets = [0, 320], sizes = [8, 64], strides = [1, 1]} : vector<8x384xf32> to vector<8x64xf32>
    %83 = arith.truncf %80 : vector<8x64xf32> to vector<8x64xbf16>
    %84 = arith.truncf %81 : vector<8x64xf32> to vector<8x64xbf16>
    %cst_42 = arith.constant dense<0.000000e+00> : vector<8x8xf32>
    %85 = tpu.matmul %83, %84, %cst_42 {dimension_numbers = #tpu.dot_dimension_numbers<[1], [1], [0], [0], [0, 0, 1, 0], [], []>} : vector<8x64xbf16>, vector<8x64xbf16>, vector<8x8xf32> -> vector<8x8xf32>
    %cst_43 = arith.constant 1.250000e-01 : f32
    %86 = vector.broadcast %cst_43 : f32 to vector<8x8xf32>
    %87 = arith.mulf %85, %86 : vector<8x8xf32>
    %88 = arith.addf %87, %28 : vector<8x8xf32>
    %cst_44 = arith.constant dense<0xFF800000> : vector<8xf32>
    %89 = vector.multi_reduction <maximumf>, %88, %cst_44 [1] : vector<8x8xf32> to vector<8xf32>
    %90 = vector.shape_cast %89 : vector<8xf32> to vector<8x1xf32>
    %91 = vector.broadcast %90 : vector<8x1xf32> to vector<8x8xf32>
    %92 = arith.subf %88, %91 : vector<8x8xf32>
    %93 = math.exp %92 : vector<8x8xf32>
    %cst_45 = arith.constant dense<0.000000e+00> : vector<8xf32>
    %94 = vector.multi_reduction <add>, %93, %cst_45 [1] : vector<8x8xf32> to vector<8xf32>
    %95 = vector.shape_cast %94 : vector<8xf32> to vector<8x1xf32>
    %96 = tpu.reciprocal %95 {approx = true} : vector<8x1xf32> -> vector<8x1xf32>
    %97 = vector.broadcast %96 : vector<8x1xf32> to vector<8x8xf32>
    %98 = arith.mulf %93, %97 : vector<8x8xf32>
    %99 = arith.truncf %98 : vector<8x8xf32> to vector<8x8xbf16>
    %100 = arith.truncf %82 : vector<8x64xf32> to vector<8x64xbf16>
    %cst_46 = arith.constant dense<0.000000e+00> : vector<8x64xf32>
    %101 = tpu.matmul %99, %100, %cst_46 {dimension_numbers = #tpu.dot_dimension_numbers<[1], [0], [0], [1], [0, 0, 1, 1], [], []>} : vector<8x8xbf16>, vector<8x64xbf16>, vector<8x64xf32> -> vector<8x64xf32>
    %102 = arith.truncf %101 : vector<8x64xf32> to vector<8x64xbf16>
    %103 = vector.extract_strided_slice %34 {offsets = [64, 0], sizes = [64, 32], strides = [1, 1]} : vector<128x32xbf16> to vector<64x32xbf16>
    %cst_47 = arith.constant dense<0.000000e+00> : vector<8x32xf32>
    %104 = tpu.matmul %102, %103, %cst_47 {dimension_numbers = #tpu.dot_dimension_numbers<[1], [0], [0], [1], [0, 0, 1, 1], [], []>} : vector<8x64xbf16>, vector<64x32xbf16>, vector<8x32xf32> -> vector<8x32xf32>
    %105 = arith.addf %79, %104 : vector<8x32xf32>
    %106 = arith.addf %105, %18 : vector<8x32xf32>
    %cst_48 = arith.constant dense<0.000000e+00> : vector<8xf32>
    %107 = vector.multi_reduction <add>, %106, %cst_48 [1] : vector<8x32xf32> to vector<8xf32>
    %108 = vector.shape_cast %107 : vector<8xf32> to vector<8x1xf32>
    %cst_49 = arith.constant 3.200000e+01 : f32
    %109 = vector.broadcast %cst_49 : f32 to vector<8x1xf32>
    %110 = arith.divf %108, %109 : vector<8x1xf32>
    %111 = vector.broadcast %110 : vector<8x1xf32> to vector<8x32xf32>
    %112 = arith.subf %106, %111 : vector<8x32xf32>
    %113 = arith.mulf %112, %112 : vector<8x32xf32>
    %cst_50 = arith.constant dense<0.000000e+00> : vector<8xf32>
    %114 = vector.multi_reduction <add>, %113, %cst_50 [1] : vector<8x32xf32> to vector<8xf32>
    %115 = vector.shape_cast %114 : vector<8xf32> to vector<8x1xf32>
    %cst_51 = arith.constant 3.200000e+01 : f32
    %116 = vector.broadcast %cst_51 : f32 to vector<8x1xf32>
    %117 = arith.divf %115, %116 : vector<8x1xf32>
    %118 = vector.broadcast %110 : vector<8x1xf32> to vector<8x32xf32>
    %119 = arith.subf %106, %118 : vector<8x32xf32>
    %cst_52 = arith.constant 9.99999974E-6 : f32
    %120 = vector.broadcast %cst_52 : f32 to vector<8x1xf32>
    %121 = arith.addf %117, %120 : vector<8x1xf32>
    %122 = math.rsqrt %121 : vector<8x1xf32>
    %123 = vector.broadcast %122 : vector<8x1xf32> to vector<8x32xf32>
    %124 = arith.mulf %119, %123 : vector<8x32xf32>
    %125 = vector.broadcast %44 : vector<1x32xf32> to vector<8x32xf32>
    %126 = arith.mulf %124, %125 : vector<8x32xf32>
    %127 = vector.broadcast %45 : vector<1x32xf32> to vector<8x32xf32>
    %128 = arith.addf %126, %127 : vector<8x32xf32>
    %129 = vector.broadcast %22 : vector<8x1xf32> to vector<8x32xf32>
    %130 = arith.mulf %128, %129 : vector<8x32xf32>
    %131 = tpu.iota {dimensions = array<i32: 0>} : vector<8x32xi32>
    %c1_i32 = arith.constant 1 : i32
    %132 = tpu.dynamic_rotate %130 by %c1_i32 dim 0 : vector<8x32xf32>, i32 -> vector<8x32xf32>
    %c-1_i32 = arith.constant -1 : i32
    %133 = vector.broadcast %c-1_i32 : i32 to vector<8x32xi32>
    %134 = arith.addi %131, %133 : vector<8x32xi32>
    %c0_i32_53 = arith.constant 0 : i32
    %135 = vector.broadcast %c0_i32_53 : i32 to vector<8x32xi32>
    %136 = arith.cmpi sge, %134, %135 : vector<8x32xi32>
    %c-1_i32_54 = arith.constant -1 : i32
    %137 = vector.broadcast %c-1_i32_54 : i32 to vector<8x32xi32>
    %138 = arith.addi %131, %137 : vector<8x32xi32>
    %c8_i32 = arith.constant 8 : i32
    %139 = vector.broadcast %c8_i32 : i32 to vector<8x32xi32>
    %140 = arith.cmpi slt, %138, %139 : vector<8x32xi32>
    %141 = arith.andi %136, %140 : vector<8x32xi1>
    %cst_55 = arith.constant 0.000000e+00 : f32
    %142 = vector.broadcast %cst_55 : f32 to vector<8x32xf32>
    %143 = arith.select %141, %132, %142 : vector<8x32xi1>, vector<8x32xf32>
    %c7_i32 = arith.constant 7 : i32
    %144 = tpu.dynamic_rotate %130 by %c7_i32 dim 0 : vector<8x32xf32>, i32 -> vector<8x32xf32>
    %c1_i32_56 = arith.constant 1 : i32
    %145 = vector.broadcast %c1_i32_56 : i32 to vector<8x32xi32>
    %146 = arith.addi %131, %145 : vector<8x32xi32>
    %c0_i32_57 = arith.constant 0 : i32
    %147 = vector.broadcast %c0_i32_57 : i32 to vector<8x32xi32>
    %148 = arith.cmpi sge, %146, %147 : vector<8x32xi32>
    %c1_i32_58 = arith.constant 1 : i32
    %149 = vector.broadcast %c1_i32_58 : i32 to vector<8x32xi32>
    %150 = arith.addi %131, %149 : vector<8x32xi32>
    %c8_i32_59 = arith.constant 8 : i32
    %151 = vector.broadcast %c8_i32_59 : i32 to vector<8x32xi32>
    %152 = arith.cmpi slt, %150, %151 : vector<8x32xi32>
    %153 = arith.andi %148, %152 : vector<8x32xi1>
    %cst_60 = arith.constant 0.000000e+00 : f32
    %154 = vector.broadcast %cst_60 : f32 to vector<8x32xf32>
    %155 = arith.select %153, %144, %154 : vector<8x32xi1>, vector<8x32xf32>
    %156 = tpu.concatenate %143, %130, %155 in 1 : vector<8x32xf32>, vector<8x32xf32>, vector<8x32xf32> -> vector<8x96xf32>
    %157 = arith.truncf %156 : vector<8x96xf32> to vector<8x96xbf16>
    %cst_61 = arith.constant dense<0.000000e+00> : vector<8x64xf32>
    %158 = tpu.matmul %157, %38, %cst_61 {dimension_numbers = #tpu.dot_dimension_numbers<[1], [0], [0], [1], [0, 0, 1, 1], [], []>} : vector<8x96xbf16>, vector<96x64xbf16>, vector<8x64xf32> -> vector<8x64xf32>
    %159 = vector.broadcast %40 : vector<1x64xf32> to vector<8x64xf32>
    %160 = arith.addf %158, %159 : vector<8x64xf32>
    %cst_62 = arith.constant 0.000000e+00 : f32
    %161 = vector.broadcast %cst_62 : f32 to vector<8x64xf32>
    %162 = arith.maximumf %160, %161 : vector<8x64xf32>
    %163 = arith.truncf %162 : vector<8x64xf32> to vector<8x64xbf16>
    %cst_63 = arith.constant dense<0.000000e+00> : vector<8x32xf32>
    %164 = tpu.matmul %163, %42, %cst_63 {dimension_numbers = #tpu.dot_dimension_numbers<[1], [0], [0], [1], [0, 0, 1, 1], [], []>} : vector<8x64xbf16>, vector<64x32xbf16>, vector<8x32xf32> -> vector<8x32xf32>
    %165 = vector.broadcast %46 : vector<1x32xf32> to vector<8x32xf32>
    %166 = arith.addf %164, %165 : vector<8x32xf32>
    %167 = arith.addf %166, %130 : vector<8x32xf32>
    %cst_64 = arith.constant dense<0.000000e+00> : vector<8xf32>
    %168 = vector.multi_reduction <add>, %167, %cst_64 [1] : vector<8x32xf32> to vector<8xf32>
    %169 = vector.shape_cast %168 : vector<8xf32> to vector<8x1xf32>
    %cst_65 = arith.constant 3.200000e+01 : f32
    %170 = vector.broadcast %cst_65 : f32 to vector<8x1xf32>
    %171 = arith.divf %169, %170 : vector<8x1xf32>
    %172 = vector.broadcast %171 : vector<8x1xf32> to vector<8x32xf32>
    %173 = arith.subf %167, %172 : vector<8x32xf32>
    %174 = arith.mulf %173, %173 : vector<8x32xf32>
    %cst_66 = arith.constant dense<0.000000e+00> : vector<8xf32>
    %175 = vector.multi_reduction <add>, %174, %cst_66 [1] : vector<8x32xf32> to vector<8xf32>
    %176 = vector.shape_cast %175 : vector<8xf32> to vector<8x1xf32>
    %cst_67 = arith.constant 3.200000e+01 : f32
    %177 = vector.broadcast %cst_67 : f32 to vector<8x1xf32>
    %178 = arith.divf %176, %177 : vector<8x1xf32>
    %179 = vector.broadcast %171 : vector<8x1xf32> to vector<8x32xf32>
    %180 = arith.subf %167, %179 : vector<8x32xf32>
    %cst_68 = arith.constant 9.99999974E-6 : f32
    %181 = vector.broadcast %cst_68 : f32 to vector<8x1xf32>
    %182 = arith.addf %178, %181 : vector<8x1xf32>
    %183 = math.rsqrt %182 : vector<8x1xf32>
    %184 = vector.broadcast %183 : vector<8x1xf32> to vector<8x32xf32>
    %185 = arith.mulf %180, %184 : vector<8x32xf32>
    %186 = vector.broadcast %47 : vector<1x32xf32> to vector<8x32xf32>
    %187 = arith.mulf %185, %186 : vector<8x32xf32>
    %188 = vector.broadcast %48 : vector<1x32xf32> to vector<8x32xf32>
    %189 = arith.addf %187, %188 : vector<8x32xf32>
    %190 = vector.broadcast %22 : vector<8x1xf32> to vector<8x32xf32>
    %191 = arith.mulf %189, %190 : vector<8x32xf32>
    %c0_69 = arith.constant 0 : index
    %c0_70 = arith.constant 0 : index
    %192 = vector.load %arg16[%c0_69, %c0_70] : memref<6x32xf32, #tpu.memory_space<vmem>>, vector<6x32xf32>
    %c0_71 = arith.constant 0 : index
    %c0_72 = arith.constant 0 : index
    %193 = vector.load %arg14[%c0_71, %c0_72] : memref<96x32xbf16, #tpu.memory_space<vmem>>, vector<96x32xbf16>
    %194 = vector.extract_strided_slice %192 {offsets = [0, 0], sizes = [1, 32], strides = [1, 1]} : vector<6x32xf32> to vector<1x32xf32>
    %195 = tpu.iota {dimensions = array<i32: 0>} : vector<8x32xi32>
    %c1_i32_73 = arith.constant 1 : i32
    %196 = tpu.dynamic_rotate %191 by %c1_i32_73 dim 0 : vector<8x32xf32>, i32 -> vector<8x32xf32>
    %c-1_i32_74 = arith.constant -1 : i32
    %197 = vector.broadcast %c-1_i32_74 : i32 to vector<8x32xi32>
    %198 = arith.addi %195, %197 : vector<8x32xi32>
    %c0_i32_75 = arith.constant 0 : i32
    %199 = vector.broadcast %c0_i32_75 : i32 to vector<8x32xi32>
    %200 = arith.cmpi sge, %198, %199 : vector<8x32xi32>
    %c-1_i32_76 = arith.constant -1 : i32
    %201 = vector.broadcast %c-1_i32_76 : i32 to vector<8x32xi32>
    %202 = arith.addi %195, %201 : vector<8x32xi32>
    %c8_i32_77 = arith.constant 8 : i32
    %203 = vector.broadcast %c8_i32_77 : i32 to vector<8x32xi32>
    %204 = arith.cmpi slt, %202, %203 : vector<8x32xi32>
    %205 = arith.andi %200, %204 : vector<8x32xi1>
    %cst_78 = arith.constant 0.000000e+00 : f32
    %206 = vector.broadcast %cst_78 : f32 to vector<8x32xf32>
    %207 = arith.select %205, %196, %206 : vector<8x32xi1>, vector<8x32xf32>
    %c7_i32_79 = arith.constant 7 : i32
    %208 = tpu.dynamic_rotate %191 by %c7_i32_79 dim 0 : vector<8x32xf32>, i32 -> vector<8x32xf32>
    %c1_i32_80 = arith.constant 1 : i32
    %209 = vector.broadcast %c1_i32_80 : i32 to vector<8x32xi32>
    %210 = arith.addi %195, %209 : vector<8x32xi32>
    %c0_i32_81 = arith.constant 0 : i32
    %211 = vector.broadcast %c0_i32_81 : i32 to vector<8x32xi32>
    %212 = arith.cmpi sge, %210, %211 : vector<8x32xi32>
    %c1_i32_82 = arith.constant 1 : i32
    %213 = vector.broadcast %c1_i32_82 : i32 to vector<8x32xi32>
    %214 = arith.addi %195, %213 : vector<8x32xi32>
    %c8_i32_83 = arith.constant 8 : i32
    %215 = vector.broadcast %c8_i32_83 : i32 to vector<8x32xi32>
    %216 = arith.cmpi slt, %214, %215 : vector<8x32xi32>
    %217 = arith.andi %212, %216 : vector<8x32xi1>
    %cst_84 = arith.constant 0.000000e+00 : f32
    %218 = vector.broadcast %cst_84 : f32 to vector<8x32xf32>
    %219 = arith.select %217, %208, %218 : vector<8x32xi1>, vector<8x32xf32>
    %220 = tpu.concatenate %207, %191, %219 in 1 : vector<8x32xf32>, vector<8x32xf32>, vector<8x32xf32> -> vector<8x96xf32>
    %221 = arith.truncf %220 : vector<8x96xf32> to vector<8x96xbf16>
    %cst_85 = arith.constant dense<0.000000e+00> : vector<8x32xf32>
    %222 = tpu.matmul %221, %193, %cst_85 {dimension_numbers = #tpu.dot_dimension_numbers<[1], [0], [0], [1], [0, 0, 1, 1], [], []>} : vector<8x96xbf16>, vector<96x32xbf16>, vector<8x32xf32> -> vector<8x32xf32>
    %223 = vector.broadcast %194 : vector<1x32xf32> to vector<8x32xf32>
    %224 = arith.addf %222, %223 : vector<8x32xf32>
    %cst_86 = arith.constant 0.000000e+00 : f32
    %225 = vector.broadcast %cst_86 : f32 to vector<8x32xf32>
    %226 = arith.maximumf %224, %225 : vector<8x32xf32>
    %227 = vector.extract_strided_slice %192 {offsets = [1, 0], sizes = [1, 32], strides = [1, 1]} : vector<6x32xf32> to vector<1x32xf32>
    %228 = vector.extract_strided_slice %192 {offsets = [2, 0], sizes = [1, 32], strides = [1, 1]} : vector<6x32xf32> to vector<1x32xf32>
    %cst_87 = arith.constant dense<0.000000e+00> : vector<8xf32>
    %229 = vector.multi_reduction <add>, %226, %cst_87 [1] : vector<8x32xf32> to vector<8xf32>
    %230 = vector.shape_cast %229 : vector<8xf32> to vector<8x1xf32>
    %cst_88 = arith.constant 3.200000e+01 : f32
    %231 = vector.broadcast %cst_88 : f32 to vector<8x1xf32>
    %232 = arith.divf %230, %231 : vector<8x1xf32>
    %233 = vector.broadcast %232 : vector<8x1xf32> to vector<8x32xf32>
    %234 = arith.subf %226, %233 : vector<8x32xf32>
    %235 = arith.mulf %234, %234 : vector<8x32xf32>
    %cst_89 = arith.constant dense<0.000000e+00> : vector<8xf32>
    %236 = vector.multi_reduction <add>, %235, %cst_89 [1] : vector<8x32xf32> to vector<8xf32>
    %237 = vector.shape_cast %236 : vector<8xf32> to vector<8x1xf32>
    %cst_90 = arith.constant 3.200000e+01 : f32
    %238 = vector.broadcast %cst_90 : f32 to vector<8x1xf32>
    %239 = arith.divf %237, %238 : vector<8x1xf32>
    %240 = vector.broadcast %232 : vector<8x1xf32> to vector<8x32xf32>
    %241 = arith.subf %226, %240 : vector<8x32xf32>
    %cst_91 = arith.constant 9.99999974E-6 : f32
    %242 = vector.broadcast %cst_91 : f32 to vector<8x1xf32>
    %243 = arith.addf %239, %242 : vector<8x1xf32>
    %244 = math.rsqrt %243 : vector<8x1xf32>
    %245 = vector.broadcast %244 : vector<8x1xf32> to vector<8x32xf32>
    %246 = arith.mulf %241, %245 : vector<8x32xf32>
    %247 = vector.broadcast %227 : vector<1x32xf32> to vector<8x32xf32>
    %248 = arith.mulf %246, %247 : vector<8x32xf32>
    %249 = vector.broadcast %228 : vector<1x32xf32> to vector<8x32xf32>
    %250 = arith.addf %248, %249 : vector<8x32xf32>
    %c0_92 = arith.constant 0 : index
    %c0_93 = arith.constant 0 : index
    %251 = vector.load %arg15[%c0_92, %c0_93] : memref<96x32xbf16, #tpu.memory_space<vmem>>, vector<96x32xbf16>
    %252 = vector.extract_strided_slice %192 {offsets = [3, 0], sizes = [1, 32], strides = [1, 1]} : vector<6x32xf32> to vector<1x32xf32>
    %253 = tpu.iota {dimensions = array<i32: 0>} : vector<8x32xi32>
    %c1_i32_94 = arith.constant 1 : i32
    %254 = tpu.dynamic_rotate %250 by %c1_i32_94 dim 0 : vector<8x32xf32>, i32 -> vector<8x32xf32>
    %c-1_i32_95 = arith.constant -1 : i32
    %255 = vector.broadcast %c-1_i32_95 : i32 to vector<8x32xi32>
    %256 = arith.addi %253, %255 : vector<8x32xi32>
    %c0_i32_96 = arith.constant 0 : i32
    %257 = vector.broadcast %c0_i32_96 : i32 to vector<8x32xi32>
    %258 = arith.cmpi sge, %256, %257 : vector<8x32xi32>
    %c-1_i32_97 = arith.constant -1 : i32
    %259 = vector.broadcast %c-1_i32_97 : i32 to vector<8x32xi32>
    %260 = arith.addi %253, %259 : vector<8x32xi32>
    %c8_i32_98 = arith.constant 8 : i32
    %261 = vector.broadcast %c8_i32_98 : i32 to vector<8x32xi32>
    %262 = arith.cmpi slt, %260, %261 : vector<8x32xi32>
    %263 = arith.andi %258, %262 : vector<8x32xi1>
    %cst_99 = arith.constant 0.000000e+00 : f32
    %264 = vector.broadcast %cst_99 : f32 to vector<8x32xf32>
    %265 = arith.select %263, %254, %264 : vector<8x32xi1>, vector<8x32xf32>
    %c7_i32_100 = arith.constant 7 : i32
    %266 = tpu.dynamic_rotate %250 by %c7_i32_100 dim 0 : vector<8x32xf32>, i32 -> vector<8x32xf32>
    %c1_i32_101 = arith.constant 1 : i32
    %267 = vector.broadcast %c1_i32_101 : i32 to vector<8x32xi32>
    %268 = arith.addi %253, %267 : vector<8x32xi32>
    %c0_i32_102 = arith.constant 0 : i32
    %269 = vector.broadcast %c0_i32_102 : i32 to vector<8x32xi32>
    %270 = arith.cmpi sge, %268, %269 : vector<8x32xi32>
    %c1_i32_103 = arith.constant 1 : i32
    %271 = vector.broadcast %c1_i32_103 : i32 to vector<8x32xi32>
    %272 = arith.addi %253, %271 : vector<8x32xi32>
    %c8_i32_104 = arith.constant 8 : i32
    %273 = vector.broadcast %c8_i32_104 : i32 to vector<8x32xi32>
    %274 = arith.cmpi slt, %272, %273 : vector<8x32xi32>
    %275 = arith.andi %270, %274 : vector<8x32xi1>
    %cst_105 = arith.constant 0.000000e+00 : f32
    %276 = vector.broadcast %cst_105 : f32 to vector<8x32xf32>
    %277 = arith.select %275, %266, %276 : vector<8x32xi1>, vector<8x32xf32>
    %278 = tpu.concatenate %265, %250, %277 in 1 : vector<8x32xf32>, vector<8x32xf32>, vector<8x32xf32> -> vector<8x96xf32>
    %279 = arith.truncf %278 : vector<8x96xf32> to vector<8x96xbf16>
    %cst_106 = arith.constant dense<0.000000e+00> : vector<8x32xf32>
    %280 = tpu.matmul %279, %251, %cst_106 {dimension_numbers = #tpu.dot_dimension_numbers<[1], [0], [0], [1], [0, 0, 1, 1], [], []>} : vector<8x96xbf16>, vector<96x32xbf16>, vector<8x32xf32> -> vector<8x32xf32>
    %281 = vector.broadcast %252 : vector<1x32xf32> to vector<8x32xf32>
    %282 = arith.addf %280, %281 : vector<8x32xf32>
    %cst_107 = arith.constant 0.000000e+00 : f32
    %283 = vector.broadcast %cst_107 : f32 to vector<8x32xf32>
    %284 = arith.maximumf %282, %283 : vector<8x32xf32>
    %285 = vector.extract_strided_slice %192 {offsets = [4, 0], sizes = [1, 32], strides = [1, 1]} : vector<6x32xf32> to vector<1x32xf32>
    %286 = vector.extract_strided_slice %192 {offsets = [5, 0], sizes = [1, 32], strides = [1, 1]} : vector<6x32xf32> to vector<1x32xf32>
    %cst_108 = arith.constant dense<0.000000e+00> : vector<8xf32>
    %287 = vector.multi_reduction <add>, %284, %cst_108 [1] : vector<8x32xf32> to vector<8xf32>
    %288 = vector.shape_cast %287 : vector<8xf32> to vector<8x1xf32>
    %cst_109 = arith.constant 3.200000e+01 : f32
    %289 = vector.broadcast %cst_109 : f32 to vector<8x1xf32>
    %290 = arith.divf %288, %289 : vector<8x1xf32>
    %291 = vector.broadcast %290 : vector<8x1xf32> to vector<8x32xf32>
    %292 = arith.subf %284, %291 : vector<8x32xf32>
    %293 = arith.mulf %292, %292 : vector<8x32xf32>
    %cst_110 = arith.constant dense<0.000000e+00> : vector<8xf32>
    %294 = vector.multi_reduction <add>, %293, %cst_110 [1] : vector<8x32xf32> to vector<8xf32>
    %295 = vector.shape_cast %294 : vector<8xf32> to vector<8x1xf32>
    %cst_111 = arith.constant 3.200000e+01 : f32
    %296 = vector.broadcast %cst_111 : f32 to vector<8x1xf32>
    %297 = arith.divf %295, %296 : vector<8x1xf32>
    %298 = vector.broadcast %290 : vector<8x1xf32> to vector<8x32xf32>
    %299 = arith.subf %284, %298 : vector<8x32xf32>
    %cst_112 = arith.constant 9.99999974E-6 : f32
    %300 = vector.broadcast %cst_112 : f32 to vector<8x1xf32>
    %301 = arith.addf %297, %300 : vector<8x1xf32>
    %302 = math.rsqrt %301 : vector<8x1xf32>
    %303 = vector.broadcast %302 : vector<8x1xf32> to vector<8x32xf32>
    %304 = arith.mulf %299, %303 : vector<8x32xf32>
    %305 = vector.broadcast %285 : vector<1x32xf32> to vector<8x32xf32>
    %306 = arith.mulf %304, %305 : vector<8x32xf32>
    %307 = vector.broadcast %286 : vector<1x32xf32> to vector<8x32xf32>
    %308 = arith.addf %306, %307 : vector<8x32xf32>
    %309 = arith.truncf %308 : vector<8x32xf32> to vector<8x32xbf16>
    %c0_113 = arith.constant 0 : index
    %c0_114 = arith.constant 0 : index
    %310 = vector.load %arg17[%c0_113, %c0_114] : memref<32x128xbf16, #tpu.memory_space<vmem>>, vector<32x128xbf16>
    %cst_115 = arith.constant dense<0.000000e+00> : vector<8x128xf32>
    %311 = tpu.matmul %309, %310, %cst_115 {dimension_numbers = #tpu.dot_dimension_numbers<[1], [0], [0], [1], [0, 0, 1, 1], [], []>} : vector<8x32xbf16>, vector<32x128xbf16>, vector<8x128xf32> -> vector<8x128xf32>
    %c0_116 = arith.constant 0 : index
    %c0_117 = arith.constant 0 : index
    %312 = vector.load %arg18[%c0_116, %c0_117] : memref<1x128xf32, #tpu.memory_space<vmem>>, vector<1x128xf32>
    %313 = vector.broadcast %312 : vector<1x128xf32> to vector<8x128xf32>
    %314 = arith.addf %311, %313 : vector<8x128xf32>
    %315 = vector.broadcast %22 : vector<8x1xf32> to vector<8x128xf32>
    %316 = arith.mulf %314, %315 : vector<8x128xf32>
    %c0_118 = arith.constant 0 : index
    %c0_119 = arith.constant 0 : index
    %c0_120 = arith.constant 0 : index
    %317 = vector.load %arg22[%c0_118, %c0_119, %c0_120] : memref<1x8x128xf32, #tpu.memory_space<vmem>>, vector<1x8x128xf32>
    %318 = vector.shape_cast %317 : vector<1x8x128xf32> to vector<8x128xf32>
    %319 = vector.shape_cast %316 : vector<8x128xf32> to vector<1x8x128xf32>
    tpu.vector_store %arg22[%c0_118, %c0_119, %c0_120], %319 {strides = array<i32>} : memref<1x8x128xf32, #tpu.memory_space<vmem>>, vector<1x8x128xf32>,
    %c0_121 = arith.constant 0 : index
    %c0_122 = arith.constant 0 : index
    %c0_123 = arith.constant 0 : index
    %320 = vector.load %arg3[%c0_121, %c0_122, %c0_123] : memref<1x16x1xi32, #tpu.memory_space<vmem>>, vector<1x16x1xi32>
    %321 = vector.shape_cast %320 : vector<1x16x1xi32> to vector<16x1xi32>
    %c0_124 = arith.constant 0 : index
    %c0_125 = arith.constant 0 : index
    %c0_126 = arith.constant 0 : index
    %322 = vector.load %arg4[%c0_124, %c0_125, %c0_126] : memref<1x16x1xi32, #tpu.memory_space<vmem>>, vector<1x16x1xi32>
    %323 = vector.shape_cast %322 : vector<1x16x1xi32> to vector<16x1xi32>
    %c0_i32_127 = arith.constant 0 : i32
    %324 = vector.broadcast %c0_i32_127 : i32 to vector<16x1xi32>
    %325 = arith.cmpi ne, %323, %324 : vector<16x1xi32>
    %326 = arith.extui %325 : vector<16x1xi1> to vector<16x1xi32>
    %327 = arith.sitofp %326 : vector<16x1xi32> to vector<16x1xf32>
    %328 = tpu.iota {dimensions = array<i32: 1>} : vector<16x8xi32>
    %329 = vector.broadcast %321 : vector<16x1xi32> to vector<16x8xi32>
    %330 = arith.cmpi eq, %329, %328 : vector<16x8xi32>
    %331 = arith.extui %330 : vector<16x8xi1> to vector<16x8xi32>
    %332 = arith.sitofp %331 : vector<16x8xi32> to vector<16x8xf32>
    %cst_128 = arith.constant dense<0.000000e+00> : vector<16x32xf32>
    %333 = tpu.matmul %332, %191, %cst_128 {dimension_numbers = #tpu.dot_dimension_numbers<[1], [0], [0], [1], [0, 0, 1, 1], [], []>} : vector<16x8xf32>, vector<8x32xf32>, vector<16x32xf32> -> vector<16x32xf32>
    %334 = vector.broadcast %327 : vector<16x1xf32> to vector<16x32xf32>
    %335 = arith.mulf %333, %334 : vector<16x32xf32>
    %336 = tpu.iota {dimensions = array<i32: 1>} : vector<16x17xi32>
    %337 = vector.broadcast %323 : vector<16x1xi32> to vector<16x17xi32>
    %338 = arith.cmpi eq, %337, %336 : vector<16x17xi32>
    %339 = arith.extui %338 : vector<16x17xi1> to vector<16x17xi32>
    %340 = arith.sitofp %339 : vector<16x17xi32> to vector<16x17xf32>
    %cst_129 = arith.constant dense<0.000000e+00> : vector<16x32xf32>
    %341 = tpu.matmul %340, %0, %cst_129 {dimension_numbers = #tpu.dot_dimension_numbers<[1], [0], [0], [1], [0, 0, 1, 1], [], []>} : vector<16x17xf32>, vector<17x32xf32>, vector<16x32xf32> -> vector<16x32xf32>
    %342 = arith.addf %335, %341 : vector<16x32xf32>
    %cst_130 = arith.constant 1.000000e+00 : f32
    %343 = vector.broadcast %cst_130 : f32 to vector<16x1xf32>
    %cst_131 = arith.constant 1.000000e+00 : f32
    %344 = vector.broadcast %cst_131 : f32 to vector<16x1xf32>
    %345 = arith.subf %327, %344 : vector<16x1xf32>
    %cst_132 = arith.constant dense<0.000000e+00> : vector<16x16xf32>
    %346 = tpu.matmul %343, %345, %cst_132 {dimension_numbers = #tpu.dot_dimension_numbers<[1], [1], [0], [0], [0, 0, 1, 0], [], []>} : vector<16x1xf32>, vector<16x1xf32>, vector<16x16xf32> -> vector<16x16xf32>
    %cst_133 = arith.constant 1.000000e+09 : f32
    %347 = vector.broadcast %cst_133 : f32 to vector<16x16xf32>
    %348 = arith.mulf %346, %347 : vector<16x16xf32>
    %c1 = arith.constant 1 : index
    %c0_134 = arith.constant 0 : index
    %c0_135 = arith.constant 0 : index
    %349 = vector.load %arg7[%c1, %c0_134, %c0_135] : memref<2x32x384xbf16, #tpu.memory_space<vmem>>, vector<1x32x384xbf16>
    %350 = vector.shape_cast %349 : vector<1x32x384xbf16> to vector<32x384xbf16>
    %c1_136 = arith.constant 1 : index
    %c0_137 = arith.constant 0 : index
    %c0_138 = arith.constant 0 : index
    %351 = vector.load %arg8[%c1_136, %c0_137, %c0_138] : memref<2x1x384xf32, #tpu.memory_space<vmem>>, vector<1x1x384xf32>
    %352 = vector.shape_cast %351 : vector<1x1x384xf32> to vector<1x384xf32>
    %c1_139 = arith.constant 1 : index
    %c0_140 = arith.constant 0 : index
    %c0_141 = arith.constant 0 : index
    %353 = vector.load %arg9[%c1_139, %c0_140, %c0_141] : memref<2x128x32xbf16, #tpu.memory_space<vmem>>, vector<1x128x32xbf16>
    %354 = vector.shape_cast %353 : vector<1x128x32xbf16> to vector<128x32xbf16>
    %c1_142 = arith.constant 1 : index
    %c0_143 = arith.constant 0 : index
    %c0_144 = arith.constant 0 : index
    %355 = vector.load %arg10[%c1_142, %c0_143, %c0_144] : memref<2x6x32xf32, #tpu.memory_space<vmem>>, vector<1x6x32xf32>
    %356 = vector.shape_cast %355 : vector<1x6x32xf32> to vector<6x32xf32>
    %c1_145 = arith.constant 1 : index
    %c0_146 = arith.constant 0 : index
    %c0_147 = arith.constant 0 : index
    %357 = vector.load %arg11[%c1_145, %c0_146, %c0_147] : memref<2x96x64xbf16, #tpu.memory_space<vmem>>, vector<1x96x64xbf16>
    %358 = vector.shape_cast %357 : vector<1x96x64xbf16> to vector<96x64xbf16>
    %c1_148 = arith.constant 1 : index
    %c0_149 = arith.constant 0 : index
    %c0_150 = arith.constant 0 : index
    %359 = vector.load %arg12[%c1_148, %c0_149, %c0_150] : memref<2x1x64xf32, #tpu.memory_space<vmem>>, vector<1x1x64xf32>
    %360 = vector.shape_cast %359 : vector<1x1x64xf32> to vector<1x64xf32>
    %c1_151 = arith.constant 1 : index
    %c0_152 = arith.constant 0 : index
    %c0_153 = arith.constant 0 : index
    %361 = vector.load %arg13[%c1_151, %c0_152, %c0_153] : memref<2x64x32xbf16, #tpu.memory_space<vmem>>, vector<1x64x32xbf16>
    %362 = vector.shape_cast %361 : vector<1x64x32xbf16> to vector<64x32xbf16>
    %363 = vector.extract_strided_slice %356 {offsets = [0, 0], sizes = [1, 32], strides = [1, 1]} : vector<6x32xf32> to vector<1x32xf32>
    %364 = vector.extract_strided_slice %356 {offsets = [1, 0], sizes = [1, 32], strides = [1, 1]} : vector<6x32xf32> to vector<1x32xf32>
    %365 = vector.extract_strided_slice %356 {offsets = [2, 0], sizes = [1, 32], strides = [1, 1]} : vector<6x32xf32> to vector<1x32xf32>
    %366 = vector.extract_strided_slice %356 {offsets = [3, 0], sizes = [1, 32], strides = [1, 1]} : vector<6x32xf32> to vector<1x32xf32>
    %367 = vector.extract_strided_slice %356 {offsets = [4, 0], sizes = [1, 32], strides = [1, 1]} : vector<6x32xf32> to vector<1x32xf32>
    %368 = vector.extract_strided_slice %356 {offsets = [5, 0], sizes = [1, 32], strides = [1, 1]} : vector<6x32xf32> to vector<1x32xf32>
    %369 = arith.truncf %342 : vector<16x32xf32> to vector<16x32xbf16>
    %cst_154 = arith.constant dense<0.000000e+00> : vector<16x384xf32>
    %370 = tpu.matmul %369, %350, %cst_154 {dimension_numbers = #tpu.dot_dimension_numbers<[1], [0], [0], [1], [0, 0, 1, 1], [], []>} : vector<16x32xbf16>, vector<32x384xbf16>, vector<16x384xf32> -> vector<16x384xf32>
    %371 = vector.broadcast %352 : vector<1x384xf32> to vector<16x384xf32>
    %372 = arith.addf %370, %371 : vector<16x384xf32>
    %373 = vector.extract_strided_slice %372 {offsets = [0, 0], sizes = [16, 64], strides = [1, 1]} : vector<16x384xf32> to vector<16x64xf32>
    %374 = vector.extract_strided_slice %372 {offsets = [0, 128], sizes = [16, 64], strides = [1, 1]} : vector<16x384xf32> to vector<16x64xf32>
    %375 = vector.extract_strided_slice %372 {offsets = [0, 256], sizes = [16, 64], strides = [1, 1]} : vector<16x384xf32> to vector<16x64xf32>
    %376 = arith.truncf %373 : vector<16x64xf32> to vector<16x64xbf16>
    %377 = arith.truncf %374 : vector<16x64xf32> to vector<16x64xbf16>
    %cst_155 = arith.constant dense<0.000000e+00> : vector<16x16xf32>
    %378 = tpu.matmul %376, %377, %cst_155 {dimension_numbers = #tpu.dot_dimension_numbers<[1], [1], [0], [0], [0, 0, 1, 0], [], []>} : vector<16x64xbf16>, vector<16x64xbf16>, vector<16x16xf32> -> vector<16x16xf32>
    %cst_156 = arith.constant 1.250000e-01 : f32
    %379 = vector.broadcast %cst_156 : f32 to vector<16x16xf32>
    %380 = arith.mulf %378, %379 : vector<16x16xf32>
    %381 = arith.addf %380, %348 : vector<16x16xf32>
    %cst_157 = arith.constant dense<0xFF800000> : vector<16xf32>
    %382 = vector.multi_reduction <maximumf>, %381, %cst_157 [1] : vector<16x16xf32> to vector<16xf32>
    %383 = vector.shape_cast %382 : vector<16xf32> to vector<16x1xf32>
    %384 = vector.broadcast %383 : vector<16x1xf32> to vector<16x16xf32>
    %385 = arith.subf %381, %384 : vector<16x16xf32>
    %386 = math.exp %385 : vector<16x16xf32>
    %cst_158 = arith.constant dense<0.000000e+00> : vector<16xf32>
    %387 = vector.multi_reduction <add>, %386, %cst_158 [1] : vector<16x16xf32> to vector<16xf32>
    %388 = vector.shape_cast %387 : vector<16xf32> to vector<16x1xf32>
    %389 = tpu.reciprocal %388 {approx = true} : vector<16x1xf32> -> vector<16x1xf32>
    %390 = vector.broadcast %389 : vector<16x1xf32> to vector<16x16xf32>
    %391 = arith.mulf %386, %390 : vector<16x16xf32>
    %392 = arith.truncf %391 : vector<16x16xf32> to vector<16x16xbf16>
    %393 = arith.truncf %375 : vector<16x64xf32> to vector<16x64xbf16>
    %cst_159 = arith.constant dense<0.000000e+00> : vector<16x64xf32>
    %394 = tpu.matmul %392, %393, %cst_159 {dimension_numbers = #tpu.dot_dimension_numbers<[1], [0], [0], [1], [0, 0, 1, 1], [], []>} : vector<16x16xbf16>, vector<16x64xbf16>, vector<16x64xf32> -> vector<16x64xf32>
    %395 = arith.truncf %394 : vector<16x64xf32> to vector<16x64xbf16>
    %396 = vector.extract_strided_slice %354 {offsets = [0, 0], sizes = [64, 32], strides = [1, 1]} : vector<128x32xbf16> to vector<64x32xbf16>
    %cst_160 = arith.constant dense<0.000000e+00> : vector<16x32xf32>
    %397 = tpu.matmul %395, %396, %cst_160 {dimension_numbers = #tpu.dot_dimension_numbers<[1], [0], [0], [1], [0, 0, 1, 1], [], []>} : vector<16x64xbf16>, vector<64x32xbf16>, vector<16x32xf32> -> vector<16x32xf32>
    %398 = vector.broadcast %363 : vector<1x32xf32> to vector<16x32xf32>
    %399 = arith.addf %398, %397 : vector<16x32xf32>
    %400 = vector.extract_strided_slice %372 {offsets = [0, 64], sizes = [16, 64], strides = [1, 1]} : vector<16x384xf32> to vector<16x64xf32>
    %401 = vector.extract_strided_slice %372 {offsets = [0, 192], sizes = [16, 64], strides = [1, 1]} : vector<16x384xf32> to vector<16x64xf32>
    %402 = vector.extract_strided_slice %372 {offsets = [0, 320], sizes = [16, 64], strides = [1, 1]} : vector<16x384xf32> to vector<16x64xf32>
    %403 = arith.truncf %400 : vector<16x64xf32> to vector<16x64xbf16>
    %404 = arith.truncf %401 : vector<16x64xf32> to vector<16x64xbf16>
    %cst_161 = arith.constant dense<0.000000e+00> : vector<16x16xf32>
    %405 = tpu.matmul %403, %404, %cst_161 {dimension_numbers = #tpu.dot_dimension_numbers<[1], [1], [0], [0], [0, 0, 1, 0], [], []>} : vector<16x64xbf16>, vector<16x64xbf16>, vector<16x16xf32> -> vector<16x16xf32>
    %cst_162 = arith.constant 1.250000e-01 : f32
    %406 = vector.broadcast %cst_162 : f32 to vector<16x16xf32>
    %407 = arith.mulf %405, %406 : vector<16x16xf32>
    %408 = arith.addf %407, %348 : vector<16x16xf32>
    %cst_163 = arith.constant dense<0xFF800000> : vector<16xf32>
    %409 = vector.multi_reduction <maximumf>, %408, %cst_163 [1] : vector<16x16xf32> to vector<16xf32>
    %410 = vector.shape_cast %409 : vector<16xf32> to vector<16x1xf32>
    %411 = vector.broadcast %410 : vector<16x1xf32> to vector<16x16xf32>
    %412 = arith.subf %408, %411 : vector<16x16xf32>
    %413 = math.exp %412 : vector<16x16xf32>
    %cst_164 = arith.constant dense<0.000000e+00> : vector<16xf32>
    %414 = vector.multi_reduction <add>, %413, %cst_164 [1] : vector<16x16xf32> to vector<16xf32>
    %415 = vector.shape_cast %414 : vector<16xf32> to vector<16x1xf32>
    %416 = tpu.reciprocal %415 {approx = true} : vector<16x1xf32> -> vector<16x1xf32>
    %417 = vector.broadcast %416 : vector<16x1xf32> to vector<16x16xf32>
    %418 = arith.mulf %413, %417 : vector<16x16xf32>
    %419 = arith.truncf %418 : vector<16x16xf32> to vector<16x16xbf16>
    %420 = arith.truncf %402 : vector<16x64xf32> to vector<16x64xbf16>
    %cst_165 = arith.constant dense<0.000000e+00> : vector<16x64xf32>
    %421 = tpu.matmul %419, %420, %cst_165 {dimension_numbers = #tpu.dot_dimension_numbers<[1], [0], [0], [1], [0, 0, 1, 1], [], []>} : vector<16x16xbf16>, vector<16x64xbf16>, vector<16x64xf32> -> vector<16x64xf32>
    %422 = arith.truncf %421 : vector<16x64xf32> to vector<16x64xbf16>
    %423 = vector.extract_strided_slice %354 {offsets = [64, 0], sizes = [64, 32], strides = [1, 1]} : vector<128x32xbf16> to vector<64x32xbf16>
    %cst_166 = arith.constant dense<0.000000e+00> : vector<16x32xf32>
    %424 = tpu.matmul %422, %423, %cst_166 {dimension_numbers = #tpu.dot_dimension_numbers<[1], [0], [0], [1], [0, 0, 1, 1], [], []>} : vector<16x64xbf16>, vector<64x32xbf16>, vector<16x32xf32> -> vector<16x32xf32>
    %425 = arith.addf %399, %424 : vector<16x32xf32>
    %426 = arith.addf %425, %342 : vector<16x32xf32>
    %cst_167 = arith.constant dense<0.000000e+00> : vector<16xf32>
    %427 = vector.multi_reduction <add>, %426, %cst_167 [1] : vector<16x32xf32> to vector<16xf32>
    %428 = vector.shape_cast %427 : vector<16xf32> to vector<16x1xf32>
    %cst_168 = arith.constant 3.200000e+01 : f32
    %429 = vector.broadcast %cst_168 : f32 to vector<16x1xf32>
    %430 = arith.divf %428, %429 : vector<16x1xf32>
    %431 = vector.broadcast %430 : vector<16x1xf32> to vector<16x32xf32>
    %432 = arith.subf %426, %431 : vector<16x32xf32>
    %433 = arith.mulf %432, %432 : vector<16x32xf32>
    %cst_169 = arith.constant dense<0.000000e+00> : vector<16xf32>
    %434 = vector.multi_reduction <add>, %433, %cst_169 [1] : vector<16x32xf32> to vector<16xf32>
    %435 = vector.shape_cast %434 : vector<16xf32> to vector<16x1xf32>
    %cst_170 = arith.constant 3.200000e+01 : f32
    %436 = vector.broadcast %cst_170 : f32 to vector<16x1xf32>
    %437 = arith.divf %435, %436 : vector<16x1xf32>
    %438 = vector.broadcast %430 : vector<16x1xf32> to vector<16x32xf32>
    %439 = arith.subf %426, %438 : vector<16x32xf32>
    %cst_171 = arith.constant 9.99999974E-6 : f32
    %440 = vector.broadcast %cst_171 : f32 to vector<16x1xf32>
    %441 = arith.addf %437, %440 : vector<16x1xf32>
    %442 = math.rsqrt %441 : vector<16x1xf32>
    %443 = vector.broadcast %442 : vector<16x1xf32> to vector<16x32xf32>
    %444 = arith.mulf %439, %443 : vector<16x32xf32>
    %445 = vector.broadcast %364 : vector<1x32xf32> to vector<16x32xf32>
    %446 = arith.mulf %444, %445 : vector<16x32xf32>
    %447 = vector.broadcast %365 : vector<1x32xf32> to vector<16x32xf32>
    %448 = arith.addf %446, %447 : vector<16x32xf32>
    %449 = vector.broadcast %327 : vector<16x1xf32> to vector<16x32xf32>
    %450 = arith.mulf %448, %449 : vector<16x32xf32>
    %451 = tpu.iota {dimensions = array<i32: 0>} : vector<16x32xi32>
    %c1_i32_172 = arith.constant 1 : i32
    %452 = tpu.dynamic_rotate %450 by %c1_i32_172 dim 0 : vector<16x32xf32>, i32 -> vector<16x32xf32>
    %c-1_i32_173 = arith.constant -1 : i32
    %453 = vector.broadcast %c-1_i32_173 : i32 to vector<16x32xi32>
    %454 = arith.addi %451, %453 : vector<16x32xi32>
    %c0_i32_174 = arith.constant 0 : i32
    %455 = vector.broadcast %c0_i32_174 : i32 to vector<16x32xi32>
    %456 = arith.cmpi sge, %454, %455 : vector<16x32xi32>
    %c-1_i32_175 = arith.constant -1 : i32
    %457 = vector.broadcast %c-1_i32_175 : i32 to vector<16x32xi32>
    %458 = arith.addi %451, %457 : vector<16x32xi32>
    %c16_i32 = arith.constant 16 : i32
    %459 = vector.broadcast %c16_i32 : i32 to vector<16x32xi32>
    %460 = arith.cmpi slt, %458, %459 : vector<16x32xi32>
    %461 = arith.andi %456, %460 : vector<16x32xi1>
    %cst_176 = arith.constant 0.000000e+00 : f32
    %462 = vector.broadcast %cst_176 : f32 to vector<16x32xf32>
    %463 = arith.select %461, %452, %462 : vector<16x32xi1>, vector<16x32xf32>
    %c15_i32 = arith.constant 15 : i32
    %464 = tpu.dynamic_rotate %450 by %c15_i32 dim 0 : vector<16x32xf32>, i32 -> vector<16x32xf32>
    %c1_i32_177 = arith.constant 1 : i32
    %465 = vector.broadcast %c1_i32_177 : i32 to vector<16x32xi32>
    %466 = arith.addi %451, %465 : vector<16x32xi32>
    %c0_i32_178 = arith.constant 0 : i32
    %467 = vector.broadcast %c0_i32_178 : i32 to vector<16x32xi32>
    %468 = arith.cmpi sge, %466, %467 : vector<16x32xi32>
    %c1_i32_179 = arith.constant 1 : i32
    %469 = vector.broadcast %c1_i32_179 : i32 to vector<16x32xi32>
    %470 = arith.addi %451, %469 : vector<16x32xi32>
    %c16_i32_180 = arith.constant 16 : i32
    %471 = vector.broadcast %c16_i32_180 : i32 to vector<16x32xi32>
    %472 = arith.cmpi slt, %470, %471 : vector<16x32xi32>
    %473 = arith.andi %468, %472 : vector<16x32xi1>
    %cst_181 = arith.constant 0.000000e+00 : f32
    %474 = vector.broadcast %cst_181 : f32 to vector<16x32xf32>
    %475 = arith.select %473, %464, %474 : vector<16x32xi1>, vector<16x32xf32>
    %476 = tpu.concatenate %463, %450, %475 in 1 : vector<16x32xf32>, vector<16x32xf32>, vector<16x32xf32> -> vector<16x96xf32>
    %477 = arith.truncf %476 : vector<16x96xf32> to vector<16x96xbf16>
    %cst_182 = arith.constant dense<0.000000e+00> : vector<16x64xf32>
    %478 = tpu.matmul %477, %358, %cst_182 {dimension_numbers = #tpu.dot_dimension_numbers<[1], [0], [0], [1], [0, 0, 1, 1], [], []>} : vector<16x96xbf16>, vector<96x64xbf16>, vector<16x64xf32> -> vector<16x64xf32>
    %479 = vector.broadcast %360 : vector<1x64xf32> to vector<16x64xf32>
    %480 = arith.addf %478, %479 : vector<16x64xf32>
    %cst_183 = arith.constant 0.000000e+00 : f32
    %481 = vector.broadcast %cst_183 : f32 to vector<16x64xf32>
    %482 = arith.maximumf %480, %481 : vector<16x64xf32>
    %483 = arith.truncf %482 : vector<16x64xf32> to vector<16x64xbf16>
    %cst_184 = arith.constant dense<0.000000e+00> : vector<16x32xf32>
    %484 = tpu.matmul %483, %362, %cst_184 {dimension_numbers = #tpu.dot_dimension_numbers<[1], [0], [0], [1], [0, 0, 1, 1], [], []>} : vector<16x64xbf16>, vector<64x32xbf16>, vector<16x32xf32> -> vector<16x32xf32>
    %485 = vector.broadcast %366 : vector<1x32xf32> to vector<16x32xf32>
    %486 = arith.addf %484, %485 : vector<16x32xf32>
    %487 = arith.addf %486, %450 : vector<16x32xf32>
    %cst_185 = arith.constant dense<0.000000e+00> : vector<16xf32>
    %488 = vector.multi_reduction <add>, %487, %cst_185 [1] : vector<16x32xf32> to vector<16xf32>
    %489 = vector.shape_cast %488 : vector<16xf32> to vector<16x1xf32>
    %cst_186 = arith.constant 3.200000e+01 : f32
    %490 = vector.broadcast %cst_186 : f32 to vector<16x1xf32>
    %491 = arith.divf %489, %490 : vector<16x1xf32>
    %492 = vector.broadcast %491 : vector<16x1xf32> to vector<16x32xf32>
    %493 = arith.subf %487, %492 : vector<16x32xf32>
    %494 = arith.mulf %493, %493 : vector<16x32xf32>
    %cst_187 = arith.constant dense<0.000000e+00> : vector<16xf32>
    %495 = vector.multi_reduction <add>, %494, %cst_187 [1] : vector<16x32xf32> to vector<16xf32>
    %496 = vector.shape_cast %495 : vector<16xf32> to vector<16x1xf32>
    %cst_188 = arith.constant 3.200000e+01 : f32
    %497 = vector.broadcast %cst_188 : f32 to vector<16x1xf32>
    %498 = arith.divf %496, %497 : vector<16x1xf32>
    %499 = vector.broadcast %491 : vector<16x1xf32> to vector<16x32xf32>
    %500 = arith.subf %487, %499 : vector<16x32xf32>
    %cst_189 = arith.constant 9.99999974E-6 : f32
    %501 = vector.broadcast %cst_189 : f32 to vector<16x1xf32>
    %502 = arith.addf %498, %501 : vector<16x1xf32>
    %503 = math.rsqrt %502 : vector<16x1xf32>
    %504 = vector.broadcast %503 : vector<16x1xf32> to vector<16x32xf32>
    %505 = arith.mulf %500, %504 : vector<16x32xf32>
    %506 = vector.broadcast %367 : vector<1x32xf32> to vector<16x32xf32>
    %507 = arith.mulf %505, %506 : vector<16x32xf32>
    %508 = vector.broadcast %368 : vector<1x32xf32> to vector<16x32xf32>
    %509 = arith.addf %507, %508 : vector<16x32xf32>
    %510 = vector.broadcast %327 : vector<16x1xf32> to vector<16x32xf32>
    %511 = arith.mulf %509, %510 : vector<16x32xf32>
    %512 = arith.truncf %511 : vector<16x32xf32> to vector<16x32xbf16>
    %c0_190 = arith.constant 0 : index
    %c0_191 = arith.constant 0 : index
    %513 = vector.load %arg19[%c0_190, %c0_191] : memref<32x128xbf16, #tpu.memory_space<vmem>>, vector<32x128xbf16>
    %cst_192 = arith.constant dense<0.000000e+00> : vector<16x128xf32>
    %514 = tpu.matmul %512, %513, %cst_192 {dimension_numbers = #tpu.dot_dimension_numbers<[1], [0], [0], [1], [0, 0, 1, 1], [], []>} : vector<16x32xbf16>, vector<32x128xbf16>, vector<16x128xf32> -> vector<16x128xf32>
    %c0_193 = arith.constant 0 : index
    %c0_194 = arith.constant 0 : index
    %515 = vector.load %arg20[%c0_193, %c0_194] : memref<1x128xf32, #tpu.memory_space<vmem>>, vector<1x128xf32>
    %516 = vector.broadcast %515 : vector<1x128xf32> to vector<16x128xf32>
    %517 = arith.addf %514, %516 : vector<16x128xf32>
    %c0_195 = arith.constant 0 : index
    %c0_196 = arith.constant 0 : index
    %c0_197 = arith.constant 0 : index
    %518 = vector.load %arg21[%c0_195, %c0_196, %c0_197] : memref<1x16x128xf32, #tpu.memory_space<vmem>>, vector<1x16x128xf32>
    %519 = vector.shape_cast %518 : vector<1x16x128xf32> to vector<16x128xf32>
    %520 = vector.shape_cast %517 : vector<16x128xf32> to vector<1x16x128xf32>
    tpu.vector_store %arg21[%c0_195, %c0_196, %c0_197], %520 {strides = array<i32>} : memref<1x16x128xf32, #tpu.memory_space<vmem>>, vector<1x16x128xf32>,
    return
  }
  func.func @transform_0(%arg0: i32) -> (i32, i32, i32) {
    %c0_i32 = arith.constant 0 : i32
    %c0_i32_0 = arith.constant 0 : i32
    %c0_i32_1 = arith.constant 0 : i32
    return %arg0, %c0_i32, %c0_i32_0 : i32, i32, i32
  }
  func.func @transform_1(%arg0: i32) -> (i32, i32, i32) {
    %c0_i32 = arith.constant 0 : i32
    %c0_i32_0 = arith.constant 0 : i32
    %c0_i32_1 = arith.constant 0 : i32
    return %arg0, %c0_i32, %c0_i32_0 : i32, i32, i32
  }
  func.func @transform_2(%arg0: i32) -> (i32, i32, i32) {
    %c0_i32 = arith.constant 0 : i32
    %c0_i32_0 = arith.constant 0 : i32
    %c0_i32_1 = arith.constant 0 : i32
    return %arg0, %c0_i32, %c0_i32_0 : i32, i32, i32
  }
  func.func @transform_3(%arg0: i32) -> (i32, i32, i32) {
    %c0_i32 = arith.constant 0 : i32
    %c0_i32_0 = arith.constant 0 : i32
    %c0_i32_1 = arith.constant 0 : i32
    return %arg0, %c0_i32, %c0_i32_0 : i32, i32, i32
  }
  func.func @transform_4(%arg0: i32) -> (i32, i32) {
    %c0_i32 = arith.constant 0 : i32
    %c0_i32_0 = arith.constant 0 : i32
    %c0_i32_1 = arith.constant 0 : i32
    return %c0_i32, %c0_i32_0 : i32, i32
  }
  func.func @transform_5(%arg0: i32) -> (i32, i32) {
    %c0_i32 = arith.constant 0 : i32
    %c0_i32_0 = arith.constant 0 : i32
    %c0_i32_1 = arith.constant 0 : i32
    return %c0_i32, %c0_i32_0 : i32, i32
  }
  func.func @transform_6(%arg0: i32) -> (i32, i32, i32) {
    %c0_i32 = arith.constant 0 : i32
    %c0_i32_0 = arith.constant 0 : i32
    %c0_i32_1 = arith.constant 0 : i32
    %c0_i32_2 = arith.constant 0 : i32
    return %c0_i32, %c0_i32_0, %c0_i32_1 : i32, i32, i32
  }
  func.func @transform_7(%arg0: i32) -> (i32, i32, i32) {
    %c0_i32 = arith.constant 0 : i32
    %c0_i32_0 = arith.constant 0 : i32
    %c0_i32_1 = arith.constant 0 : i32
    %c0_i32_2 = arith.constant 0 : i32
    return %c0_i32, %c0_i32_0, %c0_i32_1 : i32, i32, i32
  }
  func.func @transform_8(%arg0: i32) -> (i32, i32, i32) {
    %c0_i32 = arith.constant 0 : i32
    %c0_i32_0 = arith.constant 0 : i32
    %c0_i32_1 = arith.constant 0 : i32
    %c0_i32_2 = arith.constant 0 : i32
    return %c0_i32, %c0_i32_0, %c0_i32_1 : i32, i32, i32
  }
  func.func @transform_9(%arg0: i32) -> (i32, i32, i32) {
    %c0_i32 = arith.constant 0 : i32
    %c0_i32_0 = arith.constant 0 : i32
    %c0_i32_1 = arith.constant 0 : i32
    %c0_i32_2 = arith.constant 0 : i32
    return %c0_i32, %c0_i32_0, %c0_i32_1 : i32, i32, i32
  }
  func.func @transform_10(%arg0: i32) -> (i32, i32, i32) {
    %c0_i32 = arith.constant 0 : i32
    %c0_i32_0 = arith.constant 0 : i32
    %c0_i32_1 = arith.constant 0 : i32
    %c0_i32_2 = arith.constant 0 : i32
    return %c0_i32, %c0_i32_0, %c0_i32_1 : i32, i32, i32
  }
  func.func @transform_11(%arg0: i32) -> (i32, i32, i32) {
    %c0_i32 = arith.constant 0 : i32
    %c0_i32_0 = arith.constant 0 : i32
    %c0_i32_1 = arith.constant 0 : i32
    %c0_i32_2 = arith.constant 0 : i32
    return %c0_i32, %c0_i32_0, %c0_i32_1 : i32, i32, i32
  }
  func.func @transform_12(%arg0: i32) -> (i32, i32, i32) {
    %c0_i32 = arith.constant 0 : i32
    %c0_i32_0 = arith.constant 0 : i32
    %c0_i32_1 = arith.constant 0 : i32
    %c0_i32_2 = arith.constant 0 : i32
    return %c0_i32, %c0_i32_0, %c0_i32_1 : i32, i32, i32
  }
  func.func @transform_13(%arg0: i32) -> (i32, i32) {
    %c0_i32 = arith.constant 0 : i32
    %c0_i32_0 = arith.constant 0 : i32
    %c0_i32_1 = arith.constant 0 : i32
    return %c0_i32, %c0_i32_0 : i32, i32
  }
  func.func @transform_14(%arg0: i32) -> (i32, i32) {
    %c0_i32 = arith.constant 0 : i32
    %c0_i32_0 = arith.constant 0 : i32
    %c0_i32_1 = arith.constant 0 : i32
    return %c0_i32, %c0_i32_0 : i32, i32
  }
  func.func @transform_15(%arg0: i32) -> (i32, i32) {
    %c0_i32 = arith.constant 0 : i32
    %c0_i32_0 = arith.constant 0 : i32
    %c0_i32_1 = arith.constant 0 : i32
    return %c0_i32, %c0_i32_0 : i32, i32
  }
  func.func @transform_16(%arg0: i32) -> (i32, i32) {
    %c0_i32 = arith.constant 0 : i32
    %c0_i32_0 = arith.constant 0 : i32
    %c0_i32_1 = arith.constant 0 : i32
    return %c0_i32, %c0_i32_0 : i32, i32
  }
  func.func @transform_17(%arg0: i32) -> (i32, i32) {
    %c0_i32 = arith.constant 0 : i32
    %c0_i32_0 = arith.constant 0 : i32
    %c0_i32_1 = arith.constant 0 : i32
    return %c0_i32, %c0_i32_0 : i32, i32
  }
  func.func @transform_18(%arg0: i32) -> (i32, i32) {
    %c0_i32 = arith.constant 0 : i32
    %c0_i32_0 = arith.constant 0 : i32
    %c0_i32_1 = arith.constant 0 : i32
    return %c0_i32, %c0_i32_0 : i32, i32
  }
  func.func @transform_19(%arg0: i32) -> (i32, i32) {
    %c0_i32 = arith.constant 0 : i32
    %c0_i32_0 = arith.constant 0 : i32
    %c0_i32_1 = arith.constant 0 : i32
    return %c0_i32, %c0_i32_0 : i32, i32
  }
  func.func @transform_20(%arg0: i32) -> (i32, i32, i32) {
    %c0_i32 = arith.constant 0 : i32
    %c0_i32_0 = arith.constant 0 : i32
    %c0_i32_1 = arith.constant 0 : i32
    return %arg0, %c0_i32, %c0_i32_0 : i32, i32, i32
  }
  func.func @transform_21(%arg0: i32) -> (i32, i32, i32) {
    %c0_i32 = arith.constant 0 : i32
    %c0_i32_0 = arith.constant 0 : i32
    %c0_i32_1 = arith.constant 0 : i32
    return %arg0, %c0_i32, %c0_i32_0 : i32, i32, i32
  }
}

</mosaic_0001>

<llo_original>
// kernel: fastspeech_forward.1
$region0: #{fastspeech_forward.1}
  #allocation0 [shape = 'u32[]', space=smem, size = 0x4, offset = 0x4, fixed_abs, tag = 'smem constant byte address 0x4 - core index']
  #allocation1 [shape = 'u32[144,128]{1,0:T(1,128)}', space=vmem, size = 0x12000, scoped, tag = 'internal scratch']
  %s0 = inlined_call_operand.vmem [shape: s32[2,8,1], index: 0, kind: input, shape index: {}]
  %s1 = inlined_call_operand.vmem [shape: s32[2,8,1], index: 1, kind: input, shape index: {}]
  %s2 = inlined_call_operand.vmem [shape: s32[2,16,1], index: 2, kind: input, shape index: {}]
  %s3 = inlined_call_operand.vmem [shape: s32[2,16,1], index: 3, kind: input, shape index: {}]
  %s4 = inlined_call_operand.vmem [shape: f32[85,32], index: 4, kind: input, shape index: {}]
  %s5 = inlined_call_operand.vmem [shape: f32[17,32], index: 5, kind: input, shape index: {}]
  %s6 = inlined_call_operand.vmem [shape: bf16[2,32,384], index: 6, kind: input, shape index: {}]
  %s7 = inlined_call_operand.vmem [shape: f32[2,1,384], index: 7, kind: input, shape index: {}]
  %s8 = inlined_call_operand.vmem [shape: bf16[2,128,32], index: 8, kind: input, shape index: {}]
  %s9 = inlined_call_operand.vmem [shape: f32[2,6,32], index: 9, kind: input, shape index: {}]
  %s10 = inlined_call_operand.vmem [shape: bf16[2,96,64], index: 10, kind: input, shape index: {}]
  %s11 = inlined_call_operand.vmem [shape: f32[2,1,64], index: 11, kind: input, shape index: {}]
  %s12 = inlined_call_operand.vmem [shape: bf16[2,64,32], index: 12, kind: input, shape index: {}]
  %s13 = inlined_call_operand.vmem [shape: bf16[96,32], index: 13, kind: input, shape index: {}]
  %s14 = inlined_call_operand.vmem [shape: bf16[96,32], index: 14, kind: input, shape index: {}]
  %s15 = inlined_call_operand.vmem [shape: f32[6,32], index: 15, kind: input, shape index: {}]
  %s16 = inlined_call_operand.vmem [shape: bf16[32,128], index: 16, kind: input, shape index: {}]
  %s17 = inlined_call_operand.vmem [shape: f32[1,128], index: 17, kind: input, shape index: {}]
  %s18 = inlined_call_operand.vmem [shape: bf16[32,128], index: 18, kind: input, shape index: {}]
  %s19 = inlined_call_operand.vmem [shape: f32[1,128], index: 19, kind: input, shape index: {}]
  %s20 = inlined_call_operand.vmem [shape: f32[2,16,128], index: 20, kind: output, shape index: {0}]
  %s21 = inlined_call_operand.vmem [shape: f32[2,8,128], index: 21, kind: output, shape index: {1}]
  %22 = xla_tuple %s20, %s21
  %s23 = sld [smem:[#allocation0]]
  $region121: #{fastspeech_forward.1} parent=0
    _
  %s25 = ssub.s32 1, %s23
  %s26 = scalar_select 0, %s25, %s23
  loop: start=0, step=1, limit=4
  $region2: #{fastspeech_forward.1} parent=0 // loop_pre_header
    _
  $region3: #{fastspeech_forward.1} parent=0 // loop_header
    %s28 = sphi 0, %s32
    %p29 = scmp.ge.s32.totalorder %s28, 4
    %s38 = sphi 0, %s40
    %s41 = sphi 0, %s38
    %s42 = sphi 0, %s41
    %s58 = sphi 0, %s42
    %s64 = sphi 0, %s66
    %s67 = sphi 0, %s64
    %s68 = sphi 0, %s67
    %s84 = sphi 0, %s68
    %s90 = sphi 0, %s92
    %s93 = sphi 0, %s90
    %s94 = sphi 0, %s93
    %s110 = sphi 0, %s94
    %s116 = sphi 0, %s118
    %s119 = sphi 0, %s116
    %s120 = sphi 0, %s119
    %s136 = sphi 0, %s120
    %s140 = sphi 0, %s140
    %s142 = sphi 0, %s140
    %s143 = sphi 0, %s142
    %s157 = sphi 0, %s143
    %s161 = sphi 0, %s161
    %s163 = sphi 0, %s161
    %s164 = sphi 0, %s163
    %s178 = sphi 0, %s164
    %s182 = sphi 0, %s182
    %s184 = sphi 0, %s182
    %s185 = sphi 0, %s184
    %s199 = sphi 0, %s185
    %s203 = sphi 0, %s203
    %s205 = sphi 0, %s203
    %s206 = sphi 0, %s205
    %s220 = sphi 0, %s206
    %s224 = sphi 0, %s224
    %s226 = sphi 0, %s224
    %s227 = sphi 0, %s226
    %s241 = sphi 0, %s227
    %s245 = sphi 0, %s245
    %s247 = sphi 0, %s245
    %s248 = sphi 0, %s247
    %s262 = sphi 0, %s248
    %s266 = sphi 0, %s266
    %s268 = sphi 0, %s266
    %s269 = sphi 0, %s268
    %s283 = sphi 0, %s269
    %s287 = sphi 0, %s287
    %s289 = sphi 0, %s287
    %s290 = sphi 0, %s289
    %s304 = sphi 0, %s290
    %s308 = sphi 0, %s308
    %s310 = sphi 0, %s308
    %s311 = sphi 0, %s310
    %s325 = sphi 0, %s311
    %s329 = sphi 0, %s329
    %s331 = sphi 0, %s329
    %s332 = sphi 0, %s331
    %s346 = sphi 0, %s332
    %s350 = sphi 0, %s350
    %s352 = sphi 0, %s350
    %s353 = sphi 0, %s352
    %s367 = sphi 0, %s353
    %s371 = sphi 0, %s371
    %s373 = sphi 0, %s371
    %s374 = sphi 0, %s373
    %s388 = sphi 0, %s374
    %s392 = sphi 0, %s392
    %s394 = sphi 0, %s392
    %s395 = sphi 0, %s394
    %s409 = sphi 0, %s395
    %s413 = sphi 0, %s413
    %s415 = sphi 0, %s413
    %s416 = sphi 0, %s415
    %s430 = sphi 0, %s416
    %s434 = sphi 0, %s434
    %s436 = sphi 0, %s434
    %s437 = sphi 0, %s436
    %s451 = sphi 0, %s437
    %s455 = sphi 0, %s455
    %s457 = sphi 0, %s455
    %s458 = sphi 0, %s457
    %s472 = sphi 0, %s458
    %s478 = sphi 0, %s480
    %s481 = sphi 0, %s478
    %s482 = sphi 0, %s481
    %s498 = sphi 0, %s482
    %s504 = sphi 0, %s506
    %s507 = sphi 0, %s504
    %s508 = sphi 0, %s507
    %s524 = sphi 0, %s508
  $region4: #{fastspeech_forward.1} parent=0 // loop_header_branch
    %31 = sbr.rel (%p29) target = $region8
  $region5: #{fastspeech_forward.1} parent=0 // loop_body
    %s33 = ssub.s32 %s28, 1
    %s34 = ssub.s32 %s28, 2
    %s35 = sadd.s32 %s28, 1
    %s36 = ssub.s32 %s28, %s35
    %p37 = scmp.eq.s32.totalorder %s36, 0
    %s39 = sadd.s32 %s38, 1
    %s40 = scalar_select %p37, %s38, %s39
    %p43 = pneg %p37
    %p44 = scmp.eq.s32.totalorder %s28, 1
    %p45 = por %p43, %p44
    %p46 = scmp.ne.s32.totalorder %s38, %s41
    %p47 = scmp.eq.s32.totalorder %s28, 0
    %p48 = por %p46, %p47
    %p49 = scmp.ne.s32.totalorder %s38, %s41
    %p50 = scmp.eq.s32.totalorder %s33, 1
    %p51 = por %p49, %p50
    %p52 = scmp.ne.s32.totalorder %s41, %s42
    %p53 = scmp.eq.s32.totalorder %s33, 0
    %p54 = por %p52, %p53
    %p55 = scmp.ne.s32.totalorder %s41, %s42
    %p56 = scmp.eq.s32.totalorder %s34, 1
    %p57 = por %p55, %p56
    %p59 = scmp.ne.s32.totalorder %s42, %s58
    %p60 = scmp.eq.s32.totalorder %s34, 0
    %p61 = por %p59, %p60
    %s62 = ssub.s32 %s28, %s35
    %p63 = scmp.eq.s32.totalorder %s62, 0
    %s65 = sadd.s32 %s64, 1
    %s66 = scalar_select %p63, %s64, %s65
    %p69 = pneg %p63
    %p70 = scmp.eq.s32.totalorder %s28, 1
    %p71 = por %p69, %p70
    %p72 = scmp.ne.s32.totalorder %s64, %s67
    %p73 = scmp.eq.s32.totalorder %s28, 0
    %p74 = por %p72, %p73
    %p75 = scmp.ne.s32.totalorder %s64, %s67
    %p76 = scmp.eq.s32.totalorder %s33, 1
    %p77 = por %p75, %p76
    %p78 = scmp.ne.s32.totalorder %s67, %s68
    %p79 = scmp.eq.s32.totalorder %s33, 0
    %p80 = por %p78, %p79
    %p81 = scmp.ne.s32.totalorder %s67, %s68
    %p82 = scmp.eq.s32.totalorder %s34, 1
    %p83 = por %p81, %p82
    %p85 = scmp.ne.s32.totalorder %s68, %s84
    %p86 = scmp.eq.s32.totalorder %s34, 0
    %p87 = por %p85, %p86
    %s88 = ssub.s32 %s28, %s35
    %p89 = scmp.eq.s32.totalorder %s88, 0
    %s91 = sadd.s32 %s90, 1
    %s92 = scalar_select %p89, %s90, %s91
    %p95 = pneg %p89
    %p96 = scmp.eq.s32.totalorder %s28, 1
    %p97 = por %p95, %p96
    %p98 = scmp.ne.s32.totalorder %s90, %s93
    %p99 = scmp.eq.s32.totalorder %s28, 0
    %p100 = por %p98, %p99
    %p101 = scmp.ne.s32.totalorder %s90, %s93
    %p102 = scmp.eq.s32.totalorder %s33, 1
    %p103 = por %p101, %p102
    %p104 = scmp.ne.s32.totalorder %s93, %s94
    %p105 = scmp.eq.s32.totalorder %s33, 0
    %p106 = por %p104, %p105
    %p107 = scmp.ne.s32.totalorder %s93, %s94
    %p108 = scmp.eq.s32.totalorder %s34, 1
    %p109 = por %p107, %p108
    %p111 = scmp.ne.s32.totalorder %s94, %s110
    %p112 = scmp.eq.s32.totalorder %s34, 0
    %p113 = por %p111, %p112
    %s114 = ssub.s32 %s28, %s35
    %p115 = scmp.eq.s32.totalorder %s114, 0
    %s117 = sadd.s32 %s116, 1
    %s118 = scalar_select %p115, %s116, %s117
    %p121 = pneg %p115
    %p122 = scmp.eq.s32.totalorder %s28, 1
    %p123 = por %p121, %p122
    %p124 = scmp.ne.s32.totalorder %s116, %s119
    %p125 = scmp.eq.s32.totalorder %s28, 0
    %p126 = por %p124, %p125
    %p127 = scmp.ne.s32.totalorder %s116, %s119
    %p128 = scmp.eq.s32.totalorder %s33, 1
    %p129 = por %p127, %p128
    %p130 = scmp.ne.s32.totalorder %s119, %s120
    %p131 = scmp.eq.s32.totalorder %s33, 0
    %p132 = por %p130, %p131
    %p133 = scmp.ne.s32.totalorder %s119, %s120
    %p134 = scmp.eq.s32.totalorder %s34, 1
    %p135 = por %p133, %p134
    %p137 = scmp.ne.s32.totalorder %s120, %s136
    %p138 = scmp.eq.s32.totalorder %s34, 0
    %p139 = por %p137, %p138
    %s141 = sadd.s32 %s140, 1
    %p144 = scmp.eq.s32.totalorder %s28, 1
    %p145 = scmp.ne.s32.totalorder %s140, %s142
    %p146 = scmp.eq.s32.totalorder %s28, 0
    %p147 = por %p145, %p146
    %p148 = scmp.ne.s32.totalorder %s140, %s142
    %p149 = scmp.eq.s32.totalorder %s33, 1
    %p150 = por %p148, %p149
    %p151 = scmp.ne.s32.totalorder %s142, %s143
    %p152 = scmp.eq.s32.totalorder %s33, 0
    %p153 = por %p151, %p152
    %p154 = scmp.ne.s32.totalorder %s142, %s143
    %p155 = scmp.eq.s32.totalorder %s34, 1
    %p156 = por %p154, %p155
    %p158 = scmp.ne.s32.totalorder %s143, %s157
    %p159 = scmp.eq.s32.totalorder %s34, 0
    %p160 = por %p158, %p159
    %s162 = sadd.s32 %s161, 1
    %p165 = scmp.eq.s32.totalorder %s28, 1
    %p166 = scmp.ne.s32.totalorder %s161, %s163
    %p167 = scmp.eq.s32.totalorder %s28, 0
    %p168 = por %p166, %p167
    %p169 = scmp.ne.s32.totalorder %s161, %s163
    %p170 = scmp.eq.s32.totalorder %s33, 1
    %p171 = por %p169, %p170
    %p172 = scmp.ne.s32.totalorder %s163, %s164
    %p173 = scmp.eq.s32.totalorder %s33, 0
    %p174 = por %p172, %p173
    %p175 = scmp.ne.s32.totalorder %s163, %s164
    %p176 = scmp.eq.s32.totalorder %s34, 1
    %p177 = por %p175, %p176
    %p179 = scmp.ne.s32.totalorder %s164, %s178
    %p180 = scmp.eq.s32.totalorder %s34, 0
    %p181 = por %p179, %p180
    %s183 = sadd.s32 %s182, 1
    %p186 = scmp.eq.s32.totalorder %s28, 1
    %p187 = scmp.ne.s32.totalorder %s182, %s184
    %p188 = scmp.eq.s32.totalorder %s28, 0
    %p189 = por %p187, %p188
    %p190 = scmp.ne.s32.totalorder %s182, %s184
    %p191 = scmp.eq.s32.totalorder %s33, 1
    %p192 = por %p190, %p191
    %p193 = scmp.ne.s32.totalorder %s184, %s185
    %p194 = scmp.eq.s32.totalorder %s33, 0
    %p195 = por %p193, %p194
    %p196 = scmp.ne.s32.totalorder %s184, %s185
    %p197 = scmp.eq.s32.totalorder %s34, 1
    %p198 = por %p196, %p197
    %p200 = scmp.ne.s32.totalorder %s185, %s199
    %p201 = scmp.eq.s32.totalorder %s34, 0
    %p202 = por %p200, %p201
    %s204 = sadd.s32 %s203, 1
    %p207 = scmp.eq.s32.totalorder %s28, 1
    %p208 = scmp.ne.s32.totalorder %s203, %s205
    %p209 = scmp.eq.s32.totalorder %s28, 0
    %p210 = por %p208, %p209
    %p211 = scmp.ne.s32.totalorder %s203, %s205
    %p212 = scmp.eq.s32.totalorder %s33, 1
    %p213 = por %p211, %p212
    %p214 = scmp.ne.s32.totalorder %s205, %s206
    %p215 = scmp.eq.s32.totalorder %s33, 0
    %p216 = por %p214, %p215
    %p217 = scmp.ne.s32.totalorder %s205, %s206
    %p218 = scmp.eq.s32.totalorder %s34, 1
    %p219 = por %p217, %p218
    %p221 = scmp.ne.s32.totalorder %s206, %s220
    %p222 = scmp.eq.s32.totalorder %s34, 0
    %p223 = por %p221, %p222
    %s225 = sadd.s32 %s224, 1
    %p228 = scmp.eq.s32.totalorder %s28, 1
    %p229 = scmp.ne.s32.totalorder %s224, %s226
    %p230 = scmp.eq.s32.totalorder %s28, 0
    %p231 = por %p229, %p230
    %p232 = scmp.ne.s32.totalorder %s224, %s226
    %p233 = scmp.eq.s32.totalorder %s33, 1
    %p234 = por %p232, %p233
    %p235 = scmp.ne.s32.totalorder %s226, %s227
    %p236 = scmp.eq.s32.totalorder %s33, 0
    %p237 = por %p235, %p236
    %p238 = scmp.ne.s32.totalorder %s226, %s227
    %p239 = scmp.eq.s32.totalorder %s34, 1
    %p240 = por %p238, %p239
    %p242 = scmp.ne.s32.totalorder %s227, %s241
    %p243 = scmp.eq.s32.totalorder %s34, 0
    %p244 = por %p242, %p243
    %s246 = sadd.s32 %s245, 1
    %p249 = scmp.eq.s32.totalorder %s28, 1
    %p250 = scmp.ne.s32.totalorder %s245, %s247
    %p251 = scmp.eq.s32.totalorder %s28, 0
    %p252 = por %p250, %p251
    %p253 = scmp.ne.s32.totalorder %s245, %s247
    %p254 = scmp.eq.s32.totalorder %s33, 1
    %p255 = por %p253, %p254
    %p256 = scmp.ne.s32.totalorder %s247, %s248
    %p257 = scmp.eq.s32.totalorder %s33, 0
    %p258 = por %p256, %p257
    %p259 = scmp.ne.s32.totalorder %s247, %s248
    %p260 = scmp.eq.s32.totalorder %s34, 1
    %p261 = por %p259, %p260
    %p263 = scmp.ne.s32.totalorder %s248, %s262
    %p264 = scmp.eq.s32.totalorder %s34, 0
    %p265 = por %p263, %p264
    %s267 = sadd.s32 %s266, 1
    %p270 = scmp.eq.s32.totalorder %s28, 1
    %p271 = scmp.ne.s32.totalorder %s266, %s268
    %p272 = scmp.eq.s32.totalorder %s28, 0
    %p273 = por %p271, %p272
    %p274 = scmp.ne.s32.totalorder %s266, %s268
    %p275 = scmp.eq.s32.totalorder %s33, 1
    %p276 = por %p274, %p275
    %p277 = scmp.ne.s32.totalorder %s268, %s269
    %p278 = scmp.eq.s32.totalorder %s33, 0
    %p279 = por %p277, %p278
    %p280 = scmp.ne.s32.totalorder %s268, %s269
    %p281 = scmp.eq.s32.totalorder %s34, 1
    %p282 = por %p280, %p281
    %p284 = scmp.ne.s32.totalorder %s269, %s283
    %p285 = scmp.eq.s32.totalorder %s34, 0
    %p286 = por %p284, %p285
    %s288 = sadd.s32 %s287, 1
    %p291 = scmp.eq.s32.totalorder %s28, 1
    %p292 = scmp.ne.s32.totalorder %s287, %s289
    %p293 = scmp.eq.s32.totalorder %s28, 0
    %p294 = por %p292, %p293
    %p295 = scmp.ne.s32.totalorder %s287, %s289
    %p296 = scmp.eq.s32.totalorder %s33, 1
    %p297 = por %p295, %p296
    %p298 = scmp.ne.s32.totalorder %s289, %s290
    %p299 = scmp.eq.s32.totalorder %s33, 0
    %p300 = por %p298, %p299
    %p301 = scmp.ne.s32.totalorder %s289, %s290
    %p302 = scmp.eq.s32.totalorder %s34, 1
    %p303 = por %p301, %p302
    %p305 = scmp.ne.s32.totalorder %s290, %s304
    %p306 = scmp.eq.s32.totalorder %s34, 0
    %p307 = por %p305, %p306
    %s309 = sadd.s32 %s308, 1
    %p312 = scmp.eq.s32.totalorder %s28, 1
    %p313 = scmp.ne.s32.totalorder %s308, %s310
    %p314 = scmp.eq.s32.totalorder %s28, 0
    %p315 = por %p313, %p314
    %p316 = scmp.ne.s32.totalorder %s308, %s310
    %p317 = scmp.eq.s32.totalorder %s33, 1
    %p318 = por %p316, %p317
    %p319 = scmp.ne.s32.totalorder %s310, %s311
    %p320 = scmp.eq.s32.totalorder %s33, 0
    %p321 = por %p319, %p320
    %p322 = scmp.ne.s32.totalorder %s310, %s311
    %p323 = scmp.eq.s32.totalorder %s34, 1
    %p324 = por %p322, %p323
    %p326 = scmp.ne.s32.totalorder %s311, %s325
    %p327 = scmp.eq.s32.totalorder %s34, 0
    %p328 = por %p326, %p327
    %s330 = sadd.s32 %s329, 1
    %p333 = scmp.eq.s32.totalorder %s28, 1
    %p334 = scmp.ne.s32.totalorder %s329, %s331
    %p335 = scmp.eq.s32.totalorder %s28, 0
    %p336 = por %p334, %p335
    %p337 = scmp.ne.s32.totalorder %s329, %s331
    %p338 = scmp.eq.s32.totalorder %s33, 1
    %p339 = por %p337, %p338
    %p340 = scmp.ne.s32.totalorder %s331, %s332
    %p341 = scmp.eq.s32.totalorder %s33, 0
    %p342 = por %p340, %p341
    %p343 = scmp.ne.s32.totalorder %s331, %s332
    %p344 = scmp.eq.s32.totalorder %s34, 1
    %p345 = por %p343, %p344
    %p347 = scmp.ne.s32.totalorder %s332, %s346
    %p348 = scmp.eq.s32.totalorder %s34, 0
    %p349 = por %p347, %p348
    %s351 = sadd.s32 %s350, 1
    %p354 = scmp.eq.s32.totalorder %s28, 1
    %p355 = scmp.ne.s32.totalorder %s350, %s352
    %p356 = scmp.eq.s32.totalorder %s28, 0
    %p357 = por %p355, %p356
    %p358 = scmp.ne.s32.totalorder %s350, %s352
    %p359 = scmp.eq.s32.totalorder %s33, 1
    %p360 = por %p358, %p359
    %p361 = scmp.ne.s32.totalorder %s352, %s353
    %p362 = scmp.eq.s32.totalorder %s33, 0
    %p363 = por %p361, %p362
    %p364 = scmp.ne.s32.totalorder %s352, %s353
    %p365 = scmp.eq.s32.totalorder %s34, 1
    %p366 = por %p364, %p365
    %p368 = scmp.ne.s32.totalorder %s353, %s367
    %p369 = scmp.eq.s32.totalorder %s34, 0
    %p370 = por %p368, %p369
    %s372 = sadd.s32 %s371, 1
    %p375 = scmp.eq.s32.totalorder %s28, 1
    %p376 = scmp.ne.s32.totalorder %s371, %s373
    %p377 = scmp.eq.s32.totalorder %s28, 0
    %p378 = por %p376, %p377
    %p379 = scmp.ne.s32.totalorder %s371, %s373
    %p380 = scmp.eq.s32.totalorder %s33, 1
    %p381 = por %p379, %p380
    %p382 = scmp.ne.s32.totalorder %s373, %s374
    %p383 = scmp.eq.s32.totalorder %s33, 0
    %p384 = por %p382, %p383
    %p385 = scmp.ne.s32.totalorder %s373, %s374
    %p386 = scmp.eq.s32.totalorder %s34, 1
    %p387 = por %p385, %p386
    %p389 = scmp.ne.s32.totalorder %s374, %s388
    %p390 = scmp.eq.s32.totalorder %s34, 0
    %p391 = por %p389, %p390
    %s393 = sadd.s32 %s392, 1
    %p396 = scmp.eq.s32.totalorder %s28, 1
    %p397 = scmp.ne.s32.totalorder %s392, %s394
    %p398 = scmp.eq.s32.totalorder %s28, 0
    %p399 = por %p397, %p398
    %p400 = scmp.ne.s32.totalorder %s392, %s394
    %p401 = scmp.eq.s32.totalorder %s33, 1
    %p402 = por %p400, %p401
    %p403 = scmp.ne.s32.totalorder %s394, %s395
    %p404 = scmp.eq.s32.totalorder %s33, 0
    %p405 = por %p403, %p404
    %p406 = scmp.ne.s32.totalorder %s394, %s395
    %p407 = scmp.eq.s32.totalorder %s34, 1
    %p408 = por %p406, %p407
    %p410 = scmp.ne.s32.totalorder %s395, %s409
    %p411 = scmp.eq.s32.totalorder %s34, 0
    %p412 = por %p410, %p411
    %s414 = sadd.s32 %s413, 1
    %p417 = scmp.eq.s32.totalorder %s28, 1
    %p418 = scmp.ne.s32.totalorder %s413, %s415
    %p419 = scmp.eq.s32.totalorder %s28, 0
    %p420 = por %p418, %p419
    %p421 = scmp.ne.s32.totalorder %s413, %s415
    %p422 = scmp.eq.s32.totalorder %s33, 1
    %p423 = por %p421, %p422
    %p424 = scmp.ne.s32.totalorder %s415, %s416
    %p425 = scmp.eq.s32.totalorder %s33, 0
    %p426 = por %p424, %p425
    %p427 = scmp.ne.s32.totalorder %s415, %s416
    %p428 = scmp.eq.s32.totalorder %s34, 1
    %p429 = por %p427, %p428
    %p431 = scmp.ne.s32.totalorder %s416, %s430
    %p432 = scmp.eq.s32.totalorder %s34, 0
    %p433 = por %p431, %p432
    %s435 = sadd.s32 %s434, 1
    %p438 = scmp.eq.s32.totalorder %s28, 1
    %p439 = scmp.ne.s32.totalorder %s434, %s436
    %p440 = scmp.eq.s32.totalorder %s28, 0
    %p441 = por %p439, %p440
    %p442 = scmp.ne.s32.totalorder %s434, %s436
    %p443 = scmp.eq.s32.totalorder %s33, 1
    %p444 = por %p442, %p443
    %p445 = scmp.ne.s32.totalorder %s436, %s437
    %p446 = scmp.eq.s32.totalorder %s33, 0
    %p447 = por %p445, %p446
    %p448 = scmp.ne.s32.totalorder %s436, %s437
    %p449 = scmp.eq.s32.totalorder %s34, 1
    %p450 = por %p448, %p449
    %p452 = scmp.ne.s32.totalorder %s437, %s451
    %p453 = scmp.eq.s32.totalorder %s34, 0
    %p454 = por %p452, %p453
    %s456 = sadd.s32 %s455, 1
    %p459 = scmp.eq.s32.totalorder %s28, 1
    %p460 = scmp.ne.s32.totalorder %s455, %s457
    %p461 = scmp.eq.s32.totalorder %s28, 0
    %p462 = por %p460, %p461
    %p463 = scmp.ne.s32.totalorder %s455, %s457
    %p464 = scmp.eq.s32.totalorder %s33, 1
    %p465 = por %p463, %p464
    %p466 = scmp.ne.s32.totalorder %s457, %s458
    %p467 = scmp.eq.s32.totalorder %s33, 0
    %p468 = por %p466, %p467
    %p469 = scmp.ne.s32.totalorder %s457, %s458
    %p470 = scmp.eq.s32.totalorder %s34, 1
    %p471 = por %p469, %p470
    %p473 = scmp.ne.s32.totalorder %s458, %s472
    %p474 = scmp.eq.s32.totalorder %s34, 0
    %p475 = por %p473, %p474
    %s476 = ssub.s32 %s28, %s35
    %p477 = scmp.eq.s32.totalorder %s476, 0
    %s479 = sadd.s32 %s478, 1
    %s480 = scalar_select %p477, %s478, %s479
    %p483 = pneg %p477
    %p484 = scmp.eq.s32.totalorder %s28, 1
    %p485 = por %p483, %p484
    %p486 = scmp.ne.s32.totalorder %s478, %s481
    %p487 = scmp.eq.s32.totalorder %s28, 0
    %p488 = por %p486, %p487
    %p489 = scmp.ne.s32.totalorder %s478, %s481
    %p490 = scmp.eq.s32.totalorder %s33, 1
    %p491 = por %p489, %p490
    %p492 = scmp.ne.s32.totalorder %s481, %s482
    %p493 = scmp.eq.s32.totalorder %s33, 0
    %p494 = por %p492, %p493
    %p495 = scmp.ne.s32.totalorder %s481, %s482
    %p496 = scmp.eq.s32.totalorder %s34, 1
    %p497 = por %p495, %p496
    %p499 = scmp.ne.s32.totalorder %s482, %s498
    %p500 = scmp.eq.s32.totalorder %s34, 0
    %p501 = por %p499, %p500
    %s502 = ssub.s32 %s28, %s35
    %p503 = scmp.eq.s32.totalorder %s502, 0
    %s505 = sadd.s32 %s504, 1
    %s506 = scalar_select %p503, %s504, %s505
    %p509 = pneg %p503
    %p510 = scmp.eq.s32.totalorder %s28, 1
    %p511 = por %p509, %p510
    %p512 = scmp.ne.s32.totalorder %s504, %s507
    %p513 = scmp.eq.s32.totalorder %s28, 0
    %p514 = por %p512, %p513
    %p515 = scmp.ne.s32.totalorder %s504, %s507
    %p516 = scmp.eq.s32.totalorder %s33, 1
    %p517 = por %p515, %p516
    %p518 = scmp.ne.s32.totalorder %s507, %s508
    %p519 = scmp.eq.s32.totalorder %s33, 0
    %p520 = por %p518, %p519
    %p521 = scmp.ne.s32.totalorder %s507, %s508
    %p522 = scmp.eq.s32.totalorder %s34, 1
    %p523 = por %p521, %p522
    %p525 = scmp.ne.s32.totalorder %s508, %s524
    %p526 = scmp.eq.s32.totalorder %s34, 0
    %p527 = por %p525, %p526
    %p528 = scmp.le.s32.totalorder 1, %s28
    %p529 = scmp.lt.s32.totalorder %s28, 3
    %p530 = pnand %p528, %p529
    %p531 = pneg %p530
    // Predicated region
    $region9: #{fastspeech_forward.1} parent=5 // pred_check
      _
    $region10: #{fastspeech_forward.1} parent=5 // pred_check_branch
      %533 = sbr.rel (%p530) target = $region12
    $region11: #{fastspeech_forward.1} parent=5 // pred_region
      %s534 = ssub.s32 %s28, 1
      // Predicated region
      $region13: #{fastspeech_forward.1} parent=11 // pred_check
        %p535 = pneg %p153
      $region14: #{fastspeech_forward.1} parent=11 // pred_check_branch
        %537 = sbr.rel (%p535) target = $region16
      $region15: #{fastspeech_forward.1} parent=11 // pred_region
        _
      $region16: #{fastspeech_forward.1} parent=11 // pred_fallthru
        _
      // Predicated region
      $region17: #{fastspeech_forward.1} parent=11 // pred_check
        %p538 = pneg %p174
      $region18: #{fastspeech_forward.1} parent=11 // pred_check_branch
        %540 = sbr.rel (%p538) target = $region20
      $region19: #{fastspeech_forward.1} parent=11 // pred_region
        _
      $region20: #{fastspeech_forward.1} parent=11 // pred_fallthru
        _
      // Predicated region
      $region21: #{fastspeech_forward.1} parent=11 // pred_check
        %p541 = pneg %p195
      $region22: #{fastspeech_forward.1} parent=11 // pred_check_branch
        %543 = sbr.rel (%p541) target = $region24
      $region23: #{fastspeech_forward.1} parent=11 // pred_region
        _
      $region24: #{fastspeech_forward.1} parent=11 // pred_fallthru
        _
      // Predicated region
      $region25: #{fastspeech_forward.1} parent=11 // pred_check
        %p544 = pneg %p216
      $region26: #{fastspeech_forward.1} parent=11 // pred_check_branch
        %546 = sbr.rel (%p544) target = $region28
      $region27: #{fastspeech_forward.1} parent=11 // pred_region
        _
      $region28: #{fastspeech_forward.1} parent=11 // pred_fallthru
        _
      // Predicated region
      $region29: #{fastspeech_forward.1} parent=11 // pred_check
        %p547 = pneg %p237
      $region30: #{fastspeech_forward.1} parent=11 // pred_check_branch
        %549 = sbr.rel (%p547) target = $region32
      $region31: #{fastspeech_forward.1} parent=11 // pred_region
        _
      $region32: #{fastspeech_forward.1} parent=11 // pred_fallthru
        _
      // Predicated region
      $region33: #{fastspeech_forward.1} parent=11 // pred_check
        %p550 = pneg %p258
      $region34: #{fastspeech_forward.1} parent=11 // pred_check_branch
        %552 = sbr.rel (%p550) target = $region36
      $region35: #{fastspeech_forward.1} parent=11 // pred_region
        _
      $region36: #{fastspeech_forward.1} parent=11 // pred_fallthru
        _
      // Predicated region
      $region37: #{fastspeech_forward.1} parent=11 // pred_check
        %p553 = pneg %p279
      $region38: #{fastspeech_forward.1} parent=11 // pred_check_branch
        %555 = sbr.rel (%p553) target = $region40
      $region39: #{fastspeech_forward.1} parent=11 // pred_region
        _
      $region40: #{fastspeech_forward.1} parent=11 // pred_fallthru
        _
      // Predicated region
      $region41: #{fastspeech_forward.1} parent=11 // pred_check
        %p556 = pneg %p300
      $region42: #{fastspeech_forward.1} parent=11 // pred_check_branch
        %558 = sbr.rel (%p556) target = $region44
      $region43: #{fastspeech_forward.1} parent=11 // pred_region
        _
      $region44: #{fastspeech_forward.1} parent=11 // pred_fallthru
        _
      // Predicated region
      $region45: #{fastspeech_forward.1} parent=11 // pred_check
        %p559 = pneg %p321
      $region46: #{fastspeech_forward.1} parent=11 // pred_check_branch
        %561 = sbr.rel (%p559) target = $region48
      $region47: #{fastspeech_forward.1} parent=11 // pred_region
        _
      $region48: #{fastspeech_forward.1} parent=11 // pred_fallthru
        _
      // Predicated region
      $region49: #{fastspeech_forward.1} parent=11 // pred_check
        %p562 = pneg %p342
      $region50: #{fastspeech_forward.1} parent=11 // pred_check_branch
        %564 = sbr.rel (%p562) target = $region52
      $region51: #{fastspeech_forward.1} parent=11 // pred_region
        _
      $region52: #{fastspeech_forward.1} parent=11 // pred_fallthru
        _
      // Predicated region
      $region53: #{fastspeech_forward.1} parent=11 // pred_check
        %p565 = pneg %p363
      $region54: #{fastspeech_forward.1} parent=11 // pred_check_branch
        %567 = sbr.rel (%p565) target = $region56
      $region55: #{fastspeech_forward.1} parent=11 // pred_region
        _
      $region56: #{fastspeech_forward.1} parent=11 // pred_fallthru
        _
      // Predicated region
      $region57: #{fastspeech_forward.1} parent=11 // pred_check
        %p568 = pneg %p384
      $region58: #{fastspeech_forward.1} parent=11 // pred_check_branch
        %570 = sbr.rel (%p568) target = $region60
      $region59: #{fastspeech_forward.1} parent=11 // pred_region
        _
      $region60: #{fastspeech_forward.1} parent=11 // pred_fallthru
        _
      // Predicated region
      $region61: #{fastspeech_forward.1} parent=11 // pred_check
        %p571 = pneg %p405
      $region62: #{fastspeech_forward.1} parent=11 // pred_check_branch
        %573 = sbr.rel (%p571) target = $region64
      $region63: #{fastspeech_forward.1} parent=11 // pred_region
        _
      $region64: #{fastspeech_forward.1} parent=11 // pred_fallthru
        _
      // Predicated region
      $region65: #{fastspeech_forward.1} parent=11 // pred_check
        %p574 = pneg %p426
      $region66: #{fastspeech_forward.1} parent=11 // pred_check_branch
        %576 = sbr.rel (%p574) target = $region68
      $region67: #{fastspeech_forward.1} parent=11 // pred_region
        _
      $region68: #{fastspeech_forward.1} parent=11 // pred_fallthru
        _
      // Predicated region
      $region69: #{fastspeech_forward.1} parent=11 // pred_check
        %p577 = pneg %p447
      $region70: #{fastspeech_forward.1} parent=11 // pred_check_branch
        %579 = sbr.rel (%p577) target = $region72
      $region71: #{fastspeech_forward.1} parent=11 // pred_region
        _
      $region72: #{fastspeech_forward.1} parent=11 // pred_fallthru
        _
      // Predicated region
      $region73: #{fastspeech_forward.1} parent=11 // pred_check
        %p580 = pneg %p468
      $region74: #{fastspeech_forward.1} parent=11 // pred_check_branch
        %582 = sbr.rel (%p580) target = $region76
      $region75: #{fastspeech_forward.1} parent=11 // pred_region
        _
      $region76: #{fastspeech_forward.1} parent=11 // pred_fallthru
        _
    $region12: #{fastspeech_forward.1} parent=5 // pred_fallthru
      _
    %p583 = scmp.lt.s32.totalorder %s28, 2
    // Predicated region
    $region77: #{fastspeech_forward.1} parent=5 // pred_check
      %p584 = pneg %p583
    $region78: #{fastspeech_forward.1} parent=5 // pred_check_branch
      %586 = sbr.rel (%p584) target = $region80
    $region79: #{fastspeech_forward.1} parent=5 // pred_region
      // Predicated region
      $region81: #{fastspeech_forward.1} parent=79 // pred_check
        %p587 = pneg %p48
      $region82: #{fastspeech_forward.1} parent=79 // pred_check_branch
        %589 = sbr.rel (%p587) target = $region84
      $region83: #{fastspeech_forward.1} parent=79 // pred_region
        %p590 = scmp.lt.s32.totalorder %s28, 1
        %s591 = scalar_select %p590, %s28, 1
        %s592 = smul.addr %s591, 8
        %s593 = scalar_lea.vmem %s0, %s592
      $region84: #{fastspeech_forward.1} parent=79 // pred_fallthru
        _
      // Predicated region
      $region85: #{fastspeech_forward.1} parent=79 // pred_check
        %p594 = pneg %p74
      $region86: #{fastspeech_forward.1} parent=79 // pred_check_branch
        %596 = sbr.rel (%p594) target = $region88
      $region87: #{fastspeech_forward.1} parent=79 // pred_region
        %p597 = scmp.lt.s32.totalorder %s28, 1
        %s598 = scalar_select %p597, %s28, 1
        %s599 = smul.addr %s598, 8
        %s600 = scalar_lea.vmem %s1, %s599
      $region88: #{fastspeech_forward.1} parent=79 // pred_fallthru
        _
      // Predicated region
      $region89: #{fastspeech_forward.1} parent=79 // pred_check
        %p601 = pneg %p100
      $region90: #{fastspeech_forward.1} parent=79 // pred_check_branch
        %603 = sbr.rel (%p601) target = $region92
      $region91: #{fastspeech_forward.1} parent=79 // pred_region
        %p604 = scmp.lt.s32.totalorder %s28, 1
        %s605 = scalar_select %p604, %s28, 1
        %s606 = smul.addr %s605, 2
        %s607 = smul.addr %s606, 8
        %s608 = scalar_lea.vmem %s2, %s607
      $region92: #{fastspeech_forward.1} parent=79 // pred_fallthru
        _
      // Predicated region
      $region93: #{fastspeech_forward.1} parent=79 // pred_check
        %p609 = pneg %p126
      $region94: #{fastspeech_forward.1} parent=79 // pred_check_branch
        %611 = sbr.rel (%p609) target = $region96
      $region95: #{fastspeech_forward.1} parent=79 // pred_region
        %p612 = scmp.lt.s32.totalorder %s28, 1
        %s613 = scalar_select %p612, %s28, 1
        %s614 = smul.addr %s613, 2
        %s615 = smul.addr %s614, 8
        %s616 = scalar_lea.vmem %s3, %s615
      $region96: #{fastspeech_forward.1} parent=79 // pred_fallthru
        _
    $region80: #{fastspeech_forward.1} parent=5 // pred_fallthru
      _
    %p617 = scmp.le.s32.totalorder 1, %s28
    %p618 = scmp.lt.s32.totalorder %s28, 3
    %p619 = pnand %p617, %p618
    %p620 = pneg %p619
    // Predicated region
    $region97: #{fastspeech_forward.1} parent=5 // pred_check
      _
    $region98: #{fastspeech_forward.1} parent=5 // pred_check_branch
      %622 = sbr.rel (%p619) target = $region100
    $region99: #{fastspeech_forward.1} parent=5 // pred_region
      %s623 = ssub.s32 %s28, 1
      %p624 = scmp.lt.s32.totalorder %s33, 1
      %s625 = scalar_select %p624, %s33, 1
      %s626 = smul.addr %s625, 8
      %s627 = scalar_lea.vmem %s0, %s626
      %p628 = pneg %p54
      %p629 = pneg %p51
      %p630 = scmp.lt.s32.totalorder %s33, 1
      %s631 = scalar_select %p630, %s33, 1
      %s632 = smul.addr %s631, 8
      %s633 = scalar_lea.vmem %s1, %s632
      %p634 = pneg %p80
      %p635 = pneg %p77
      %p636 = scmp.lt.s32.totalorder %s33, 1
      %s637 = scalar_select %p636, %s33, 1
      %s638 = smul.addr %s637, 2
      %s639 = smul.addr %s638, 8
      %s640 = scalar_lea.vmem %s2, %s639
      %p641 = pneg %p106
      %p642 = pneg %p103
      %p643 = scmp.lt.s32.totalorder %s33, 1
      %s644 = scalar_select %p643, %s33, 1
      %s645 = smul.addr %s644, 2
      %s646 = smul.addr %s645, 8
      %s647 = scalar_lea.vmem %s3, %s646
      %p648 = pneg %p132
      %p649 = pneg %p129
      %p650 = pneg %p153
      %p651 = pneg %p150
      %p652 = pneg %p174
      %p653 = pneg %p171
      %p654 = pneg %p195
      %p655 = pneg %p192
      %p656 = pneg %p216
      %p657 = pneg %p213
      %p658 = pneg %p237
      %p659 = pneg %p234
      %p660 = pneg %p258
      %p661 = pneg %p255
      %p662 = pneg %p279
      %p663 = pneg %p276
      %p664 = pneg %p300
      %p665 = pneg %p297
      %p666 = pneg %p321
      %p667 = pneg %p318
      %p668 = pneg %p342
      %p669 = pneg %p339
      %p670 = pneg %p363
      %p671 = pneg %p360
      %p672 = pneg %p384
      %p673 = pneg %p381
      %p674 = pneg %p405
      %p675 = pneg %p402
      %p676 = pneg %p426
      %p677 = pneg %p423
      %p678 = pneg %p447
      %p679 = pneg %p444
      %p680 = pneg %p468
      %p681 = pneg %p465
      %p682 = pneg %p494
      %p683 = pneg %p491
      %p684 = scmp.lt.s32.totalorder %s33, 1
      %s685 = scalar_select %p684, %s33, 1
      %s686 = smul.addr %s685, 2
      %s687 = smul.addr %s686, 8
      %s688 = scalar_lea.vmem %s20, %s687
      %p689 = pneg %p520
      %p690 = pneg %p517
      %p691 = scmp.lt.s32.totalorder %s33, 1
      %s692 = scalar_select %p691, %s33, 1
      %s693 = smul.addr %s692, 8
      %s694 = scalar_lea.vmem %s21, %s693
      %p695 = scmp.lt.s32.totalorder %s33, 1
      %s696 = scalar_select %p695, %s33, 1
      %s697 = smul.addr %s696, 8
      %s698 = scalar_lea.vmem %s0, %s697
      %p699 = scmp.lt.s32.totalorder %s33, 1
      %s700 = scalar_select %p699, %s33, 1
      %s701 = smul.addr %s700, 8
      %s702 = scalar_lea.vmem %s1, %s701
      %p703 = scmp.lt.s32.totalorder %s33, 1
      %s704 = scalar_select %p703, %s33, 1
      %s705 = smul.addr %s704, 2
      %s706 = smul.addr %s705, 8
      %s707 = scalar_lea.vmem %s2, %s706
      %p708 = scmp.lt.s32.totalorder %s33, 1
      %s709 = scalar_select %p708, %s33, 1
      %s710 = smul.addr %s709, 2
      %s711 = smul.addr %s710, 8
      %s712 = scalar_lea.vmem %s3, %s711
      %p713 = scmp.lt.s32.totalorder %s33, 1
      %s714 = scalar_select %p713, %s33, 1
      %s715 = smul.addr %s714, 2
      %s716 = smul.addr %s715, 8
      %s717 = scalar_lea.vmem %s20, %s716
      %p718 = scmp.lt.s32.totalorder %s33, 1
      %s719 = scalar_select %p718, %s33, 1
      %s720 = smul.addr %s719, 8
      %s721 = scalar_lea.vmem %s21, %s720
      %v723 = vld [vmem:[%s5] sm:$0xff]
      %v724 = vld [vmem:[%s5 + $0x8] sm:$0xff]
      %v725 = vld [vmem:[%s5 + $0x10] sm:$0x1]
      %v726 = vld [vmem:[%s698] sm:$0xff]
      %v727 = vld [vmem:[%s702] sm:$0xff]
      %v728 = vlaneseq
      %v729 = vand.u32 %v728, 127
      %730 = vset.pattern.permute.xlu0 0
      %731 = vperm.xlu0 %730, %v726
      %v732 = vpop.permute.xlu0 %731
      %vm733 = vcmp.eq.s32.totalorder %v732, %v729
      %v734 = vsel %vm733, 1, 0
      %v735 = vcvt.s32.f32 %v734
      %v736 = vld [vmem:[%s4] sm:$0xff]
      %v737 = vld [vmem:[%s4 + $0x8] sm:$0xff]
      %v738 = vld [vmem:[%s4 + $0x10] sm:$0xff]
      %v739 = vld [vmem:[%s4 + $0x18] sm:$0xff]
      %v740 = vld [vmem:[%s4 + $0x20] sm:$0xff]
      %v741 = vld [vmem:[%s4 + $0x28] sm:$0xff]
      %v742 = vld [vmem:[%s4 + $0x30] sm:$0xff]
      %v743 = vld [vmem:[%s4 + $0x38] sm:$0xff]
      %v744 = vld [vmem:[%s4 + $0x40] sm:$0xff]
      %v745 = vld [vmem:[%s4 + $0x48] sm:$0xff]
      %v746 = vld [vmem:[%s4 + $0x50] sm:$0x1f]
      %747 = vset.pattern.permute.xlu0 0
      %748 = vperm.xlu0 %747, %v727
      %v749 = vpop.permute.xlu0 %748
      %vm750 = vcmp.eq.s32.totalorder %v749, %v729
      %v751 = vsel %vm750, 1, 0
      %v752 = vcvt.s32.f32 %v751
      %vm753 = vcmask 138240
      %v755 = vsel %vm753, %v752, 0
      %vm757 = vcmask 1040384
      %v759 = vsel %vm757, %v725, 0
      %761 = vmatprep.subr.mxu0 0.0
      %762 = vmatpush1.msra.mxu0 %v723
      %763 = vmatprep.subr.mxu0 0.0
      %764 = vmatpush1.msra.mxu0 %v724
      %765 = vmatprep.subr.mxu0 0.0
      %766 = vmatpush1.msra.mxu0 %v759
      %767 = vmatprep.subr.mxu0 0.0
      %768 = vmatpush1.msra.mxu0 0.0
      %769 = vmatprep.subr.mxu0 0.0
      %770 = vmatpush1.msra.mxu0 0.0
      %771 = vmatprep.subr.mxu0 0.0
      %772 = vmatpush1.msra.mxu0 0.0
      %773 = vmatprep.subr.mxu0 0.0
      %774 = vmatpush1.msra.mxu0 0.0
      %775 = vmatprep.subr.mxu0 0.0
      %776 = vmatpush1.msra.mxu0 0.0
      %777 = vmatprep.subr.mxu0 0.0
      %778 = vmatpush1.msra.mxu0 0.0
      %779 = vmatprep.subr.mxu0 0.0
      %780 = vmatpush1.msra.mxu0 0.0
      %781 = vmatprep.subr.mxu0 0.0
      %782 = vmatpush1.msra.mxu0 0.0
      %783 = vmatprep.subr.mxu0 0.0
      %784 = vmatpush1.msra.mxu0 0.0
      %785 = vmatprep.subr.mxu0 0.0
      %786 = vmatpush1.msra.mxu0 0.0
      %787 = vmatprep.subr.mxu0 0.0
      %788 = vmatpush1.msra.mxu0 0.0
      %789 = vmatprep.subr.mxu0 0.0
      %790 = vmatpush1.msra.mxu0 0.0
      %791 = vmatprep.subr.mxu0 0.0
      %792 = vmatpush1.msra.mxu0 0.0
      %793 = vmatprep.subr.mxu0 0.0
      %794 = vmatpush1.msra.mxu0 0.0
      %795 = vmatprep.subr.mxu0 0.0
      %796 = vmatpush1.msra.mxu0 0.0
      %797 = vmatprep.subr.mxu0 0.0
      %798 = vmatpush1.msra.mxu0 0.0
      %799 = vmatprep.subr.mxu0 0.0
      %800 = vmatpush1.msra.mxu0 0.0
      %801 = vmatprep.subr.mxu0 0.0
      %802 = vmatpush1.msra.mxu0 0.0
      %803 = vmatprep.subr.mxu0 0.0
      %804 = vmatpush1.msra.mxu0 0.0
      %805 = vmatprep.subr.mxu0 0.0
      %806 = vmatpush1.msra.mxu0 0.0
      %807 = vmatprep.subr.mxu0 0.0
      %808 = vmatpush1.msra.mxu0 0.0
      %809 = vmatprep.subr.mxu0 0.0
      %810 = vmatpush1.msra.mxu0 0.0
      %811 = vmatprep.subr.mxu0 0.0
      %812 = vmatpush1.msra.mxu0 0.0
      %813 = vmatprep.subr.mxu0 0.0
      %814 = vmatpush1.msra.mxu0 0.0
      %815 = vmatprep.subr.mxu0 0.0
      %816 = vmatpush1.msra.mxu0 0.0
      %817 = vmatprep.subr.mxu0 0.0
      %818 = vmatpush1.msra.mxu0 0.0
      %819 = vmatprep.subr.mxu0 0.0
      %820 = vmatpush1.msra.mxu0 0.0
      %821 = vmatprep.subr.mxu0 0.0
      %822 = vmatpush1.msra.mxu0 0.0
      %823 = vmatprep.subr.mxu0 0.0
      %824 = vmatpush1.msra.mxu0 0.0
      %825 = vmatprep.mubr.f32.mxu0 0.0
      %826 = vmatmul.mubr.f32.gmra.mrb[0].mxu0 %v755
      %v827 = vpop.f32.mrb[0].mxu0
      %v828 = vadd.f32 0.0, %v827
      %v829 = vpop.f32.mrb[0].mxu0
      %830 = vdwg.mxu0
      %vm831 = vcmask 695296
      %v833 = vsel %vm831, %v735, 0
      %vm835 = vcmask 1044480
      %v837 = vsel %vm835, %v746, 0
      %839 = vmatprep.subr.mxu0 0.0
      %840 = vmatpush1.msra.mxu0 %v736
      %841 = vmatprep.subr.mxu0 0.0
      %842 = vmatpush1.msra.mxu0 %v737
      %843 = vmatprep.subr.mxu0 0.0
      %844 = vmatpush1.msra.mxu0 %v738
      %845 = vmatprep.subr.mxu0 0.0
      %846 = vmatpush1.msra.mxu0 %v739
      %847 = vmatprep.subr.mxu0 0.0
      %848 = vmatpush1.msra.mxu0 %v740
      %849 = vmatprep.subr.mxu0 0.0
      %850 = vmatpush1.msra.mxu0 %v741
      %851 = vmatprep.subr.mxu0 0.0
      %852 = vmatpush1.msra.mxu0 %v742
      %853 = vmatprep.subr.mxu0 0.0
      %854 = vmatpush1.msra.mxu0 %v743
      %855 = vmatprep.subr.mxu0 0.0
      %856 = vmatpush1.msra.mxu0 %v744
      %857 = vmatprep.subr.mxu0 0.0
      %858 = vmatpush1.msra.mxu0 %v745
      %859 = vmatprep.subr.mxu0 0.0
      %860 = vmatpush1.msra.mxu0 %v837
      %861 = vmatprep.subr.mxu0 0.0
      %862 = vmatpush1.msra.mxu0 0.0
      %863 = vmatprep.subr.mxu0 0.0
      %864 = vmatpush1.msra.mxu0 0.0
      %865 = vmatprep.subr.mxu0 0.0
      %866 = vmatpush1.msra.mxu0 0.0
      %867 = vmatprep.subr.mxu0 0.0
      %868 = vmatpush1.msra.mxu0 0.0
      %869 = vmatprep.subr.mxu0 0.0
      %870 = vmatpush1.msra.mxu0 0.0
      %871 = vmatprep.subr.mxu0 0.0
      %872 = vmatpush1.msra.mxu0 0.0
      %873 = vmatprep.subr.mxu0 0.0
      %874 = vmatpush1.msra.mxu0 0.0
      %875 = vmatprep.subr.mxu0 0.0
      %876 = vmatpush1.msra.mxu0 0.0
      %877 = vmatprep.subr.mxu0 0.0
      %878 = vmatpush1.msra.mxu0 0.0
      %879 = vmatprep.subr.mxu0 0.0
      %880 = vmatpush1.msra.mxu0 0.0
      %881 = vmatprep.subr.mxu0 0.0
      %882 = vmatpush1.msra.mxu0 0.0
      %883 = vmatprep.subr.mxu0 0.0
      %884 = vmatpush1.msra.mxu0 0.0
      %885 = vmatprep.subr.mxu0 0.0
      %886 = vmatpush1.msra.mxu0 0.0
      %887 = vmatprep.subr.mxu0 0.0
      %888 = vmatpush1.msra.mxu0 0.0
      %889 = vmatprep.subr.mxu0 0.0
      %890 = vmatpush1.msra.mxu0 0.0
      %891 = vmatprep.subr.mxu0 0.0
      %892 = vmatpush1.msra.mxu0 0.0
      %893 = vmatprep.subr.mxu0 0.0
      %894 = vmatpush1.msra.mxu0 0.0
      %895 = vmatprep.subr.mxu0 0.0
      %896 = vmatpush1.msra.mxu0 0.0
      %897 = vmatprep.subr.mxu0 0.0
      %898 = vmatpush1.msra.mxu0 0.0
      %899 = vmatprep.subr.mxu0 0.0
      %900 = vmatpush1.msra.mxu0 0.0
      %901 = vmatprep.subr.mxu0 0.0
      %902 = vmatpush1.msra.mxu0 0.0
      %903 = vmatprep.mubr.f32.mxu0 0.0
      %904 = vmatmul.mubr.f32.gmra.mrb[0].mxu0 %v833
      %v905 = vpop.f32.mrb[0].mxu0
      %v906 = vadd.f32 %v828, %v905
      %v907 = vpop.f32.mrb[0].mxu0
      %908 = vdwg.mxu0
      %vm909 = vcmp.ne.s32.totalorder %v727, 0
      %v910 = vsel %vm909, 1, 0
      %v911 = vcvt.s32.f32 %v910
      %v912 = vsub.f32 %v911, 1.0
      %vm913 = vcmask 7168
      %v915 = vsel %vm913, 1.0, 0
      %v918 = vsel %vm913, %v912, 0
      %920 = vmatprep.subr.mxu0 0.0
      %921 = vmatpush1.xpose.msra.mxu0 %v918
      %922 = vmatprep.subr.mxu0 0.0
      %923 = vmatpush1.xpose.msra.mxu0 0.0
      %924 = vmatprep.subr.mxu0 0.0
      %925 = vmatpush1.xpose.msra.mxu0 0.0
      %926 = vmatprep.subr.mxu0 0.0
      %927 = vmatpush1.xpose.msra.mxu0 0.0
      %928 = vmatprep.subr.mxu0 0.0
      %929 = vmatpush1.xpose.msra.mxu0 0.0
      %930 = vmatprep.subr.mxu0 0.0
      %931 = vmatpush1.xpose.msra.mxu0 0.0
      %932 = vmatprep.subr.mxu0 0.0
      %933 = vmatpush1.xpose.msra.mxu0 0.0
      %934 = vmatprep.subr.mxu0 0.0
      %935 = vmatpush1.xpose.msra.mxu0 0.0
      %936 = vmatprep.subr.mxu0 0.0
      %937 = vmatpush1.xpose.msra.mxu0 0.0
      %938 = vmatprep.subr.mxu0 0.0
      %939 = vmatpush1.xpose.msra.mxu0 0.0
      %940 = vmatprep.subr.mxu0 0.0
      %941 = vmatpush1.xpose.msra.mxu0 0.0
      %942 = vmatprep.subr.mxu0 0.0
      %943 = vmatpush1.xpose.msra.mxu0 0.0
      %944 = vmatprep.subr.mxu0 0.0
      %945 = vmatpush1.xpose.msra.mxu0 0.0
      %946 = vmatprep.subr.mxu0 0.0
      %947 = vmatpush1.xpose.msra.mxu0 0.0
      %948 = vmatprep.subr.mxu0 0.0
      %949 = vmatpush1.xpose.msra.mxu0 0.0
      %950 = vmatprep.subr.mxu0 0.0
      %951 = vmatpush1.xpose.msra.mxu0 0.0
      %952 = vmatprep.subr.mxu0 0.0
      %953 = vmatpush1.xpose.msra.mxu0 0.0
      %954 = vmatprep.subr.mxu0 0.0
      %955 = vmatpush1.xpose.msra.mxu0 0.0
      %956 = vmatprep.subr.mxu0 0.0
      %957 = vmatpush1.xpose.msra.mxu0 0.0
      %958 = vmatprep.subr.mxu0 0.0
      %959 = vmatpush1.xpose.msra.mxu0 0.0
      %960 = vmatprep.subr.mxu0 0.0
      %961 = vmatpush1.xpose.msra.mxu0 0.0
      %962 = vmatprep.subr.mxu0 0.0
      %963 = vmatpush1.xpose.msra.mxu0 0.0
      %964 = vmatprep.subr.mxu0 0.0
      %965 = vmatpush1.xpose.msra.mxu0 0.0
      %966 = vmatprep.subr.mxu0 0.0
      %967 = vmatpush1.xpose.msra.mxu0 0.0
      %968 = vmatprep.subr.mxu0 0.0
      %969 = vmatpush1.xpose.msra.mxu0 0.0
      %970 = vmatprep.subr.mxu0 0.0
      %971 = vmatpush1.xpose.msra.mxu0 0.0
      %972 = vmatprep.subr.mxu0 0.0
      %973 = vmatpush1.xpose.msra.mxu0 0.0
      %974 = vmatprep.subr.mxu0 0.0
      %975 = vmatpush1.xpose.msra.mxu0 0.0
      %976 = vmatprep.subr.mxu0 0.0
      %977 = vmatpush1.xpose.msra.mxu0 0.0
      %978 = vmatprep.subr.mxu0 0.0
      %979 = vmatpush1.xpose.msra.mxu0 0.0
      %980 = vmatprep.subr.mxu0 0.0
      %981 = vmatpush1.xpose.msra.mxu0 0.0
      %982 = vmatprep.subr.mxu0 0.0
      %983 = vmatpush1.xpose.msra.mxu0 0.0
      %984 = vmatprep.mubr.f32.mxu0 0.0
      %985 = vmatmul.mubr.f32.gmra.mrb[0].mxu0 %v915
      %v986 = vpop.f32.mrb[0].mxu0
      %v987 = vadd.f32 0.0, %v986
      %v988 = vpop.f32.mrb[0].mxu0
      %989 = vdwg.mxu0
      %v990 = vmul.f32 %v987, 1e+09
      %v991 = vld [vmem:[%s6] sm:$0xff]
      %v992 = vld [vmem:[%s6 + $0x8] sm:$0xf]
      %v993 = vld [vmem:[%s6 + $0xc] sm:$0xff]
      %v994 = vld [vmem:[%s6 + $0x14] sm:$0xf]
      %v995 = vld [vmem:[%s6 + $0x18] sm:$0xff]
      %v996 = vld [vmem:[%s6 + $0x20] sm:$0xf]
      %v997 = vld [vmem:[%s6 + $0x24] sm:$0xff]
      %v998 = vld [vmem:[%s6 + $0x2c] sm:$0xf]
      %v999 = vld [vmem:[%s7] sm:$0x7]
      %v1000 = vld [vmem:[%s8] sm:$0xf]
      %v1001 = vld [vmem:[%s8 + $0x4] sm:$0xf]
      %v1002 = vld [vmem:[%s8 + $0x8] sm:$0xf]
      %v1003 = vld [vmem:[%s8 + $0xc] sm:$0xf]
      %v1004 = vld [vmem:[%s8 + $0x10] sm:$0xf]
      %v1005 = vld [vmem:[%s8 + $0x14] sm:$0xf]
      %v1006 = vld [vmem:[%s8 + $0x18] sm:$0xf]
      %v1007 = vld [vmem:[%s8 + $0x1c] sm:$0xf]
      %v1008 = vld [vmem:[%s8 + $0x20] sm:$0xf]
      %v1009 = vld [vmem:[%s8 + $0x24] sm:$0xf]
      %v1010 = vld [vmem:[%s8 + $0x28] sm:$0xf]
      %v1011 = vld [vmem:[%s8 + $0x2c] sm:$0xf]
      %v1012 = vld [vmem:[%s8 + $0x30] sm:$0xf]
      %v1013 = vld [vmem:[%s8 + $0x34] sm:$0xf]
      %v1014 = vld [vmem:[%s8 + $0x38] sm:$0xf]
      %v1015 = vld [vmem:[%s8 + $0x3c] sm:$0xf]
      %v1016 = vld [vmem:[%s9] sm:$0x3f]
      %v1017 = vld [vmem:[%s10] sm:$0xf]
      %v1018 = vld [vmem:[%s10 + $0x4] sm:$0xf]
      %v1019 = vld [vmem:[%s10 + $0x8] sm:$0xf]
      %v1020 = vld [vmem:[%s10 + $0xc] sm:$0xf]
      %v1021 = vld [vmem:[%s10 + $0x10] sm:$0xf]
      %v1022 = vld [vmem:[%s10 + $0x14] sm:$0xf]
      %v1023 = vld [vmem:[%s10 + $0x18] sm:$0xf]
      %v1024 = vld [vmem:[%s10 + $0x1c] sm:$0xf]
      %v1025 = vld [vmem:[%s10 + $0x20] sm:$0xf]
      %v1026 = vld [vmem:[%s10 + $0x24] sm:$0xf]
      %v1027 = vld [vmem:[%s10 + $0x28] sm:$0xf]
      %v1028 = vld [vmem:[%s10 + $0x2c] sm:$0xf]
      %v1029 = vld [vmem:[%s11] sm:$0x1]
      %v1030 = vld [vmem:[%s12] sm:$0xf]
      %v1031 = vld [vmem:[%s12 + $0x4] sm:$0xf]
      %v1032 = vld [vmem:[%s12 + $0x8] sm:$0xf]
      %v1033 = vld [vmem:[%s12 + $0xc] sm:$0xf]
      %v1034 = vld [vmem:[%s12 + $0x10] sm:$0xf]
      %v1035 = vld [vmem:[%s12 + $0x14] sm:$0xf]
      %v1036 = vld [vmem:[%s12 + $0x18] sm:$0xf]
      %v1037 = vld [vmem:[%s12 + $0x1c] sm:$0xf]
      %v1038 = vpack.c.bf16 %v906, %v906
      %v1040 = vlaneseq
      %v1041 = vshrl.u32 %v1040, 7
      %v1042 = vsub.s32 0, %v1041
      %v1043 = vrot.slane %v999, %v1042
      %v1044 = vlaneseq
      %v1045 = vshrl.u32 %v1044, 7
      %v1046 = vsub.s32 1, %v1045
      %v1047 = vrot.slane %v999, %v1046
      %v1048 = vlaneseq
      %v1049 = vshrl.u32 %v1048, 7
      %v1050 = vsub.s32 2, %v1049
      %v1051 = vrot.slane %v999, %v1050
      %v1063 = vunpack.c.l.b16 %v991
      %v1064 = vunpack.c.h.b16 %v991
      %v1065 = vunpack.c.l.b16 %v992
      %v1066 = vunpack.c.l.b16 %v993
      %v1067 = vunpack.c.h.b16 %v993
      %v1068 = vunpack.c.l.b16 %v994
      %v1069 = vunpack.c.l.b16 %v995
      %v1070 = vunpack.c.h.b16 %v995
      %v1071 = vunpack.c.l.b16 %v996
      %v1072 = vunpack.c.l.b16 %v997
      %v1073 = vunpack.c.h.b16 %v997
      %v1074 = vunpack.c.l.b16 %v998
      %v1075 = vpack.c.b16 %v1066, %v1063
      %v1076 = vpack.c.b16 %v1067, %v1064
      %v1077 = vpack.c.b16 %v1068, %v1065
      %v1078 = vpack.c.b16 %v1072, %v1069
      %v1079 = vpack.c.b16 %v1073, %v1070
      %v1080 = vpack.c.b16 %v1074, %v1071
      %vm1087 = vcmask 261120
      %v1089 = vsel %vm1087, %v1038, 0
      %1091 = vmatprep.subr.bf16.mxu0 %v1076
      %1092 = vmatpush1.bf16.msra.mxu0 %v1075
      %1093 = vmatprep.subr.bf16.mxu0 %v1079
      %1094 = vmatpush1.bf16.msra.mxu0 %v1078
      %1095 = vmatprep.subr.bf16.mxu0 0
      %1096 = vmatpush1.bf16.msra.mxu0 0
      %1097 = vmatprep.subr.bf16.mxu0 0
      %1098 = vmatpush1.bf16.msra.mxu0 0
      %1099 = vmatprep.subr.bf16.mxu0 0
      %1100 = vmatpush1.bf16.msra.mxu0 0
      %1101 = vmatprep.subr.bf16.mxu0 0
      %1102 = vmatpush1.bf16.msra.mxu0 0
      %1103 = vmatprep.subr.bf16.mxu0 0
      %1104 = vmatpush1.bf16.msra.mxu0 0
      %1105 = vmatprep.subr.bf16.mxu0 0
      %1106 = vmatpush1.bf16.msra.mxu0 0
      %1107 = vmatprep.subr.bf16.mxu0 0
      %1108 = vmatpush1.bf16.msra.mxu0 0
      %1109 = vmatprep.subr.bf16.mxu0 0
      %1110 = vmatpush1.bf16.msra.mxu0 0
      %1111 = vmatprep.subr.bf16.mxu0 0
      %1112 = vmatpush1.bf16.msra.mxu0 0
      %1113 = vmatprep.subr.bf16.mxu0 0
      %1114 = vmatpush1.bf16.msra.mxu0 0
      %1115 = vmatprep.subr.bf16.mxu0 0
      %1116 = vmatpush1.bf16.msra.mxu0 0
      %1117 = vmatprep.subr.bf16.mxu0 0
      %1118 = vmatpush1.bf16.msra.mxu0 0
      %1119 = vmatprep.subr.bf16.mxu0 0
      %1120 = vmatpush1.bf16.msra.mxu0 0
      %1121 = vmatprep.subr.bf16.mxu0 0
      %1122 = vmatpush1.bf16.msra.mxu0 0
      %1123 = vmatprep.mubr.bf16.mxu0 0
      %1124 = vmatmul.mubr.bf16.gmra.mrb[0].mxu0 %v1089
      %v1125 = vpop.f32.mrb[0].mxu0
      %v1126 = vadd.f32 %v1043, %v1125
      %v1127 = vpop.f32.mrb[0].mxu0
      %v1128 = vadd.f32 %v1047, %v1127
      %v1129 = vpop.f32.mrb[0].mxu0
      %v1130 = vpop.f32.mrb[0].mxu0
      %1131 = vdwg.mxu0
      %1132 = vmatprep.subr.bf16.mxu0 0
      %1133 = vmatpush1.bf16.msra.mxu0 %v1077
      %1134 = vmatprep.subr.bf16.mxu0 0
      %1135 = vmatpush1.bf16.msra.mxu0 %v1080
      %1136 = vmatprep.subr.bf16.mxu0 0
      %1137 = vmatpush1.bf16.msra.mxu0 0
      %1138 = vmatprep.subr.bf16.mxu0 0
      %1139 = vmatpush1.bf16.msra.mxu0 0
      %1140 = vmatprep.subr.bf16.mxu0 0
      %1141 = vmatpush1.bf16.msra.mxu0 0
      %1142 = vmatprep.subr.bf16.mxu0 0
      %1143 = vmatpush1.bf16.msra.mxu0 0
      %1144 = vmatprep.subr.bf16.mxu0 0
      %1145 = vmatpush1.bf16.msra.mxu0 0
      %1146 = vmatprep.subr.bf16.mxu0 0
      %1147 = vmatpush1.bf16.msra.mxu0 0
      %1148 = vmatprep.subr.bf16.mxu0 0
      %1149 = vmatpush1.bf16.msra.mxu0 0
      %1150 = vmatprep.subr.bf16.mxu0 0
      %1151 = vmatpush1.bf16.msra.mxu0 0
      %1152 = vmatprep.subr.bf16.mxu0 0
      %1153 = vmatpush1.bf16.msra.mxu0 0
      %1154 = vmatprep.subr.bf16.mxu0 0
      %1155 = vmatpush1.bf16.msra.mxu0 0
      %1156 = vmatprep.subr.bf16.mxu0 0
      %1157 = vmatpush1.bf16.msra.mxu0 0
      %1158 = vmatprep.subr.bf16.mxu0 0
      %1159 = vmatpush1.bf16.msra.mxu0 0
      %1160 = vmatprep.subr.bf16.mxu0 0
      %1161 = vmatpush1.bf16.msra.mxu0 0
      %1162 = vmatprep.subr.bf16.mxu0 0
      %1163 = vmatpush1.bf16.msra.mxu0 0
      %1164 = vmatprep.mubr.bf16.mxu0 0
      %1165 = vmatmul.mubr.bf16.gmra.mrb[0].mxu0 %v1089
      %v1166 = vpop.f32.mrb[0].mxu0
      %v1167 = vadd.f32 %v1051, %v1166
      %v1168 = vpop.f32.mrb[0].mxu0
      %v1169 = vpop.f32.mrb[0].mxu0
      %v1170 = vpop.f32.mrb[0].mxu0
      %1171 = vdwg.mxu0
      %v1172 = vpack.c.bf16 %v1126, %v1126
      %v1173 = vpack.c.bf16 %v1128, %v1128
      %vm1174 = vcmask 523264
      %v1176 = vsel %vm1174, %v1172, 0
      %v1179 = vsel %vm1174, %v1173, 0
      %1181 = vmatprep.subr.bf16.mxu0 0
      %1182 = vmatpush1.bf16.xpose.msra.mxu0 %v1179
      %1183 = vmatprep.subr.bf16.mxu0 0
      %1184 = vmatpush1.bf16.xpose.msra.mxu0 0
      %1185 = vmatprep.subr.bf16.mxu0 0
      %1186 = vmatpush1.bf16.xpose.msra.mxu0 0
      %1187 = vmatprep.subr.bf16.mxu0 0
      %1188 = vmatpush1.bf16.xpose.msra.mxu0 0
      %1189 = vmatprep.subr.bf16.mxu0 0
      %1190 = vmatpush1.bf16.xpose.msra.mxu0 0
      %1191 = vmatprep.subr.bf16.mxu0 0
      %1192 = vmatpush1.bf16.xpose.msra.mxu0 0
      %1193 = vmatprep.subr.bf16.mxu0 0
      %1194 = vmatpush1.bf16.xpose.msra.mxu0 0
      %1195 = vmatprep.subr.bf16.mxu0 0
      %1196 = vmatpush1.bf16.xpose.msra.mxu0 0
      %1197 = vmatprep.subr.bf16.mxu0 0
      %1198 = vmatpush1.bf16.xpose.msra.mxu0 0
      %1199 = vmatprep.subr.bf16.mxu0 0
      %1200 = vmatpush1.bf16.xpose.msra.mxu0 0
      %1201 = vmatprep.subr.bf16.mxu0 0
      %1202 = vmatpush1.bf16.xpose.msra.mxu0 0
      %1203 = vmatprep.subr.bf16.mxu0 0
      %1204 = vmatpush1.bf16.xpose.msra.mxu0 0
      %1205 = vmatprep.subr.bf16.mxu0 0
      %1206 = vmatpush1.bf16.xpose.msra.mxu0 0
      %1207 = vmatprep.subr.bf16.mxu0 0
      %1208 = vmatpush1.bf16.xpose.msra.mxu0 0
      %1209 = vmatprep.subr.bf16.mxu0 0
      %1210 = vmatpush1.bf16.xpose.msra.mxu0 0
      %1211 = vmatprep.subr.bf16.mxu0 0
      %1212 = vmatpush1.bf16.xpose.msra.mxu0 0
      %1213 = vmatprep.mubr.bf16.mxu0 0
      %1214 = vmatmul.mubr.bf16.gmra.mrb[0].mxu0 %v1176
      %v1215 = vpop.f32.mrb[0].mxu0
      %v1216 = vadd.f32 0.0, %v1215
      %v1217 = vpop.f32.mrb[0].mxu0
      %v1218 = vpop.f32.mrb[0].mxu0
      %v1219 = vpop.f32.mrb[0].mxu0
      %1220 = vdwg.mxu0
      %v1221 = vmul.f32 %v1216, 0.125
      %v1222 = vadd.f32 %v1221, %v990
      %vm1223 = vcmask 64512
      %v1224 = vsel %vm1223, %v1222, -inf
      %1225 = vmax.xlane.f32.xlu0 %v1224
      %v1226 = vpop.xlane.xlu0 %1225
      %v1227 = vsub.f32 %v1222, %v1226
      %v1228 = vmul.f32 %v1227, 1.442695
      %v1229 = vpow.pop %v1228
      %v1230 = vsel %vm1223, %v1229, 0.0
      %1231 = vadd.xlane.f32.xlu0 %v1230
      %v1232 = vpop.xlane.xlu0 %1231
      %v1233 = vrcp.pop %v1232
      %v1234 = vmul.f32 %v1229, %v1233
      %v1235 = vpack.c.bf16 %v1234, %v1234
      %v1236 = vpack.c.bf16 %v1167, %v1167
      %v1238 = vsel %vm1223, %v1235, 0
      %vm1240 = vcmask 1043456
      %v1242 = vsel %vm1240, %v1236, 0
      %1244 = vmatprep.subr.bf16.mxu0 0
      %1245 = vmatpush1.bf16.msra.mxu0 %v1242
      %1246 = vmatprep.subr.bf16.mxu0 0
      %1247 = vmatpush1.bf16.msra.mxu0 0
      %1248 = vmatprep.subr.bf16.mxu0 0
      %1249 = vmatpush1.bf16.msra.mxu0 0
      %1250 = vmatprep.subr.bf16.mxu0 0
      %1251 = vmatpush1.bf16.msra.mxu0 0
      %1252 = vmatprep.subr.bf16.mxu0 0
      %1253 = vmatpush1.bf16.msra.mxu0 0
      %1254 = vmatprep.subr.bf16.mxu0 0
      %1255 = vmatpush1.bf16.msra.mxu0 0
      %1256 = vmatprep.subr.bf16.mxu0 0
      %1257 = vmatpush1.bf16.msra.mxu0 0
      %1258 = vmatprep.subr.bf16.mxu0 0
      %1259 = vmatpush1.bf16.msra.mxu0 0
      %1260 = vmatprep.subr.bf16.mxu0 0
      %1261 = vmatpush1.bf16.msra.mxu0 0
      %1262 = vmatprep.subr.bf16.mxu0 0
      %1263 = vmatpush1.bf16.msra.mxu0 0
      %1264 = vmatprep.subr.bf16.mxu0 0
      %1265 = vmatpush1.bf16.msra.mxu0 0
      %1266 = vmatprep.subr.bf16.mxu0 0
      %1267 = vmatpush1.bf16.msra.mxu0 0
      %1268 = vmatprep.subr.bf16.mxu0 0
      %1269 = vmatpush1.bf16.msra.mxu0 0
      %1270 = vmatprep.subr.bf16.mxu0 0
      %1271 = vmatpush1.bf16.msra.mxu0 0
      %1272 = vmatprep.subr.bf16.mxu0 0
      %1273 = vmatpush1.bf16.msra.mxu0 0
      %1274 = vmatprep.subr.bf16.mxu0 0
      %1275 = vmatpush1.bf16.msra.mxu0 0
      %1276 = vmatprep.mubr.bf16.mxu0 0
      %1277 = vmatmul.mubr.bf16.gmra.mrb[0].mxu0 %v1238
      %v1278 = vpop.f32.mrb[0].mxu0
      %v1279 = vadd.f32 0.0, %v1278
      %v1280 = vpop.f32.mrb[0].mxu0
      %v1281 = vpop.f32.mrb[0].mxu0
      %v1282 = vpop.f32.mrb[0].mxu0
      %1283 = vdwg.mxu0
      %v1284 = vpack.c.bf16 %v1279, %v1279
      %v1293 = vunpack.c.l.b16 %v1000
      %v1294 = vunpack.c.l.b16 %v1001
      %v1295 = vunpack.c.l.b16 %v1002
      %v1296 = vunpack.c.l.b16 %v1003
      %v1297 = vunpack.c.l.b16 %v1004
      %v1298 = vunpack.c.l.b16 %v1005
      %v1299 = vunpack.c.l.b16 %v1006
      %v1300 = vunpack.c.l.b16 %v1007
      %v1301 = vpack.c.b16 %v1294, %v1293
      %v1302 = vpack.c.b16 %v1296, %v1295
      %v1303 = vpack.c.b16 %v1298, %v1297
      %v1304 = vpack.c.b16 %v1300, %v1299
      %v1310 = vsel %vm1174, %v1284, 0
      %1312 = vmatprep.subr.bf16.mxu0 0
      %1313 = vmatpush1.bf16.msra.mxu0 %v1301
      %1314 = vmatprep.subr.bf16.mxu0 0
      %1315 = vmatpush1.bf16.msra.mxu0 %v1302
      %1316 = vmatprep.subr.bf16.mxu0 0
      %1317 = vmatpush1.bf16.msra.mxu0 %v1303
      %1318 = vmatprep.subr.bf16.mxu0 0
      %1319 = vmatpush1.bf16.msra.mxu0 %v1304
      %1320 = vmatprep.subr.bf16.mxu0 0
      %1321 = vmatpush1.bf16.msra.mxu0 0
      %1322 = vmatprep.subr.bf16.mxu0 0
      %1323 = vmatpush1.bf16.msra.mxu0 0
      %1324 = vmatprep.subr.bf16.mxu0 0
      %1325 = vmatpush1.bf16.msra.mxu0 0
      %1326 = vmatprep.subr.bf16.mxu0 0
      %1327 = vmatpush1.bf16.msra.mxu0 0
      %1328 = vmatprep.subr.bf16.mxu0 0
      %1329 = vmatpush1.bf16.msra.mxu0 0
      %1330 = vmatprep.subr.bf16.mxu0 0
      %1331 = vmatpush1.bf16.msra.mxu0 0
      %1332 = vmatprep.subr.bf16.mxu0 0
      %1333 = vmatpush1.bf16.msra.mxu0 0
      %1334 = vmatprep.subr.bf16.mxu0 0
      %1335 = vmatpush1.bf16.msra.mxu0 0
      %1336 = vmatprep.subr.bf16.mxu0 0
      %1337 = vmatpush1.bf16.msra.mxu0 0
      %1338 = vmatprep.subr.bf16.mxu0 0
      %1339 = vmatpush1.bf16.msra.mxu0 0
      %1340 = vmatprep.subr.bf16.mxu0 0
      %1341 = vmatpush1.bf16.msra.mxu0 0
      %1342 = vmatprep.subr.bf16.mxu0 0
      %1343 = vmatpush1.bf16.msra.mxu0 0
      %1344 = vmatprep.mubr.bf16.mxu0 0
      %1345 = vmatmul.mubr.bf16.gmra.mrb[0].mxu0 %v1310
      %v1346 = vpop.f32.mrb[0].mxu0
      %v1347 = vadd.f32 0.0, %v1346
      %v1348 = vpop.f32.mrb[0].mxu0
      %v1349 = vpop.f32.mrb[0].mxu0
      %v1350 = vpop.f32.mrb[0].mxu0
      %1351 = vdwg.mxu0
      %v1352 = vlaneseq
      %v1353 = vshrl.u32 %v1352, 7
      %v1354 = vsub.s32 0, %v1353
      %v1355 = vrot.slane %v1016, %v1354
      %v1356 = vadd.f32 %v1355, %v1347
      %1358 = vrot.lane.b32.xlu0 %v1172, 64
      %v1359 = vpop.permute.xlu0 %1358
      %1361 = vrot.lane.b32.xlu0 %v1173, 64
      %v1362 = vpop.permute.xlu0 %1361
      %v1364 = vsel %vm1174, %v1359, 0
      %v1367 = vsel %vm1174, %v1362, 0
      %1369 = vmatprep.subr.bf16.mxu0 0
      %1370 = vmatpush1.bf16.xpose.msra.mxu0 %v1367
      %1371 = vmatprep.subr.bf16.mxu0 0
      %1372 = vmatpush1.bf16.xpose.msra.mxu0 0
      %1373 = vmatprep.subr.bf16.mxu0 0
      %1374 = vmatpush1.bf16.xpose.msra.mxu0 0
      %1375 = vmatprep.subr.bf16.mxu0 0
      %1376 = vmatpush1.bf16.xpose.msra.mxu0 0
      %1377 = vmatprep.subr.bf16.mxu0 0
      %1378 = vmatpush1.bf16.xpose.msra.mxu0 0
      %1379 = vmatprep.subr.bf16.mxu0 0
      %1380 = vmatpush1.bf16.xpose.msra.mxu0 0
      %1381 = vmatprep.subr.bf16.mxu0 0
      %1382 = vmatpush1.bf16.xpose.msra.mxu0 0
      %1383 = vmatprep.subr.bf16.mxu0 0
      %1384 = vmatpush1.bf16.xpose.msra.mxu0 0
      %1385 = vmatprep.subr.bf16.mxu0 0
      %1386 = vmatpush1.bf16.xpose.msra.mxu0 0
      %1387 = vmatprep.subr.bf16.mxu0 0
      %1388 = vmatpush1.bf16.xpose.msra.mxu0 0
      %1389 = vmatprep.subr.bf16.mxu0 0
      %1390 = vmatpush1.bf16.xpose.msra.mxu0 0
      %1391 = vmatprep.subr.bf16.mxu0 0
      %1392 = vmatpush1.bf16.xpose.msra.mxu0 0
      %1393 = vmatprep.subr.bf16.mxu0 0
      %1394 = vmatpush1.bf16.xpose.msra.mxu0 0
      %1395 = vmatprep.subr.bf16.mxu0 0
      %1396 = vmatpush1.bf16.xpose.msra.mxu0 0
      %1397 = vmatprep.subr.bf16.mxu0 0
      %1398 = vmatpush1.bf16.xpose.msra.mxu0 0
      %1399 = vmatprep.subr.bf16.mxu0 0
      %1400 = vmatpush1.bf16.xpose.msra.mxu0 0
      %1401 = vmatprep.mubr.bf16.mxu0 0
      %1402 = vmatmul.mubr.bf16.gmra.mrb[0].mxu0 %v1364
      %v1403 = vpop.f32.mrb[0].mxu0
      %v1404 = vadd.f32 0.0, %v1403
      %v1405 = vpop.f32.mrb[0].mxu0
      %v1406 = vpop.f32.mrb[0].mxu0
      %v1407 = vpop.f32.mrb[0].mxu0
      %1408 = vdwg.mxu0
      %v1409 = vmul.f32 %v1404, 0.125
      %v1410 = vadd.f32 %v1409, %v990
      %v1411 = vsel %vm1223, %v1410, -inf
      %1412 = vmax.xlane.f32.xlu0 %v1411
      %v1413 = vpop.xlane.xlu0 %1412
      %v1414 = vsub.f32 %v1410, %v1413
      %v1415 = vmul.f32 %v1414, 1.442695
      %v1416 = vpow.pop %v1415
      %v1417 = vsel %vm1223, %v1416, 0.0
      %1418 = vadd.xlane.f32.xlu0 %v1417
      %v1419 = vpop.xlane.xlu0 %1418
      %v1420 = vrcp.pop %v1419
      %v1421 = vmul.f32 %v1416, %v1420
      %v1422 = vpack.c.bf16 %v1421, %v1421
      %1424 = vrot.lane.b32.xlu0 %v1236, 64
      %v1425 = vpop.permute.xlu0 %1424
      %v1427 = vsel %vm1223, %v1422, 0
      %v1430 = vsel %vm1240, %v1425, 0
      %1432 = vmatprep.subr.bf16.mxu0 0
      %1433 = vmatpush1.bf16.msra.mxu0 %v1430
      %1434 = vmatprep.subr.bf16.mxu0 0
      %1435 = vmatpush1.bf16.msra.mxu0 0
      %1436 = vmatprep.subr.bf16.mxu0 0
      %1437 = vmatpush1.bf16.msra.mxu0 0
      %1438 = vmatprep.subr.bf16.mxu0 0
      %1439 = vmatpush1.bf16.msra.mxu0 0
      %1440 = vmatprep.subr.bf16.mxu0 0
      %1441 = vmatpush1.bf16.msra.mxu0 0
      %1442 = vmatprep.subr.bf16.mxu0 0
      %1443 = vmatpush1.bf16.msra.mxu0 0
      %1444 = vmatprep.subr.bf16.mxu0 0
      %1445 = vmatpush1.bf16.msra.mxu0 0
      %1446 = vmatprep.subr.bf16.mxu0 0
      %1447 = vmatpush1.bf16.msra.mxu0 0
      %1448 = vmatprep.subr.bf16.mxu0 0
      %1449 = vmatpush1.bf16.msra.mxu0 0
      %1450 = vmatprep.subr.bf16.mxu0 0
      %1451 = vmatpush1.bf16.msra.mxu0 0
      %1452 = vmatprep.subr.bf16.mxu0 0
      %1453 = vmatpush1.bf16.msra.mxu0 0
      %1454 = vmatprep.subr.bf16.mxu0 0
      %1455 = vmatpush1.bf16.msra.mxu0 0
      %1456 = vmatprep.subr.bf16.mxu0 0
      %1457 = vmatpush1.bf16.msra.mxu0 0
      %1458 = vmatprep.subr.bf16.mxu0 0
      %1459 = vmatpush1.bf16.msra.mxu0 0
      %1460 = vmatprep.subr.bf16.mxu0 0
      %1461 = vmatpush1.bf16.msra.mxu0 0
      %1462 = vmatprep.subr.bf16.mxu0 0
      %1463 = vmatpush1.bf16.msra.mxu0 0
      %1464 = vmatprep.mubr.bf16.mxu0 0
      %1465 = vmatmul.mubr.bf16.gmra.mrb[0].mxu0 %v1427
      %v1466 = vpop.f32.mrb[0].mxu0
      %v1467 = vadd.f32 0.0, %v1466
      %v1468 = vpop.f32.mrb[0].mxu0
      %v1469 = vpop.f32.mrb[0].mxu0
      %v1470 = vpop.f32.mrb[0].mxu0
      %1471 = vdwg.mxu0
      %v1472 = vpack.c.bf16 %v1467, %v1467
      %v1481 = vunpack.c.l.b16 %v1008
      %v1482 = vunpack.c.l.b16 %v1009
      %v1483 = vunpack.c.l.b16 %v1010
      %v1484 = vunpack.c.l.b16 %v1011
      %v1485 = vunpack.c.l.b16 %v1012
      %v1486 = vunpack.c.l.b16 %v1013
      %v1487 = vunpack.c.l.b16 %v1014
      %v1488 = vunpack.c.l.b16 %v1015
      %v1489 = vpack.c.b16 %v1482, %v1481
      %v1490 = vpack.c.b16 %v1484, %v1483
      %v1491 = vpack.c.b16 %v1486, %v1485
      %v1492 = vpack.c.b16 %v1488, %v1487
      %v1498 = vsel %vm1174, %v1472, 0
      %1500 = vmatprep.subr.bf16.mxu0 0
      %1501 = vmatpush1.bf16.msra.mxu0 %v1489
      %1502 = vmatprep.subr.bf16.mxu0 0
      %1503 = vmatpush1.bf16.msra.mxu0 %v1490
      %1504 = vmatprep.subr.bf16.mxu0 0
      %1505 = vmatpush1.bf16.msra.mxu0 %v1491
      %1506 = vmatprep.subr.bf16.mxu0 0
      %1507 = vmatpush1.bf16.msra.mxu0 %v1492
      %1508 = vmatprep.subr.bf16.mxu0 0
      %1509 = vmatpush1.bf16.msra.mxu0 0
      %1510 = vmatprep.subr.bf16.mxu0 0
      %1511 = vmatpush1.bf16.msra.mxu0 0
      %1512 = vmatprep.subr.bf16.mxu0 0
      %1513 = vmatpush1.bf16.msra.mxu0 0
      %1514 = vmatprep.subr.bf16.mxu0 0
      %1515 = vmatpush1.bf16.msra.mxu0 0
      %1516 = vmatprep.subr.bf16.mxu0 0
      %1517 = vmatpush1.bf16.msra.mxu0 0
      %1518 = vmatprep.subr.bf16.mxu0 0
      %1519 = vmatpush1.bf16.msra.mxu0 0
      %1520 = vmatprep.subr.bf16.mxu0 0
      %1521 = vmatpush1.bf16.msra.mxu0 0
      %1522 = vmatprep.subr.bf16.mxu0 0
      %1523 = vmatpush1.bf16.msra.mxu0 0
      %1524 = vmatprep.subr.bf16.mxu0 0
      %1525 = vmatpush1.bf16.msra.mxu0 0
      %1526 = vmatprep.subr.bf16.mxu0 0
      %1527 = vmatpush1.bf16.msra.mxu0 0
      %1528 = vmatprep.subr.bf16.mxu0 0
      %1529 = vmatpush1.bf16.msra.mxu0 0
      %1530 = vmatprep.subr.bf16.mxu0 0
      %1531 = vmatpush1.bf16.msra.mxu0 0
      %1532 = vmatprep.mubr.bf16.mxu0 0
      %1533 = vmatmul.mubr.bf16.gmra.mrb[0].mxu0 %v1498
      %v1534 = vpop.f32.mrb[0].mxu0
      %v1535 = vadd.f32 0.0, %v1534
      %v1536 = vpop.f32.mrb[0].mxu0
      %v1537 = vpop.f32.mrb[0].mxu0
      %v1538 = vpop.f32.mrb[0].mxu0
      %1539 = vdwg.mxu0
      %v1540 = vadd.f32 %v1356, %v1535
      %v1541 = vadd.f32 %v1540, %v906
      %v1542 = vsel %vm1087, %v1541, 0.0
      %1543 = vadd.xlane.f32.xlu0 %v1542
      %v1544 = vpop.xlane.xlu0 %1543
      %v1545 = vrcp.pop 32.0
      %v1546 = vmul.f32 %v1544, %v1545
      %v1547 = vsub.f32 %v1541, %v1546
      %v1548 = vmul.f32 %v1547, %v1547
      %v1549 = vsel %vm1087, %v1548, 0.0
      %1550 = vadd.xlane.f32.xlu0 %v1549
      %v1551 = vpop.xlane.xlu0 %1550
      %v1552 = vmul.f32 %v1551, %v1545
      %v1553 = vadd.f32 %v1552, 1e-05
      %v1554 = vrsqrt.pop %v1553
      %v1555 = vmul.f32 %v1547, %v1554
      %v1556 = vlaneseq
      %v1557 = vshrl.u32 %v1556, 7
      %v1558 = vsub.s32 1, %v1557
      %v1559 = vrot.slane %v1016, %v1558
      %v1560 = vmul.f32 %v1555, %v1559
      %v1561 = vlaneseq
      %v1562 = vshrl.u32 %v1561, 7
      %v1563 = vsub.s32 2, %v1562
      %v1564 = vrot.slane %v1016, %v1563
      %v1565 = vadd.f32 %v1560, %v1564
      %1567 = vset.pattern.permute.xlu0 0
      %1568 = vperm.xlu0 %1567, %v911
      %v1569 = vpop.permute.xlu0 %1568
      %v1571 = vmul.f32 %v1565, %v1569
      %v1572 = vlaneseq
      %v1573 = vshrl.u32 %v1572, 7
      %v1574 = vrot.slane %v1571, 7
      %v1575 = vadd.s32 %v1573, 4294967295
      %vm1576 = vcmp.ge.s32.totalorder %v1575, 0
      %vm1577 = vcmp.lt.s32.totalorder %v1575, 8
      %vm1578 = vmand %vm1576, %vm1577
      %v1579 = vsel %vm1578, %v1574, 0.0
      %v1580 = vrot.slane %v1571, 1
      %v1581 = vadd.s32 %v1573, 1
      %vm1582 = vcmp.ge.s32.totalorder %v1581, 0
      %vm1583 = vcmp.lt.s32.totalorder %v1581, 8
      %vm1584 = vmand %vm1582, %vm1583
      %v1585 = vsel %vm1584, %v1580, 0.0
      %1587 = vrot.lane.b32.xlu0 %v1571, 32
      %v1588 = vpop.permute.xlu0 %1587
      %1591 = vrot.lane.b32.xlu0 %v1585, 64
      %v1592 = vpop.permute.xlu0 %1591
      %v1594 = vsel %vm1087, %v1579, %v1588
      %v1595 = vsel %vm1174, %v1594, %v1592
      %v1596 = vpack.c.bf16 %v1595, %v1595
      %v1598 = vlaneseq
      %v1599 = vshrl.u32 %v1598, 7
      %v1600 = vsub.s32 0, %v1599
      %v1601 = vrot.slane %v1029, %v1600
      %v1615 = vunpack.c.l.b16 %v1017
      %v1616 = vunpack.c.l.b16 %v1018
      %v1617 = vunpack.c.l.b16 %v1019
      %v1618 = vunpack.c.l.b16 %v1020
      %v1619 = vunpack.c.l.b16 %v1021
      %v1620 = vunpack.c.l.b16 %v1022
      %v1621 = vunpack.c.l.b16 %v1023
      %v1622 = vunpack.c.l.b16 %v1024
      %v1623 = vunpack.c.l.b16 %v1025
      %v1624 = vunpack.c.l.b16 %v1026
      %v1625 = vunpack.c.l.b16 %v1027
      %v1626 = vunpack.c.l.b16 %v1028
      %v1627 = vpack.c.b16 %v1616, %v1615
      %v1628 = vpack.c.b16 %v1618, %v1617
      %v1629 = vpack.c.b16 %v1620, %v1619
      %v1630 = vpack.c.b16 %v1622, %v1621
      %v1631 = vpack.c.b16 %v1624, %v1623
      %v1632 = vpack.c.b16 %v1626, %v1625
      %vm1639 = vcmask 785408
      %v1641 = vsel %vm1639, %v1596, 0
      %1643 = vmatprep.subr.bf16.mxu0 0
      %1644 = vmatpush1.bf16.msra.mxu0 %v1627
      %1645 = vmatprep.subr.bf16.mxu0 0
      %1646 = vmatpush1.bf16.msra.mxu0 %v1628
      %1647 = vmatprep.subr.bf16.mxu0 0
      %1648 = vmatpush1.bf16.msra.mxu0 %v1629
      %1649 = vmatprep.subr.bf16.mxu0 0
      %1650 = vmatpush1.bf16.msra.mxu0 %v1630
      %1651 = vmatprep.subr.bf16.mxu0 0
      %1652 = vmatpush1.bf16.msra.mxu0 %v1631
      %1653 = vmatprep.subr.bf16.mxu0 0
      %1654 = vmatpush1.bf16.msra.mxu0 %v1632
      %1655 = vmatprep.subr.bf16.mxu0 0
      %1656 = vmatpush1.bf16.msra.mxu0 0
      %1657 = vmatprep.subr.bf16.mxu0 0
      %1658 = vmatpush1.bf16.msra.mxu0 0
      %1659 = vmatprep.subr.bf16.mxu0 0
      %1660 = vmatpush1.bf16.msra.mxu0 0
      %1661 = vmatprep.subr.bf16.mxu0 0
      %1662 = vmatpush1.bf16.msra.mxu0 0
      %1663 = vmatprep.subr.bf16.mxu0 0
      %1664 = vmatpush1.bf16.msra.mxu0 0
      %1665 = vmatprep.subr.bf16.mxu0 0
      %1666 = vmatpush1.bf16.msra.mxu0 0
      %1667 = vmatprep.subr.bf16.mxu0 0
      %1668 = vmatpush1.bf16.msra.mxu0 0
      %1669 = vmatprep.subr.bf16.mxu0 0
      %1670 = vmatpush1.bf16.msra.mxu0 0
      %1671 = vmatprep.subr.bf16.mxu0 0
      %1672 = vmatpush1.bf16.msra.mxu0 0
      %1673 = vmatprep.subr.bf16.mxu0 0
      %1674 = vmatpush1.bf16.msra.mxu0 0
      %1675 = vmatprep.mubr.bf16.mxu0 0
      %1676 = vmatmul.mubr.bf16.gmra.mrb[0].mxu0 %v1641
      %v1677 = vpop.f32.mrb[0].mxu0
      %v1678 = vadd.f32 %v1601, %v1677
      %v1679 = vpop.f32.mrb[0].mxu0
      %v1680 = vpop.f32.mrb[0].mxu0
      %v1681 = vpop.f32.mrb[0].mxu0
      %1682 = vdwg.mxu0
      %v1683 = vmax.f32 %v1678, 0.0
      %v1684 = vpack.c.bf16 %v1683, %v1683
      %v1685 = vlaneseq
      %v1686 = vshrl.u32 %v1685, 7
      %v1687 = vsub.s32 3, %v1686
      %v1688 = vrot.slane %v1016, %v1687
      %v1697 = vunpack.c.l.b16 %v1030
      %v1698 = vunpack.c.l.b16 %v1031
      %v1699 = vunpack.c.l.b16 %v1032
      %v1700 = vunpack.c.l.b16 %v1033
      %v1701 = vunpack.c.l.b16 %v1034
      %v1702 = vunpack.c.l.b16 %v1035
      %v1703 = vunpack.c.l.b16 %v1036
      %v1704 = vunpack.c.l.b16 %v1037
      %v1705 = vpack.c.b16 %v1698, %v1697
      %v1706 = vpack.c.b16 %v1700, %v1699
      %v1707 = vpack.c.b16 %v1702, %v1701
      %v1708 = vpack.c.b16 %v1704, %v1703
      %v1714 = vsel %vm1174, %v1684, 0
      %1716 = vmatprep.subr.bf16.mxu0 0
      %1717 = vmatpush1.bf16.msra.mxu0 %v1705
      %1718 = vmatprep.subr.bf16.mxu0 0
      %1719 = vmatpush1.bf16.msra.mxu0 %v1706
      %1720 = vmatprep.subr.bf16.mxu0 0
      %1721 = vmatpush1.bf16.msra.mxu0 %v1707
      %1722 = vmatprep.subr.bf16.mxu0 0
      %1723 = vmatpush1.bf16.msra.mxu0 %v1708
      %1724 = vmatprep.subr.bf16.mxu0 0
      %1725 = vmatpush1.bf16.msra.mxu0 0
      %1726 = vmatprep.subr.bf16.mxu0 0
      %1727 = vmatpush1.bf16.msra.mxu0 0
      %1728 = vmatprep.subr.bf16.mxu0 0
      %1729 = vmatpush1.bf16.msra.mxu0 0
      %1730 = vmatprep.subr.bf16.mxu0 0
      %1731 = vmatpush1.bf16.msra.mxu0 0
      %1732 = vmatprep.subr.bf16.mxu0 0
      %1733 = vmatpush1.bf16.msra.mxu0 0
      %1734 = vmatprep.subr.bf16.mxu0 0
      %1735 = vmatpush1.bf16.msra.mxu0 0
      %1736 = vmatprep.subr.bf16.mxu0 0
      %1737 = vmatpush1.bf16.msra.mxu0 0
      %1738 = vmatprep.subr.bf16.mxu0 0
      %1739 = vmatpush1.bf16.msra.mxu0 0
      %1740 = vmatprep.subr.bf16.mxu0 0
      %1741 = vmatpush1.bf16.msra.mxu0 0
      %1742 = vmatprep.subr.bf16.mxu0 0
      %1743 = vmatpush1.bf16.msra.mxu0 0
      %1744 = vmatprep.subr.bf16.mxu0 0
      %1745 = vmatpush1.bf16.msra.mxu0 0
      %1746 = vmatprep.subr.bf16.mxu0 0
      %1747 = vmatpush1.bf16.msra.mxu0 0
      %1748 = vmatprep.mubr.bf16.mxu0 0
      %1749 = vmatmul.mubr.bf16.gmra.mrb[0].mxu0 %v1714
      %v1750 = vpop.f32.mrb[0].mxu0
      %v1751 = vadd.f32 %v1688, %v1750
      %v1752 = vpop.f32.mrb[0].mxu0
      %v1753 = vpop.f32.mrb[0].mxu0
      %v1754 = vpop.f32.mrb[0].mxu0
      %1755 = vdwg.mxu0
      %v1756 = vadd.f32 %v1751, %v1571
      %v1757 = vsel %vm1087, %v1756, 0.0
      %1758 = vadd.xlane.f32.xlu0 %v1757
      %v1759 = vpop.xlane.xlu0 %1758
      %v1760 = vmul.f32 %v1759, %v1545
      %v1761 = vsub.f32 %v1756, %v1760
      %v1762 = vmul.f32 %v1761, %v1761
      %v1763 = vsel %vm1087, %v1762, 0.0
      %1764 = vadd.xlane.f32.xlu0 %v1763
      %v1765 = vpop.xlane.xlu0 %1764
      %v1766 = vmul.f32 %v1765, %v1545
      %v1767 = vadd.f32 %v1766, 1e-05
      %v1768 = vrsqrt.pop %v1767
      %v1769 = vmul.f32 %v1761, %v1768
      %v1770 = vlaneseq
      %v1771 = vshrl.u32 %v1770, 7
      %v1772 = vsub.s32 4, %v1771
      %v1773 = vrot.slane %v1016, %v1772
      %v1774 = vmul.f32 %v1769, %v1773
      %v1775 = vlaneseq
      %v1776 = vshrl.u32 %v1775, 7
      %v1777 = vsub.s32 5, %v1776
      %v1778 = vrot.slane %v1016, %v1777
      %v1779 = vadd.f32 %v1774, %v1778
      %v1780 = vmul.f32 %v1779, %v1569
      %v1781 = vld [vmem:[%s15] sm:$0x3f]
      %v1782 = vld [vmem:[%s13] sm:$0xf]
      %v1783 = vld [vmem:[%s13 + $0x4] sm:$0xf]
      %v1784 = vld [vmem:[%s13 + $0x8] sm:$0xf]
      %v1785 = vld [vmem:[%s13 + $0xc] sm:$0xf]
      %v1786 = vld [vmem:[%s13 + $0x10] sm:$0xf]
      %v1787 = vld [vmem:[%s13 + $0x14] sm:$0xf]
      %v1788 = vld [vmem:[%s13 + $0x18] sm:$0xf]
      %v1789 = vld [vmem:[%s13 + $0x1c] sm:$0xf]
      %v1790 = vld [vmem:[%s13 + $0x20] sm:$0xf]
      %v1791 = vld [vmem:[%s13 + $0x24] sm:$0xf]
      %v1792 = vld [vmem:[%s13 + $0x28] sm:$0xf]
      %v1793 = vld [vmem:[%s13 + $0x2c] sm:$0xf]
      %v1794 = vrot.slane %v1780, 7
      %v1795 = vsel %vm1578, %v1794, 0.0
      %v1796 = vrot.slane %v1780, 1
      %v1797 = vsel %vm1584, %v1796, 0.0
      %1799 = vrot.lane.b32.xlu0 %v1780, 32
      %v1800 = vpop.permute.xlu0 %1799
      %1803 = vrot.lane.b32.xlu0 %v1797, 64
      %v1804 = vpop.permute.xlu0 %1803
      %v1806 = vsel %vm1087, %v1795, %v1800
      %v1807 = vsel %vm1174, %v1806, %v1804
      %v1808 = vpack.c.bf16 %v1807, %v1807
      %v1809 = vlaneseq
      %v1810 = vshrl.u32 %v1809, 7
      %v1811 = vsub.s32 0, %v1810
      %v1812 = vrot.slane %v1781, %v1811
      %v1825 = vunpack.c.l.b16 %v1782
      %v1826 = vunpack.c.l.b16 %v1783
      %v1827 = vunpack.c.l.b16 %v1784
      %v1828 = vunpack.c.l.b16 %v1785
      %v1829 = vunpack.c.l.b16 %v1786
      %v1830 = vunpack.c.l.b16 %v1787
      %v1831 = vunpack.c.l.b16 %v1788
      %v1832 = vunpack.c.l.b16 %v1789
      %v1833 = vunpack.c.l.b16 %v1790
      %v1834 = vunpack.c.l.b16 %v1791
      %v1835 = vunpack.c.l.b16 %v1792
      %v1836 = vunpack.c.l.b16 %v1793
      %v1837 = vpack.c.b16 %v1826, %v1825
      %v1838 = vpack.c.b16 %v1828, %v1827
      %v1839 = vpack.c.b16 %v1830, %v1829
      %v1840 = vpack.c.b16 %v1832, %v1831
      %v1841 = vpack.c.b16 %v1834, %v1833
      %v1842 = vpack.c.b16 %v1836, %v1835
      %v1850 = vsel %vm1639, %v1808, 0
      %1852 = vmatprep.subr.bf16.mxu0 0
      %1853 = vmatpush1.bf16.msra.mxu0 %v1837
      %1854 = vmatprep.subr.bf16.mxu0 0
      %1855 = vmatpush1.bf16.msra.mxu0 %v1838
      %1856 = vmatprep.subr.bf16.mxu0 0
      %1857 = vmatpush1.bf16.msra.mxu0 %v1839
      %1858 = vmatprep.subr.bf16.mxu0 0
      %1859 = vmatpush1.bf16.msra.mxu0 %v1840
      %1860 = vmatprep.subr.bf16.mxu0 0
      %1861 = vmatpush1.bf16.msra.mxu0 %v1841
      %1862 = vmatprep.subr.bf16.mxu0 0
      %1863 = vmatpush1.bf16.msra.mxu0 %v1842
      %1864 = vmatprep.subr.bf16.mxu0 0
      %1865 = vmatpush1.bf16.msra.mxu0 0
      %1866 = vmatprep.subr.bf16.mxu0 0
      %1867 = vmatpush1.bf16.msra.mxu0 0
      %1868 = vmatprep.subr.bf16.mxu0 0
      %1869 = vmatpush1.bf16.msra.mxu0 0
      %1870 = vmatprep.subr.bf16.mxu0 0
      %1871 = vmatpush1.bf16.msra.mxu0 0
      %1872 = vmatprep.subr.bf16.mxu0 0
      %1873 = vmatpush1.bf16.msra.mxu0 0
      %1874 = vmatprep.subr.bf16.mxu0 0
      %1875 = vmatpush1.bf16.msra.mxu0 0
      %1876 = vmatprep.subr.bf16.mxu0 0
      %1877 = vmatpush1.bf16.msra.mxu0 0
      %1878 = vmatprep.subr.bf16.mxu0 0
      %1879 = vmatpush1.bf16.msra.mxu0 0
      %1880 = vmatprep.subr.bf16.mxu0 0
      %1881 = vmatpush1.bf16.msra.mxu0 0
      %1882 = vmatprep.subr.bf16.mxu0 0
      %1883 = vmatpush1.bf16.msra.mxu0 0
      %1884 = vmatprep.mubr.bf16.mxu0 0
      %1885 = vmatmul.mubr.bf16.gmra.mrb[0].mxu0 %v1850
      %v1886 = vpop.f32.mrb[0].mxu0
      %v1887 = vadd.f32 %v1812, %v1886
      %v1888 = vpop.f32.mrb[0].mxu0
      %v1889 = vpop.f32.mrb[0].mxu0
      %v1890 = vpop.f32.mrb[0].mxu0
      %1891 = vdwg.mxu0
      %v1892 = vmax.f32 %v1887, 0.0
      %v1893 = vsel %vm1087, %v1892, 0.0
      %1894 = vadd.xlane.f32.xlu0 %v1893
      %v1895 = vpop.xlane.xlu0 %1894
      %v1896 = vmul.f32 %v1895, %v1545
      %v1897 = vsub.f32 %v1892, %v1896
      %v1898 = vmul.f32 %v1897, %v1897
      %v1899 = vsel %vm1087, %v1898, 0.0
      %1900 = vadd.xlane.f32.xlu0 %v1899
      %v1901 = vpop.xlane.xlu0 %1900
      %v1902 = vmul.f32 %v1901, %v1545
      %v1903 = vadd.f32 %v1902, 1e-05
      %v1904 = vrsqrt.pop %v1903
      %v1905 = vmul.f32 %v1897, %v1904
      %v1906 = vlaneseq
      %v1907 = vshrl.u32 %v1906, 7
      %v1908 = vsub.s32 1, %v1907
      %v1909 = vrot.slane %v1781, %v1908
      %v1910 = vmul.f32 %v1905, %v1909
      %v1911 = vlaneseq
      %v1912 = vshrl.u32 %v1911, 7
      %v1913 = vsub.s32 2, %v1912
      %v1914 = vrot.slane %v1781, %v1913
      %v1915 = vadd.f32 %v1910, %v1914
      %v1916 = vld [vmem:[%s14] sm:$0xf]
      %v1917 = vld [vmem:[%s14 + $0x4] sm:$0xf]
      %v1918 = vld [vmem:[%s14 + $0x8] sm:$0xf]
      %v1919 = vld [vmem:[%s14 + $0xc] sm:$0xf]
      %v1920 = vld [vmem:[%s14 + $0x10] sm:$0xf]
      %v1921 = vld [vmem:[%s14 + $0x14] sm:$0xf]
      %v1922 = vld [vmem:[%s14 + $0x18] sm:$0xf]
      %v1923 = vld [vmem:[%s14 + $0x1c] sm:$0xf]
      %v1924 = vld [vmem:[%s14 + $0x20] sm:$0xf]
      %v1925 = vld [vmem:[%s14 + $0x24] sm:$0xf]
      %v1926 = vld [vmem:[%s14 + $0x28] sm:$0xf]
      %v1927 = vld [vmem:[%s14 + $0x2c] sm:$0xf]
      %v1928 = vrot.slane %v1915, 7
      %v1929 = vsel %vm1578, %v1928, 0.0
      %v1930 = vrot.slane %v1915, 1
      %v1931 = vsel %vm1584, %v1930, 0.0
      %1933 = vrot.lane.b32.xlu0 %v1915, 32
      %v1934 = vpop.permute.xlu0 %1933
      %1937 = vrot.lane.b32.xlu0 %v1931, 64
      %v1938 = vpop.permute.xlu0 %1937
      %v1940 = vsel %vm1087, %v1929, %v1934
      %v1941 = vsel %vm1174, %v1940, %v1938
      %v1942 = vpack.c.bf16 %v1941, %v1941
      %v1943 = vlaneseq
      %v1944 = vshrl.u32 %v1943, 7
      %v1945 = vsub.s32 3, %v1944
      %v1946 = vrot.slane %v1781, %v1945
      %v1959 = vunpack.c.l.b16 %v1916
      %v1960 = vunpack.c.l.b16 %v1917
      %v1961 = vunpack.c.l.b16 %v1918
      %v1962 = vunpack.c.l.b16 %v1919
      %v1963 = vunpack.c.l.b16 %v1920
      %v1964 = vunpack.c.l.b16 %v1921
      %v1965 = vunpack.c.l.b16 %v1922
      %v1966 = vunpack.c.l.b16 %v1923
      %v1967 = vunpack.c.l.b16 %v1924
      %v1968 = vunpack.c.l.b16 %v1925
      %v1969 = vunpack.c.l.b16 %v1926
      %v1970 = vunpack.c.l.b16 %v1927
      %v1971 = vpack.c.b16 %v1960, %v1959
      %v1972 = vpack.c.b16 %v1962, %v1961
      %v1973 = vpack.c.b16 %v1964, %v1963
      %v1974 = vpack.c.b16 %v1966, %v1965
      %v1975 = vpack.c.b16 %v1968, %v1967
      %v1976 = vpack.c.b16 %v1970, %v1969
      %v1984 = vsel %vm1639, %v1942, 0
      %1986 = vmatprep.subr.bf16.mxu0 0
      %1987 = vmatpush1.bf16.msra.mxu0 %v1971
      %1988 = vmatprep.subr.bf16.mxu0 0
      %1989 = vmatpush1.bf16.msra.mxu0 %v1972
      %1990 = vmatprep.subr.bf16.mxu0 0
      %1991 = vmatpush1.bf16.msra.mxu0 %v1973
      %1992 = vmatprep.subr.bf16.mxu0 0
      %1993 = vmatpush1.bf16.msra.mxu0 %v1974
      %1994 = vmatprep.subr.bf16.mxu0 0
      %1995 = vmatpush1.bf16.msra.mxu0 %v1975
      %1996 = vmatprep.subr.bf16.mxu0 0
      %1997 = vmatpush1.bf16.msra.mxu0 %v1976
      %1998 = vmatprep.subr.bf16.mxu0 0
      %1999 = vmatpush1.bf16.msra.mxu0 0
      %2000 = vmatprep.subr.bf16.mxu0 0
      %2001 = vmatpush1.bf16.msra.mxu0 0
      %2002 = vmatprep.subr.bf16.mxu0 0
      %2003 = vmatpush1.bf16.msra.mxu0 0
      %2004 = vmatprep.subr.bf16.mxu0 0
      %2005 = vmatpush1.bf16.msra.mxu0 0
      %2006 = vmatprep.subr.bf16.mxu0 0
      %2007 = vmatpush1.bf16.msra.mxu0 0
      %2008 = vmatprep.subr.bf16.mxu0 0
      %2009 = vmatpush1.bf16.msra.mxu0 0
      %2010 = vmatprep.subr.bf16.mxu0 0
      %2011 = vmatpush1.bf16.msra.mxu0 0
      %2012 = vmatprep.subr.bf16.mxu0 0
      %2013 = vmatpush1.bf16.msra.mxu0 0
      %2014 = vmatprep.subr.bf16.mxu0 0
      %2015 = vmatpush1.bf16.msra.mxu0 0
      %2016 = vmatprep.subr.bf16.mxu0 0
      %2017 = vmatpush1.bf16.msra.mxu0 0
      %2018 = vmatprep.mubr.bf16.mxu0 0
      %2019 = vmatmul.mubr.bf16.gmra.mrb[0].mxu0 %v1984
      %v2020 = vpop.f32.mrb[0].mxu0
      %v2021 = vadd.f32 %v1946, %v2020
      %v2022 = vpop.f32.mrb[0].mxu0
      %v2023 = vpop.f32.mrb[0].mxu0
      %v2024 = vpop.f32.mrb[0].mxu0
      %2025 = vdwg.mxu0
      %v2026 = vmax.f32 %v2021, 0.0
      %v2027 = vsel %vm1087, %v2026, 0.0
      %2028 = vadd.xlane.f32.xlu0 %v2027
      %v2029 = vpop.xlane.xlu0 %2028
      %v2030 = vmul.f32 %v2029, %v1545
      %v2031 = vsub.f32 %v2026, %v2030
      %v2032 = vmul.f32 %v2031, %v2031
      %v2033 = vsel %vm1087, %v2032, 0.0
      %2034 = vadd.xlane.f32.xlu0 %v2033
      %v2035 = vpop.xlane.xlu0 %2034
      %v2036 = vmul.f32 %v2035, %v1545
      %v2037 = vadd.f32 %v2036, 1e-05
      %v2038 = vrsqrt.pop %v2037
      %v2039 = vmul.f32 %v2031, %v2038
      %v2040 = vlaneseq
      %v2041 = vshrl.u32 %v2040, 7
      %v2042 = vsub.s32 4, %v2041
      %v2043 = vrot.slane %v1781, %v2042
      %v2044 = vmul.f32 %v2039, %v2043
      %v2045 = vlaneseq
      %v2046 = vshrl.u32 %v2045, 7
      %v2047 = vsub.s32 5, %v2046
      %v2048 = vrot.slane %v1781, %v2047
      %v2049 = vadd.f32 %v2044, %v2048
      %v2050 = vpack.c.bf16 %v2049, %v2049
      %v2051 = vld [vmem:[%s16] sm:$0xf]
      %v2052 = vld [vmem:[%s16 + $0x4] sm:$0xf]
      %v2053 = vld [vmem:[%s16 + $0x8] sm:$0xf]
      %v2054 = vld [vmem:[%s16 + $0xc] sm:$0xf]
      %v2055 = vld [vmem:[%s17] sm:$0x1]
      %v2057 = vlaneseq
      %v2058 = vshrl.u32 %v2057, 7
      %v2059 = vsub.s32 0, %v2058
      %v2060 = vrot.slane %v2055, %v2059
      %v2066 = vunpack.c.l.b16 %v2051
      %v2067 = vunpack.c.l.b16 %v2052
      %v2068 = vunpack.c.l.b16 %v2053
      %v2069 = vunpack.c.l.b16 %v2054
      %v2070 = vpack.c.b16 %v2067, %v2066
      %v2071 = vpack.c.b16 %v2069, %v2068
      %v2075 = vsel %vm1087, %v2050, 0
      %2077 = vmatprep.subr.bf16.mxu0 0
      %2078 = vmatpush1.bf16.msra.mxu0 %v2070
      %2079 = vmatprep.subr.bf16.mxu0 0
      %2080 = vmatpush1.bf16.msra.mxu0 %v2071
      %2081 = vmatprep.subr.bf16.mxu0 0
      %2082 = vmatpush1.bf16.msra.mxu0 0
      %2083 = vmatprep.subr.bf16.mxu0 0
      %2084 = vmatpush1.bf16.msra.mxu0 0
      %2085 = vmatprep.subr.bf16.mxu0 0
      %2086 = vmatpush1.bf16.msra.mxu0 0
      %2087 = vmatprep.subr.bf16.mxu0 0
      %2088 = vmatpush1.bf16.msra.mxu0 0
      %2089 = vmatprep.subr.bf16.mxu0 0
      %2090 = vmatpush1.bf16.msra.mxu0 0
      %2091 = vmatprep.subr.bf16.mxu0 0
      %2092 = vmatpush1.bf16.msra.mxu0 0
      %2093 = vmatprep.subr.bf16.mxu0 0
      %2094 = vmatpush1.bf16.msra.mxu0 0
      %2095 = vmatprep.subr.bf16.mxu0 0
      %2096 = vmatpush1.bf16.msra.mxu0 0
      %2097 = vmatprep.subr.bf16.mxu0 0
      %2098 = vmatpush1.bf16.msra.mxu0 0
      %2099 = vmatprep.subr.bf16.mxu0 0
      %2100 = vmatpush1.bf16.msra.mxu0 0
      %2101 = vmatprep.subr.bf16.mxu0 0
      %2102 = vmatpush1.bf16.msra.mxu0 0
      %2103 = vmatprep.subr.bf16.mxu0 0
      %2104 = vmatpush1.bf16.msra.mxu0 0
      %2105 = vmatprep.subr.bf16.mxu0 0
      %2106 = vmatpush1.bf16.msra.mxu0 0
      %2107 = vmatprep.subr.bf16.mxu0 0
      %2108 = vmatpush1.bf16.msra.mxu0 0
      %2109 = vmatprep.mubr.bf16.mxu0 0
      %2110 = vmatmul.mubr.bf16.gmra.mrb[0].mxu0 %v2075
      %v2111 = vpop.f32.mrb[0].mxu0
      %v2112 = vadd.f32 %v2060, %v2111
      %v2113 = vpop.f32.mrb[0].mxu0
      %v2114 = vpop.f32.mrb[0].mxu0
      %v2115 = vpop.f32.mrb[0].mxu0
      %2116 = vdwg.mxu0
      %v2117 = vmul.f32 %v2112, %v1569
      %2118 = vst [vmem:[%s721] sm:$0xff] %v2117
      %v2119 = vld [vmem:[%s707] sm:$0xff]
      %v2120 = vld [vmem:[%s707 + $0x8] sm:$0xff]
      %v2121 = vld [vmem:[%s712] sm:$0xff]
      %v2122 = vld [vmem:[%s712 + $0x8] sm:$0xff]
      %vm2123 = vcmp.ne.s32.totalorder %v2121, 0
      %vm2124 = vcmp.ne.s32.totalorder %v2122, 0
      %v2125 = vsel %vm2123, 1, 0
      %v2126 = vsel %vm2124, 1, 0
      %v2127 = vcvt.s32.f32 %v2125
      %v2128 = vcvt.s32.f32 %v2126
      %2129 = vset.pattern.permute.xlu0 0
      %2130 = vperm.xlu0 %2129, %v2119
      %v2131 = vpop.permute.xlu0 %2130
      %2132 = vset.pattern.permute.xlu0 0
      %2133 = vperm.xlu0 %2132, %v2120
      %v2134 = vpop.permute.xlu0 %2133
      %vm2135 = vcmp.eq.s32.totalorder %v2131, %v729
      %vm2136 = vcmp.eq.s32.totalorder %v2134, %v729
      %v2137 = vsel %vm2135, 1, 0
      %v2138 = vsel %vm2136, 1, 0
      %v2139 = vcvt.s32.f32 %v2137
      %v2140 = vcvt.s32.f32 %v2138
      %v2142 = vsel %vm1223, %v2139, 0
      %v2145 = vsel %vm1223, %v2140, 0
      %2147 = vmatprep.subr.mxu0 0.0
      %2148 = vmatpush1.msra.mxu0 %v1780
      %2149 = vmatprep.subr.mxu0 0.0
      %2150 = vmatpush1.msra.mxu0 0.0
      %2151 = vmatprep.subr.mxu0 0.0
      %2152 = vmatpush1.msra.mxu0 0.0
      %2153 = vmatprep.subr.mxu0 0.0
      %2154 = vmatpush1.msra.mxu0 0.0
      %2155 = vmatprep.subr.mxu0 0.0
      %2156 = vmatpush1.msra.mxu0 0.0
      %2157 = vmatprep.subr.mxu0 0.0
      %2158 = vmatpush1.msra.mxu0 0.0
      %2159 = vmatprep.subr.mxu0 0.0
      %2160 = vmatpush1.msra.mxu0 0.0
      %2161 = vmatprep.subr.mxu0 0.0
      %2162 = vmatpush1.msra.mxu0 0.0
      %2163 = vmatprep.subr.mxu0 0.0
      %2164 = vmatpush1.msra.mxu0 0.0
      %2165 = vmatprep.subr.mxu0 0.0
      %2166 = vmatpush1.msra.mxu0 0.0
      %2167 = vmatprep.subr.mxu0 0.0
      %2168 = vmatpush1.msra.mxu0 0.0
      %2169 = vmatprep.subr.mxu0 0.0
      %2170 = vmatpush1.msra.mxu0 0.0
      %2171 = vmatprep.subr.mxu0 0.0
      %2172 = vmatpush1.msra.mxu0 0.0
      %2173 = vmatprep.subr.mxu0 0.0
      %2174 = vmatpush1.msra.mxu0 0.0
      %2175 = vmatprep.subr.mxu0 0.0
      %2176 = vmatpush1.msra.mxu0 0.0
      %2177 = vmatprep.subr.mxu0 0.0
      %2178 = vmatpush1.msra.mxu0 0.0
      %2179 = vmatprep.subr.mxu0 0.0
      %2180 = vmatpush1.msra.mxu0 0.0
      %2181 = vmatprep.subr.mxu0 0.0
      %2182 = vmatpush1.msra.mxu0 0.0
      %2183 = vmatprep.subr.mxu0 0.0
      %2184 = vmatpush1.msra.mxu0 0.0
      %2185 = vmatprep.subr.mxu0 0.0
      %2186 = vmatpush1.msra.mxu0 0.0
      %2187 = vmatprep.subr.mxu0 0.0
      %2188 = vmatpush1.msra.mxu0 0.0
      %2189 = vmatprep.subr.mxu0 0.0
      %2190 = vmatpush1.msra.mxu0 0.0
      %2191 = vmatprep.subr.mxu0 0.0
      %2192 = vmatpush1.msra.mxu0 0.0
      %2193 = vmatprep.subr.mxu0 0.0
      %2194 = vmatpush1.msra.mxu0 0.0
      %2195 = vmatprep.subr.mxu0 0.0
      %2196 = vmatpush1.msra.mxu0 0.0
      %2197 = vmatprep.subr.mxu0 0.0
      %2198 = vmatpush1.msra.mxu0 0.0
      %2199 = vmatprep.subr.mxu0 0.0
      %2200 = vmatpush1.msra.mxu0 0.0
      %2201 = vmatprep.subr.mxu0 0.0
      %2202 = vmatpush1.msra.mxu0 0.0
      %2203 = vmatprep.subr.mxu0 0.0
      %2204 = vmatpush1.msra.mxu0 0.0
      %2205 = vmatprep.subr.mxu0 0.0
      %2206 = vmatpush1.msra.mxu0 0.0
      %2207 = vmatprep.subr.mxu0 0.0
      %2208 = vmatpush1.msra.mxu0 0.0
      %2209 = vmatprep.subr.mxu0 0.0
      %2210 = vmatpush1.msra.mxu0 0.0
      %2211 = vmatprep.mubr.f32.mxu0 0.0
      %2212 = vmatmul.mubr.f32.gmra.mrb[0].mxu0 %v2142
      %v2213 = vpop.f32.mrb[0].mxu0
      %v2214 = vadd.f32 0.0, %v2213
      %v2215 = vpop.f32.mrb[0].mxu0
      %2216 = vmatprep.mubr.f32.mxu0 0.0
      %2217 = vmatmul.mubr.f32.gmra.mrb[0].mxu0 %v2145
      %v2218 = vpop.f32.mrb[0].mxu0
      %v2219 = vadd.f32 0.0, %v2218
      %v2220 = vpop.f32.mrb[0].mxu0
      %2221 = vdwg.mxu0
      %2223 = vset.pattern.permute.xlu0 0
      %2224 = vperm.xlu0 %2223, %v2127
      %v2225 = vpop.permute.xlu0 %2224
      %2228 = vset.pattern.permute.xlu0 0
      %2229 = vperm.xlu0 %2228, %v2128
      %v2230 = vpop.permute.xlu0 %2229
      %v2232 = vmul.f32 %v2214, %v2225
      %v2233 = vmul.f32 %v2219, %v2230
      %2234 = vset.pattern.permute.xlu0 0
      %2235 = vperm.xlu0 %2234, %v2121
      %v2236 = vpop.permute.xlu0 %2235
      %2237 = vset.pattern.permute.xlu0 0
      %2238 = vperm.xlu0 %2237, %v2122
      %v2239 = vpop.permute.xlu0 %2238
      %vm2240 = vcmp.eq.s32.totalorder %v2236, %v729
      %vm2241 = vcmp.eq.s32.totalorder %v2239, %v729
      %v2242 = vsel %vm2240, 1, 0
      %v2243 = vsel %vm2241, 1, 0
      %v2244 = vcvt.s32.f32 %v2242
      %v2245 = vcvt.s32.f32 %v2243
      %v2247 = vsel %vm753, %v2244, 0
      %v2250 = vsel %vm753, %v2245, 0
      %2252 = vmatprep.subr.mxu0 0.0
      %2253 = vmatpush1.msra.mxu0 %v723
      %2254 = vmatprep.subr.mxu0 0.0
      %2255 = vmatpush1.msra.mxu0 %v724
      %2256 = vmatprep.subr.mxu0 0.0
      %2257 = vmatpush1.msra.mxu0 %v759
      %2258 = vmatprep.subr.mxu0 0.0
      %2259 = vmatpush1.msra.mxu0 0.0
      %2260 = vmatprep.subr.mxu0 0.0
      %2261 = vmatpush1.msra.mxu0 0.0
      %2262 = vmatprep.subr.mxu0 0.0
      %2263 = vmatpush1.msra.mxu0 0.0
      %2264 = vmatprep.subr.mxu0 0.0
      %2265 = vmatpush1.msra.mxu0 0.0
      %2266 = vmatprep.subr.mxu0 0.0
      %2267 = vmatpush1.msra.mxu0 0.0
      %2268 = vmatprep.subr.mxu0 0.0
      %2269 = vmatpush1.msra.mxu0 0.0
      %2270 = vmatprep.subr.mxu0 0.0
      %2271 = vmatpush1.msra.mxu0 0.0
      %2272 = vmatprep.subr.mxu0 0.0
      %2273 = vmatpush1.msra.mxu0 0.0
      %2274 = vmatprep.subr.mxu0 0.0
      %2275 = vmatpush1.msra.mxu0 0.0
      %2276 = vmatprep.subr.mxu0 0.0
      %2277 = vmatpush1.msra.mxu0 0.0
      %2278 = vmatprep.subr.mxu0 0.0
      %2279 = vmatpush1.msra.mxu0 0.0
      %2280 = vmatprep.subr.mxu0 0.0
      %2281 = vmatpush1.msra.mxu0 0.0
      %2282 = vmatprep.subr.mxu0 0.0
      %2283 = vmatpush1.msra.mxu0 0.0
      %2284 = vmatprep.subr.mxu0 0.0
      %2285 = vmatpush1.msra.mxu0 0.0
      %2286 = vmatprep.subr.mxu0 0.0
      %2287 = vmatpush1.msra.mxu0 0.0
      %2288 = vmatprep.subr.mxu0 0.0
      %2289 = vmatpush1.msra.mxu0 0.0
      %2290 = vmatprep.subr.mxu0 0.0
      %2291 = vmatpush1.msra.mxu0 0.0
      %2292 = vmatprep.subr.mxu0 0.0
      %2293 = vmatpush1.msra.mxu0 0.0
      %2294 = vmatprep.subr.mxu0 0.0
      %2295 = vmatpush1.msra.mxu0 0.0
      %2296 = vmatprep.subr.mxu0 0.0
      %2297 = vmatpush1.msra.mxu0 0.0
      %2298 = vmatprep.subr.mxu0 0.0
      %2299 = vmatpush1.msra.mxu0 0.0
      %2300 = vmatprep.subr.mxu0 0.0
      %2301 = vmatpush1.msra.mxu0 0.0
      %2302 = vmatprep.subr.mxu0 0.0
      %2303 = vmatpush1.msra.mxu0 0.0
      %2304 = vmatprep.subr.mxu0 0.0
      %2305 = vmatpush1.msra.mxu0 0.0
      %2306 = vmatprep.subr.mxu0 0.0
      %2307 = vmatpush1.msra.mxu0 0.0
      %2308 = vmatprep.subr.mxu0 0.0
      %2309 = vmatpush1.msra.mxu0 0.0
      %2310 = vmatprep.subr.mxu0 0.0
      %2311 = vmatpush1.msra.mxu0 0.0
      %2312 = vmatprep.subr.mxu0 0.0
      %2313 = vmatpush1.msra.mxu0 0.0
      %2314 = vmatprep.subr.mxu0 0.0
      %2315 = vmatpush1.msra.mxu0 0.0
      %2316 = vmatprep.mubr.f32.mxu0 0.0
      %2317 = vmatmul.mubr.f32.gmra.mrb[0].mxu0 %v2247
      %v2318 = vpop.f32.mrb[0].mxu0
      %v2319 = vadd.f32 0.0, %v2318
      %v2320 = vpop.f32.mrb[0].mxu0
      %2321 = vmatprep.mubr.f32.mxu0 0.0
      %2322 = vmatmul.mubr.f32.gmra.mrb[0].mxu0 %v2250
      %v2323 = vpop.f32.mrb[0].mxu0
      %v2324 = vadd.f32 0.0, %v2323
      %v2325 = vpop.f32.mrb[0].mxu0
      %2326 = vdwg.mxu0
      %v2327 = vadd.f32 %v2232, %v2319
      %v2328 = vadd.f32 %v2233, %v2324
      %v2329 = vsub.f32 %v2127, 1.0
      %v2330 = vsub.f32 %v2128, 1.0
      %v2332 = vsel %vm913, %v2329, 0
      %v2335 = vsel %vm913, %v2330, 0
      %2337 = vmatprep.subr.mxu0 0.0
      %2338 = vmatpush1.xpose.msra.mxu0 %v2332
      %2339 = vmatprep.subr.mxu0 0.0
      %2340 = vmatpush1.xpose.msra.mxu0 %v2335
      %2341 = vmatprep.subr.mxu0 0.0
      %2342 = vmatpush1.xpose.msra.mxu0 0.0
      %2343 = vmatprep.subr.mxu0 0.0
      %2344 = vmatpush1.xpose.msra.mxu0 0.0
      %2345 = vmatprep.subr.mxu0 0.0
      %2346 = vmatpush1.xpose.msra.mxu0 0.0
      %2347 = vmatprep.subr.mxu0 0.0
      %2348 = vmatpush1.xpose.msra.mxu0 0.0
      %2349 = vmatprep.subr.mxu0 0.0
      %2350 = vmatpush1.xpose.msra.mxu0 0.0
      %2351 = vmatprep.subr.mxu0 0.0
      %2352 = vmatpush1.xpose.msra.mxu0 0.0
      %2353 = vmatprep.subr.mxu0 0.0
      %2354 = vmatpush1.xpose.msra.mxu0 0.0
      %2355 = vmatprep.subr.mxu0 0.0
      %2356 = vmatpush1.xpose.msra.mxu0 0.0
      %2357 = vmatprep.subr.mxu0 0.0
      %2358 = vmatpush1.xpose.msra.mxu0 0.0
      %2359 = vmatprep.subr.mxu0 0.0
      %2360 = vmatpush1.xpose.msra.mxu0 0.0
      %2361 = vmatprep.subr.mxu0 0.0
      %2362 = vmatpush1.xpose.msra.mxu0 0.0
      %2363 = vmatprep.subr.mxu0 0.0
      %2364 = vmatpush1.xpose.msra.mxu0 0.0
      %2365 = vmatprep.subr.mxu0 0.0
      %2366 = vmatpush1.xpose.msra.mxu0 0.0
      %2367 = vmatprep.subr.mxu0 0.0
      %2368 = vmatpush1.xpose.msra.mxu0 0.0
      %2369 = vmatprep.subr.mxu0 0.0
      %2370 = vmatpush1.xpose.msra.mxu0 0.0
      %2371 = vmatprep.subr.mxu0 0.0
      %2372 = vmatpush1.xpose.msra.mxu0 0.0
      %2373 = vmatprep.subr.mxu0 0.0
      %2374 = vmatpush1.xpose.msra.mxu0 0.0
      %2375 = vmatprep.subr.mxu0 0.0
      %2376 = vmatpush1.xpose.msra.mxu0 0.0
      %2377 = vmatprep.subr.mxu0 0.0
      %2378 = vmatpush1.xpose.msra.mxu0 0.0
      %2379 = vmatprep.subr.mxu0 0.0
      %2380 = vmatpush1.xpose.msra.mxu0 0.0
      %2381 = vmatprep.subr.mxu0 0.0
      %2382 = vmatpush1.xpose.msra.mxu0 0.0
      %2383 = vmatprep.subr.mxu0 0.0
      %2384 = vmatpush1.xpose.msra.mxu0 0.0
      %2385 = vmatprep.subr.mxu0 0.0
      %2386 = vmatpush1.xpose.msra.mxu0 0.0
      %2387 = vmatprep.subr.mxu0 0.0
      %2388 = vmatpush1.xpose.msra.mxu0 0.0
      %2389 = vmatprep.subr.mxu0 0.0
      %2390 = vmatpush1.xpose.msra.mxu0 0.0
      %2391 = vmatprep.subr.mxu0 0.0
      %2392 = vmatpush1.xpose.msra.mxu0 0.0
      %2393 = vmatprep.subr.mxu0 0.0
      %2394 = vmatpush1.xpose.msra.mxu0 0.0
      %2395 = vmatprep.subr.mxu0 0.0
      %2396 = vmatpush1.xpose.msra.mxu0 0.0
      %2397 = vmatprep.subr.mxu0 0.0
      %2398 = vmatpush1.xpose.msra.mxu0 0.0
      %2399 = vmatprep.subr.mxu0 0.0
      %2400 = vmatpush1.xpose.msra.mxu0 0.0
      %2401 = vmatprep.mubr.f32.mxu0 0.0
      %2402 = vmatmul.mubr.f32.gmra.mrb[0].mxu0 %v915
      %v2403 = vpop.f32.mrb[0].mxu0
      %v2404 = vadd.f32 0.0, %v2403
      %v2405 = vpop.f32.mrb[0].mxu0
      %2406 = vmatprep.mubr.f32.mxu0 0.0
      %2407 = vmatmul.mubr.f32.gmra.mrb[0].mxu0 %v915
      %v2408 = vpop.f32.mrb[0].mxu0
      %v2409 = vadd.f32 0.0, %v2408
      %v2410 = vpop.f32.mrb[0].mxu0
      %2411 = vdwg.mxu0
      %v2412 = vmul.f32 %v2404, 1e+09
      %v2413 = vmul.f32 %v2409, 1e+09
      %s2414 = scalar_lea.vmem %s6, 48
      %v2415 = vld [vmem:[%s2414] sm:$0xff]
      %v2416 = vld [vmem:[%s2414 + $0x8] sm:$0xf]
      %v2417 = vld [vmem:[%s2414 + $0xc] sm:$0xff]
      %v2418 = vld [vmem:[%s2414 + $0x14] sm:$0xf]
      %v2419 = vld [vmem:[%s2414 + $0x18] sm:$0xff]
      %v2420 = vld [vmem:[%s2414 + $0x20] sm:$0xf]
      %v2421 = vld [vmem:[%s2414 + $0x24] sm:$0xff]
      %v2422 = vld [vmem:[%s2414 + $0x2c] sm:$0xf]
      %s2423 = scalar_lea.vmem %s7, 3
      %v2424 = vld [vmem:[%s2423] sm:$0x7]
      %s2425 = scalar_lea.vmem %s8, 64
      %v2426 = vld [vmem:[%s2425] sm:$0xf]
      %v2427 = vld [vmem:[%s2425 + $0x4] sm:$0xf]
      %v2428 = vld [vmem:[%s2425 + $0x8] sm:$0xf]
      %v2429 = vld [vmem:[%s2425 + $0xc] sm:$0xf]
      %v2430 = vld [vmem:[%s2425 + $0x10] sm:$0xf]
      %v2431 = vld [vmem:[%s2425 + $0x14] sm:$0xf]
      %v2432 = vld [vmem:[%s2425 + $0x18] sm:$0xf]
      %v2433 = vld [vmem:[%s2425 + $0x1c] sm:$0xf]
      %v2434 = vld [vmem:[%s2425 + $0x20] sm:$0xf]
      %v2435 = vld [vmem:[%s2425 + $0x24] sm:$0xf]
      %v2436 = vld [vmem:[%s2425 + $0x28] sm:$0xf]
      %v2437 = vld [vmem:[%s2425 + $0x2c] sm:$0xf]
      %v2438 = vld [vmem:[%s2425 + $0x30] sm:$0xf]
      %v2439 = vld [vmem:[%s2425 + $0x34] sm:$0xf]
      %v2440 = vld [vmem:[%s2425 + $0x38] sm:$0xf]
      %v2441 = vld [vmem:[%s2425 + $0x3c] sm:$0xf]
      %s2442 = scalar_lea.vmem %s9, 8
      %v2443 = vld [vmem:[%s2442] sm:$0x3f]
      %s2444 = scalar_lea.vmem %s10, 48
      %v2445 = vld [vmem:[%s2444] sm:$0xf]
      %v2446 = vld [vmem:[%s2444 + $0x4] sm:$0xf]
      %v2447 = vld [vmem:[%s2444 + $0x8] sm:$0xf]
      %v2448 = vld [vmem:[%s2444 + $0xc] sm:$0xf]
      %v2449 = vld [vmem:[%s2444 + $0x10] sm:$0xf]
      %v2450 = vld [vmem:[%s2444 + $0x14] sm:$0xf]
      %v2451 = vld [vmem:[%s2444 + $0x18] sm:$0xf]
      %v2452 = vld [vmem:[%s2444 + $0x1c] sm:$0xf]
      %v2453 = vld [vmem:[%s2444 + $0x20] sm:$0xf]
      %v2454 = vld [vmem:[%s2444 + $0x24] sm:$0xf]
      %v2455 = vld [vmem:[%s2444 + $0x28] sm:$0xf]
      %v2456 = vld [vmem:[%s2444 + $0x2c] sm:$0xf]
      %s2457 = scalar_lea.vmem %s11, 1
      %v2458 = vld [vmem:[%s2457] sm:$0x1]
      %s2459 = scalar_lea.vmem %s12, 32
      %v2460 = vld [vmem:[%s2459] sm:$0xf]
      %v2461 = vld [vmem:[%s2459 + $0x4] sm:$0xf]
      %v2462 = vld [vmem:[%s2459 + $0x8] sm:$0xf]
      %v2463 = vld [vmem:[%s2459 + $0xc] sm:$0xf]
      %v2464 = vld [vmem:[%s2459 + $0x10] sm:$0xf]
      %v2465 = vld [vmem:[%s2459 + $0x14] sm:$0xf]
      %v2466 = vld [vmem:[%s2459 + $0x18] sm:$0xf]
      %v2467 = vld [vmem:[%s2459 + $0x1c] sm:$0xf]
      %v2468 = vpack.c.bf16 %v2328, %v2327
      %v2470 = vlaneseq
      %v2471 = vshrl.u32 %v2470, 7
      %v2472 = vsub.s32 0, %v2471
      %v2473 = vrot.slane %v2424, %v2472
      %v2474 = vlaneseq
      %v2475 = vshrl.u32 %v2474, 7
      %v2476 = vsub.s32 1, %v2475
      %v2477 = vrot.slane %v2424, %v2476
      %v2478 = vlaneseq
      %v2479 = vshrl.u32 %v2478, 7
      %v2480 = vsub.s32 2, %v2479
      %v2481 = vrot.slane %v2424, %v2480
      %v2493 = vunpack.c.l.b16 %v2415
      %v2494 = vunpack.c.h.b16 %v2415
      %v2495 = vunpack.c.l.b16 %v2416
      %v2496 = vunpack.c.l.b16 %v2417
      %v2497 = vunpack.c.h.b16 %v2417
      %v2498 = vunpack.c.l.b16 %v2418
      %v2499 = vunpack.c.l.b16 %v2419
      %v2500 = vunpack.c.h.b16 %v2419
      %v2501 = vunpack.c.l.b16 %v2420
      %v2502 = vunpack.c.l.b16 %v2421
      %v2503 = vunpack.c.h.b16 %v2421
      %v2504 = vunpack.c.l.b16 %v2422
      %v2505 = vpack.c.b16 %v2496, %v2493
      %v2506 = vpack.c.b16 %v2497, %v2494
      %v2507 = vpack.c.b16 %v2498, %v2495
      %v2508 = vpack.c.b16 %v2502, %v2499
      %v2509 = vpack.c.b16 %v2503, %v2500
      %v2510 = vpack.c.b16 %v2504, %v2501
      %v2518 = vsel %vm1087, %v2468, 0
      %2520 = vmatprep.subr.bf16.mxu0 %v2506
      %2521 = vmatpush1.bf16.msra.mxu0 %v2505
      %2522 = vmatprep.subr.bf16.mxu0 %v2509
      %2523 = vmatpush1.bf16.msra.mxu0 %v2508
      %2524 = vmatprep.subr.bf16.mxu0 0
      %2525 = vmatpush1.bf16.msra.mxu0 0
      %2526 = vmatprep.subr.bf16.mxu0 0
      %2527 = vmatpush1.bf16.msra.mxu0 0
      %2528 = vmatprep.subr.bf16.mxu0 0
      %2529 = vmatpush1.bf16.msra.mxu0 0
      %2530 = vmatprep.subr.bf16.mxu0 0
      %2531 = vmatpush1.bf16.msra.mxu0 0
      %2532 = vmatprep.subr.bf16.mxu0 0
      %2533 = vmatpush1.bf16.msra.mxu0 0
      %2534 = vmatprep.subr.bf16.mxu0 0
      %2535 = vmatpush1.bf16.msra.mxu0 0
      %2536 = vmatprep.subr.bf16.mxu0 0
      %2537 = vmatpush1.bf16.msra.mxu0 0
      %2538 = vmatprep.subr.bf16.mxu0 0
      %2539 = vmatpush1.bf16.msra.mxu0 0
      %2540 = vmatprep.subr.bf16.mxu0 0
      %2541 = vmatpush1.bf16.msra.mxu0 0
      %2542 = vmatprep.subr.bf16.mxu0 0
      %2543 = vmatpush1.bf16.msra.mxu0 0
      %2544 = vmatprep.subr.bf16.mxu0 0
      %2545 = vmatpush1.bf16.msra.mxu0 0
      %2546 = vmatprep.subr.bf16.mxu0 0
      %2547 = vmatpush1.bf16.msra.mxu0 0
      %2548 = vmatprep.subr.bf16.mxu0 0
      %2549 = vmatpush1.bf16.msra.mxu0 0
      %2550 = vmatprep.subr.bf16.mxu0 0
      %2551 = vmatpush1.bf16.msra.mxu0 0
      %2552 = vmatprep.mubr.bf16.mxu0 0
      %2553 = vmatmul.mubr.bf16.gmra.mrb[0].mxu0 %v2518
      %v2554 = vpop.f32.mrb[0].mxu0
      %v2555 = vadd.f32 %v2473, %v2554
      %v2556 = vpop.f32.mrb[0].mxu0
      %v2557 = vadd.f32 %v2477, %v2556
      %v2558 = vpop.f32.mrb[0].mxu0
      %v2559 = vadd.f32 %v2473, %v2558
      %v2560 = vpop.f32.mrb[0].mxu0
      %v2561 = vadd.f32 %v2477, %v2560
      %2562 = vdwg.mxu0
      %2563 = vmatprep.subr.bf16.mxu0 0
      %2564 = vmatpush1.bf16.msra.mxu0 %v2507
      %2565 = vmatprep.subr.bf16.mxu0 0
      %2566 = vmatpush1.bf16.msra.mxu0 %v2510
      %2567 = vmatprep.subr.bf16.mxu0 0
      %2568 = vmatpush1.bf16.msra.mxu0 0
      %2569 = vmatprep.subr.bf16.mxu0 0
      %2570 = vmatpush1.bf16.msra.mxu0 0
      %2571 = vmatprep.subr.bf16.mxu0 0
      %2572 = vmatpush1.bf16.msra.mxu0 0
      %2573 = vmatprep.subr.bf16.mxu0 0
      %2574 = vmatpush1.bf16.msra.mxu0 0
      %2575 = vmatprep.subr.bf16.mxu0 0
      %2576 = vmatpush1.bf16.msra.mxu0 0
      %2577 = vmatprep.subr.bf16.mxu0 0
      %2578 = vmatpush1.bf16.msra.mxu0 0
      %2579 = vmatprep.subr.bf16.mxu0 0
      %2580 = vmatpush1.bf16.msra.mxu0 0
      %2581 = vmatprep.subr.bf16.mxu0 0
      %2582 = vmatpush1.bf16.msra.mxu0 0
      %2583 = vmatprep.subr.bf16.mxu0 0
      %2584 = vmatpush1.bf16.msra.mxu0 0
      %2585 = vmatprep.subr.bf16.mxu0 0
      %2586 = vmatpush1.bf16.msra.mxu0 0
      %2587 = vmatprep.subr.bf16.mxu0 0
      %2588 = vmatpush1.bf16.msra.mxu0 0
      %2589 = vmatprep.subr.bf16.mxu0 0
      %2590 = vmatpush1.bf16.msra.mxu0 0
      %2591 = vmatprep.subr.bf16.mxu0 0
      %2592 = vmatpush1.bf16.msra.mxu0 0
      %2593 = vmatprep.subr.bf16.mxu0 0
      %2594 = vmatpush1.bf16.msra.mxu0 0
      %2595 = vmatprep.mubr.bf16.mxu0 0
      %2596 = vmatmul.mubr.bf16.gmra.mrb[0].mxu0 %v2518
      %v2597 = vpop.f32.mrb[0].mxu0
      %v2598 = vadd.f32 %v2481, %v2597
      %v2599 = vpop.f32.mrb[0].mxu0
      %v2600 = vpop.f32.mrb[0].mxu0
      %v2601 = vadd.f32 %v2481, %v2600
      %v2602 = vpop.f32.mrb[0].mxu0
      %2603 = vdwg.mxu0
      %v2604 = vpack.c.bf16 %v2559, %v2555
      %v2605 = vpack.c.bf16 %v2561, %v2557
      %v2607 = vsel %vm1174, %v2604, 0
      %v2610 = vsel %vm1174, %v2605, 0
      %2612 = vmatprep.subr.bf16.mxu0 0
      %2613 = vmatpush1.bf16.xpose.msra.mxu0 %v2610
      %2614 = vmatprep.subr.bf16.mxu0 0
      %2615 = vmatpush1.bf16.xpose.msra.mxu0 0
      %2616 = vmatprep.subr.bf16.mxu0 0
      %2617 = vmatpush1.bf16.xpose.msra.mxu0 0
      %2618 = vmatprep.subr.bf16.mxu0 0
      %2619 = vmatpush1.bf16.xpose.msra.mxu0 0
      %2620 = vmatprep.subr.bf16.mxu0 0
      %2621 = vmatpush1.bf16.xpose.msra.mxu0 0
      %2622 = vmatprep.subr.bf16.mxu0 0
      %2623 = vmatpush1.bf16.xpose.msra.mxu0 0
      %2624 = vmatprep.subr.bf16.mxu0 0
      %2625 = vmatpush1.bf16.xpose.msra.mxu0 0
      %2626 = vmatprep.subr.bf16.mxu0 0
      %2627 = vmatpush1.bf16.xpose.msra.mxu0 0
      %2628 = vmatprep.subr.bf16.mxu0 0
      %2629 = vmatpush1.bf16.xpose.msra.mxu0 0
      %2630 = vmatprep.subr.bf16.mxu0 0
      %2631 = vmatpush1.bf16.xpose.msra.mxu0 0
      %2632 = vmatprep.subr.bf16.mxu0 0
      %2633 = vmatpush1.bf16.xpose.msra.mxu0 0
      %2634 = vmatprep.subr.bf16.mxu0 0
      %2635 = vmatpush1.bf16.xpose.msra.mxu0 0
      %2636 = vmatprep.subr.bf16.mxu0 0
      %2637 = vmatpush1.bf16.xpose.msra.mxu0 0
      %2638 = vmatprep.subr.bf16.mxu0 0
      %2639 = vmatpush1.bf16.xpose.msra.mxu0 0
      %2640 = vmatprep.subr.bf16.mxu0 0
      %2641 = vmatpush1.bf16.xpose.msra.mxu0 0
      %2642 = vmatprep.subr.bf16.mxu0 0
      %2643 = vmatpush1.bf16.xpose.msra.mxu0 0
      %2644 = vmatprep.mubr.bf16.mxu0 0
      %2645 = vmatmul.mubr.bf16.gmra.mrb[0].mxu0 %v2607
      %v2646 = vpop.f32.mrb[0].mxu0
      %v2647 = vadd.f32 0.0, %v2646
      %v2648 = vpop.f32.mrb[0].mxu0
      %v2649 = vpop.f32.mrb[0].mxu0
      %v2650 = vadd.f32 0.0, %v2649
      %v2651 = vpop.f32.mrb[0].mxu0
      %2652 = vdwg.mxu0
      %v2653 = vmul.f32 %v2647, 0.125
      %v2654 = vmul.f32 %v2650, 0.125
      %v2655 = vadd.f32 %v2653, %v2412
      %v2656 = vadd.f32 %v2654, %v2413
      %vm2657 = vcmask 130048
      %v2658 = vsel %vm2657, %v2655, -inf
      %2659 = vmax.xlane.f32.xlu0 %v2658
      %v2660 = vpop.xlane.xlu0 %2659
      %v2661 = vsel %vm2657, %v2656, -inf
      %2662 = vmax.xlane.f32.xlu0 %v2661
      %v2663 = vpop.xlane.xlu0 %2662
      %v2664 = vsub.f32 %v2655, %v2660
      %v2665 = vsub.f32 %v2656, %v2663
      %v2666 = vmul.f32 %v2664, 1.442695
      %v2667 = vpow.pop %v2666
      %v2668 = vmul.f32 %v2665, 1.442695
      %v2669 = vpow.pop %v2668
      %v2670 = vsel %vm2657, %v2667, 0.0
      %2671 = vadd.xlane.f32.xlu0 %v2670
      %v2672 = vpop.xlane.xlu0 %2671
      %v2673 = vsel %vm2657, %v2669, 0.0
      %2674 = vadd.xlane.f32.xlu0 %v2673
      %v2675 = vpop.xlane.xlu0 %2674
      %v2676 = vrcp.pop %v2672
      %v2677 = vrcp.pop %v2675
      %v2678 = vmul.f32 %v2667, %v2676
      %v2679 = vmul.f32 %v2669, %v2677
      %v2680 = vpack.c.bf16 %v2679, %v2678
      %v2681 = vpack.c.bf16 %v2601, %v2598
      %v2683 = vsel %vm2657, %v2680, 0
      %2685 = vmatprep.subr.bf16.mxu0 0
      %2686 = vmatpush1.bf16.msra.mxu0 %v2681
      %2687 = vmatprep.subr.bf16.mxu0 0
      %2688 = vmatpush1.bf16.msra.mxu0 0
      %2689 = vmatprep.subr.bf16.mxu0 0
      %2690 = vmatpush1.bf16.msra.mxu0 0
      %2691 = vmatprep.subr.bf16.mxu0 0
      %2692 = vmatpush1.bf16.msra.mxu0 0
      %2693 = vmatprep.subr.bf16.mxu0 0
      %2694 = vmatpush1.bf16.msra.mxu0 0
      %2695 = vmatprep.subr.bf16.mxu0 0
      %2696 = vmatpush1.bf16.msra.mxu0 0
      %2697 = vmatprep.subr.bf16.mxu0 0
      %2698 = vmatpush1.bf16.msra.mxu0 0
      %2699 = vmatprep.subr.bf16.mxu0 0
      %2700 = vmatpush1.bf16.msra.mxu0 0
      %2701 = vmatprep.subr.bf16.mxu0 0
      %2702 = vmatpush1.bf16.msra.mxu0 0
      %2703 = vmatprep.subr.bf16.mxu0 0
      %2704 = vmatpush1.bf16.msra.mxu0 0
      %2705 = vmatprep.subr.bf16.mxu0 0
      %2706 = vmatpush1.bf16.msra.mxu0 0
      %2707 = vmatprep.subr.bf16.mxu0 0
      %2708 = vmatpush1.bf16.msra.mxu0 0
      %2709 = vmatprep.subr.bf16.mxu0 0
      %2710 = vmatpush1.bf16.msra.mxu0 0
      %2711 = vmatprep.subr.bf16.mxu0 0
      %2712 = vmatpush1.bf16.msra.mxu0 0
      %2713 = vmatprep.subr.bf16.mxu0 0
      %2714 = vmatpush1.bf16.msra.mxu0 0
      %2715 = vmatprep.subr.bf16.mxu0 0
      %2716 = vmatpush1.bf16.msra.mxu0 0
      %2717 = vmatprep.mubr.bf16.mxu0 0
      %2718 = vmatmul.mubr.bf16.gmra.mrb[0].mxu0 %v2683
      %v2719 = vpop.f32.mrb[0].mxu0
      %v2720 = vadd.f32 0.0, %v2719
      %v2721 = vpop.f32.mrb[0].mxu0
      %v2722 = vpop.f32.mrb[0].mxu0
      %v2723 = vadd.f32 0.0, %v2722
      %v2724 = vpop.f32.mrb[0].mxu0
      %2725 = vdwg.mxu0
      %v2726 = vpack.c.bf16 %v2723, %v2720
      %v2735 = vunpack.c.l.b16 %v2426
      %v2736 = vunpack.c.l.b16 %v2427
      %v2737 = vunpack.c.l.b16 %v2428
      %v2738 = vunpack.c.l.b16 %v2429
      %v2739 = vunpack.c.l.b16 %v2430
      %v2740 = vunpack.c.l.b16 %v2431
      %v2741 = vunpack.c.l.b16 %v2432
      %v2742 = vunpack.c.l.b16 %v2433
      %v2743 = vpack.c.b16 %v2736, %v2735
      %v2744 = vpack.c.b16 %v2738, %v2737
      %v2745 = vpack.c.b16 %v2740, %v2739
      %v2746 = vpack.c.b16 %v2742, %v2741
      %v2752 = vsel %vm1174, %v2726, 0
      %2754 = vmatprep.subr.bf16.mxu0 0
      %2755 = vmatpush1.bf16.msra.mxu0 %v2743
      %2756 = vmatprep.subr.bf16.mxu0 0
      %2757 = vmatpush1.bf16.msra.mxu0 %v2744
      %2758 = vmatprep.subr.bf16.mxu0 0
      %2759 = vmatpush1.bf16.msra.mxu0 %v2745
      %2760 = vmatprep.subr.bf16.mxu0 0
      %2761 = vmatpush1.bf16.msra.mxu0 %v2746
      %2762 = vmatprep.subr.bf16.mxu0 0
      %2763 = vmatpush1.bf16.msra.mxu0 0
      %2764 = vmatprep.subr.bf16.mxu0 0
      %2765 = vmatpush1.bf16.msra.mxu0 0
      %2766 = vmatprep.subr.bf16.mxu0 0
      %2767 = vmatpush1.bf16.msra.mxu0 0
      %2768 = vmatprep.subr.bf16.mxu0 0
      %2769 = vmatpush1.bf16.msra.mxu0 0
      %2770 = vmatprep.subr.bf16.mxu0 0
      %2771 = vmatpush1.bf16.msra.mxu0 0
      %2772 = vmatprep.subr.bf16.mxu0 0
      %2773 = vmatpush1.bf16.msra.mxu0 0
      %2774 = vmatprep.subr.bf16.mxu0 0
      %2775 = vmatpush1.bf16.msra.mxu0 0
      %2776 = vmatprep.subr.bf16.mxu0 0
      %2777 = vmatpush1.bf16.msra.mxu0 0
      %2778 = vmatprep.subr.bf16.mxu0 0
      %2779 = vmatpush1.bf16.msra.mxu0 0
      %2780 = vmatprep.subr.bf16.mxu0 0
      %2781 = vmatpush1.bf16.msra.mxu0 0
      %2782 = vmatprep.subr.bf16.mxu0 0
      %2783 = vmatpush1.bf16.msra.mxu0 0
      %2784 = vmatprep.subr.bf16.mxu0 0
      %2785 = vmatpush1.bf16.msra.mxu0 0
      %2786 = vmatprep.mubr.bf16.mxu0 0
      %2787 = vmatmul.mubr.bf16.gmra.mrb[0].mxu0 %v2752
      %v2788 = vpop.f32.mrb[0].mxu0
      %v2789 = vadd.f32 0.0, %v2788
      %v2790 = vpop.f32.mrb[0].mxu0
      %v2791 = vpop.f32.mrb[0].mxu0
      %v2792 = vadd.f32 0.0, %v2791
      %v2793 = vpop.f32.mrb[0].mxu0
      %2794 = vdwg.mxu0
      %v2795 = vlaneseq
      %v2796 = vshrl.u32 %v2795, 7
      %v2797 = vsub.s32 0, %v2796
      %v2798 = vrot.slane %v2443, %v2797
      %v2799 = vadd.f32 %v2798, %v2789
      %v2800 = vadd.f32 %v2798, %v2792
      %2802 = vrot.lane.b32.xlu0 %v2604, 64
      %v2803 = vpop.permute.xlu0 %2802
      %2805 = vrot.lane.b32.xlu0 %v2605, 64
      %v2806 = vpop.permute.xlu0 %2805
      %v2808 = vsel %vm1174, %v2803, 0
      %v2811 = vsel %vm1174, %v2806, 0
      %2813 = vmatprep.subr.bf16.mxu0 0
      %2814 = vmatpush1.bf16.xpose.msra.mxu0 %v2811
      %2815 = vmatprep.subr.bf16.mxu0 0
      %2816 = vmatpush1.bf16.xpose.msra.mxu0 0
      %2817 = vmatprep.subr.bf16.mxu0 0
      %2818 = vmatpush1.bf16.xpose.msra.mxu0 0
      %2819 = vmatprep.subr.bf16.mxu0 0
      %2820 = vmatpush1.bf16.xpose.msra.mxu0 0
      %2821 = vmatprep.subr.bf16.mxu0 0
      %2822 = vmatpush1.bf16.xpose.msra.mxu0 0
      %2823 = vmatprep.subr.bf16.mxu0 0
      %2824 = vmatpush1.bf16.xpose.msra.mxu0 0
      %2825 = vmatprep.subr.bf16.mxu0 0
      %2826 = vmatpush1.bf16.xpose.msra.mxu0 0
      %2827 = vmatprep.subr.bf16.mxu0 0
      %2828 = vmatpush1.bf16.xpose.msra.mxu0 0
      %2829 = vmatprep.subr.bf16.mxu0 0
      %2830 = vmatpush1.bf16.xpose.msra.mxu0 0
      %2831 = vmatprep.subr.bf16.mxu0 0
      %2832 = vmatpush1.bf16.xpose.msra.mxu0 0
      %2833 = vmatprep.subr.bf16.mxu0 0
      %2834 = vmatpush1.bf16.xpose.msra.mxu0 0
      %2835 = vmatprep.subr.bf16.mxu0 0
      %2836 = vmatpush1.bf16.xpose.msra.mxu0 0
      %2837 = vmatprep.subr.bf16.mxu0 0
      %2838 = vmatpush1.bf16.xpose.msra.mxu0 0
      %2839 = vmatprep.subr.bf16.mxu0 0
      %2840 = vmatpush1.bf16.xpose.msra.mxu0 0
      %2841 = vmatprep.subr.bf16.mxu0 0
      %2842 = vmatpush1.bf16.xpose.msra.mxu0 0
      %2843 = vmatprep.subr.bf16.mxu0 0
      %2844 = vmatpush1.bf16.xpose.msra.mxu0 0
      %2845 = vmatprep.mubr.bf16.mxu0 0
      %2846 = vmatmul.mubr.bf16.gmra.mrb[0].mxu0 %v2808
      %v2847 = vpop.f32.mrb[0].mxu0
      %v2848 = vadd.f32 0.0, %v2847
      %v2849 = vpop.f32.mrb[0].mxu0
      %v2850 = vpop.f32.mrb[0].mxu0
      %v2851 = vadd.f32 0.0, %v2850
      %v2852 = vpop.f32.mrb[0].mxu0
      %2853 = vdwg.mxu0
      %v2854 = vmul.f32 %v2848, 0.125
      %v2855 = vmul.f32 %v2851, 0.125
      %v2856 = vadd.f32 %v2854, %v2412
      %v2857 = vadd.f32 %v2855, %v2413
      %v2858 = vsel %vm2657, %v2856, -inf
      %2859 = vmax.xlane.f32.xlu0 %v2858
      %v2860 = vpop.xlane.xlu0 %2859
      %v2861 = vsel %vm2657, %v2857, -inf
      %2862 = vmax.xlane.f32.xlu0 %v2861
      %v2863 = vpop.xlane.xlu0 %2862
      %v2864 = vsub.f32 %v2856, %v2860
      %v2865 = vsub.f32 %v2857, %v2863
      %v2866 = vmul.f32 %v2864, 1.442695
      %v2867 = vpow.pop %v2866
      %v2868 = vmul.f32 %v2865, 1.442695
      %v2869 = vpow.pop %v2868
      %v2870 = vsel %vm2657, %v2867, 0.0
      %2871 = vadd.xlane.f32.xlu0 %v2870
      %v2872 = vpop.xlane.xlu0 %2871
      %v2873 = vsel %vm2657, %v2869, 0.0
      %2874 = vadd.xlane.f32.xlu0 %v2873
      %v2875 = vpop.xlane.xlu0 %2874
      %v2876 = vrcp.pop %v2872
      %v2877 = vrcp.pop %v2875
      %v2878 = vmul.f32 %v2867, %v2876
      %v2879 = vmul.f32 %v2869, %v2877
      %v2880 = vpack.c.bf16 %v2879, %v2878
      %2882 = vrot.lane.b32.xlu0 %v2681, 64
      %v2883 = vpop.permute.xlu0 %2882
      %v2886 = vsel %vm2657, %v2880, 0
      %2888 = vmatprep.subr.bf16.mxu0 0
      %2889 = vmatpush1.bf16.msra.mxu0 %v2883
      %2890 = vmatprep.subr.bf16.mxu0 0
      %2891 = vmatpush1.bf16.msra.mxu0 0
      %2892 = vmatprep.subr.bf16.mxu0 0
      %2893 = vmatpush1.bf16.msra.mxu0 0
      %2894 = vmatprep.subr.bf16.mxu0 0
      %2895 = vmatpush1.bf16.msra.mxu0 0
      %2896 = vmatprep.subr.bf16.mxu0 0
      %2897 = vmatpush1.bf16.msra.mxu0 0
      %2898 = vmatprep.subr.bf16.mxu0 0
      %2899 = vmatpush1.bf16.msra.mxu0 0
      %2900 = vmatprep.subr.bf16.mxu0 0
      %2901 = vmatpush1.bf16.msra.mxu0 0
      %2902 = vmatprep.subr.bf16.mxu0 0
      %2903 = vmatpush1.bf16.msra.mxu0 0
      %2904 = vmatprep.subr.bf16.mxu0 0
      %2905 = vmatpush1.bf16.msra.mxu0 0
      %2906 = vmatprep.subr.bf16.mxu0 0
      %2907 = vmatpush1.bf16.msra.mxu0 0
      %2908 = vmatprep.subr.bf16.mxu0 0
      %2909 = vmatpush1.bf16.msra.mxu0 0
      %2910 = vmatprep.subr.bf16.mxu0 0
      %2911 = vmatpush1.bf16.msra.mxu0 0
      %2912 = vmatprep.subr.bf16.mxu0 0
      %2913 = vmatpush1.bf16.msra.mxu0 0
      %2914 = vmatprep.subr.bf16.mxu0 0
      %2915 = vmatpush1.bf16.msra.mxu0 0
      %2916 = vmatprep.subr.bf16.mxu0 0
      %2917 = vmatpush1.bf16.msra.mxu0 0
      %2918 = vmatprep.subr.bf16.mxu0 0
      %2919 = vmatpush1.bf16.msra.mxu0 0
      %2920 = vmatprep.mubr.bf16.mxu0 0
      %2921 = vmatmul.mubr.bf16.gmra.mrb[0].mxu0 %v2886
      %v2922 = vpop.f32.mrb[0].mxu0
      %v2923 = vadd.f32 0.0, %v2922
      %v2924 = vpop.f32.mrb[0].mxu0
      %v2925 = vpop.f32.mrb[0].mxu0
      %v2926 = vadd.f32 0.0, %v2925
      %v2927 = vpop.f32.mrb[0].mxu0
      %2928 = vdwg.mxu0
      %v2929 = vpack.c.bf16 %v2926, %v2923
      %v2938 = vunpack.c.l.b16 %v2434
      %v2939 = vunpack.c.l.b16 %v2435
      %v2940 = vunpack.c.l.b16 %v2436
      %v2941 = vunpack.c.l.b16 %v2437
      %v2942 = vunpack.c.l.b16 %v2438
      %v2943 = vunpack.c.l.b16 %v2439
      %v2944 = vunpack.c.l.b16 %v2440
      %v2945 = vunpack.c.l.b16 %v2441
      %v2946 = vpack.c.b16 %v2939, %v2938
      %v2947 = vpack.c.b16 %v2941, %v2940
      %v2948 = vpack.c.b16 %v2943, %v2942
      %v2949 = vpack.c.b16 %v2945, %v2944
      %v2955 = vsel %vm1174, %v2929, 0
      %2957 = vmatprep.subr.bf16.mxu0 0
      %2958 = vmatpush1.bf16.msra.mxu0 %v2946
      %2959 = vmatprep.subr.bf16.mxu0 0
      %2960 = vmatpush1.bf16.msra.mxu0 %v2947
      %2961 = vmatprep.subr.bf16.mxu0 0
      %2962 = vmatpush1.bf16.msra.mxu0 %v2948
      %2963 = vmatprep.subr.bf16.mxu0 0
      %2964 = vmatpush1.bf16.msra.mxu0 %v2949
      %2965 = vmatprep.subr.bf16.mxu0 0
      %2966 = vmatpush1.bf16.msra.mxu0 0
      %2967 = vmatprep.subr.bf16.mxu0 0
      %2968 = vmatpush1.bf16.msra.mxu0 0
      %2969 = vmatprep.subr.bf16.mxu0 0
      %2970 = vmatpush1.bf16.msra.mxu0 0
      %2971 = vmatprep.subr.bf16.mxu0 0
      %2972 = vmatpush1.bf16.msra.mxu0 0
      %2973 = vmatprep.subr.bf16.mxu0 0
      %2974 = vmatpush1.bf16.msra.mxu0 0
      %2975 = vmatprep.subr.bf16.mxu0 0
      %2976 = vmatpush1.bf16.msra.mxu0 0
      %2977 = vmatprep.subr.bf16.mxu0 0
      %2978 = vmatpush1.bf16.msra.mxu0 0
      %2979 = vmatprep.subr.bf16.mxu0 0
      %2980 = vmatpush1.bf16.msra.mxu0 0
      %2981 = vmatprep.subr.bf16.mxu0 0
      %2982 = vmatpush1.bf16.msra.mxu0 0
      %2983 = vmatprep.subr.bf16.mxu0 0
      %2984 = vmatpush1.bf16.msra.mxu0 0
      %2985 = vmatprep.subr.bf16.mxu0 0
      %2986 = vmatpush1.bf16.msra.mxu0 0
      %2987 = vmatprep.subr.bf16.mxu0 0
      %2988 = vmatpush1.bf16.msra.mxu0 0
      %2989 = vmatprep.mubr.bf16.mxu0 0
      %2990 = vmatmul.mubr.bf16.gmra.mrb[0].mxu0 %v2955
      %v2991 = vpop.f32.mrb[0].mxu0
      %v2992 = vadd.f32 0.0, %v2991
      %v2993 = vpop.f32.mrb[0].mxu0
      %v2994 = vpop.f32.mrb[0].mxu0
      %v2995 = vadd.f32 0.0, %v2994
      %v2996 = vpop.f32.mrb[0].mxu0
      %2997 = vdwg.mxu0
      %v2998 = vadd.f32 %v2799, %v2992
      %v2999 = vadd.f32 %v2800, %v2995
      %v3000 = vadd.f32 %v2998, %v2327
      %v3001 = vadd.f32 %v2999, %v2328
      %v3002 = vsel %vm1087, %v3000, 0.0
      %3003 = vadd.xlane.f32.xlu0 %v3002
      %v3004 = vpop.xlane.xlu0 %3003
      %v3005 = vsel %vm1087, %v3001, 0.0
      %3006 = vadd.xlane.f32.xlu0 %v3005
      %v3007 = vpop.xlane.xlu0 %3006
      %v3008 = vmul.f32 %v3004, %v1545
      %v3009 = vmul.f32 %v3007, %v1545
      %v3010 = vsub.f32 %v3000, %v3008
      %v3011 = vsub.f32 %v3001, %v3009
      %v3012 = vmul.f32 %v3010, %v3010
      %v3013 = vmul.f32 %v3011, %v3011
      %v3014 = vsel %vm1087, %v3012, 0.0
      %3015 = vadd.xlane.f32.xlu0 %v3014
      %v3016 = vpop.xlane.xlu0 %3015
      %v3017 = vsel %vm1087, %v3013, 0.0
      %3018 = vadd.xlane.f32.xlu0 %v3017
      %v3019 = vpop.xlane.xlu0 %3018
      %v3020 = vmul.f32 %v3016, %v1545
      %v3021 = vmul.f32 %v3019, %v1545
      %v3022 = vadd.f32 %v3020, 1e-05
      %v3023 = vadd.f32 %v3021, 1e-05
      %v3024 = vrsqrt.pop %v3022
      %v3025 = vrsqrt.pop %v3023
      %v3026 = vmul.f32 %v3010, %v3024
      %v3027 = vmul.f32 %v3011, %v3025
      %v3028 = vlaneseq
      %v3029 = vshrl.u32 %v3028, 7
      %v3030 = vsub.s32 1, %v3029
      %v3031 = vrot.slane %v2443, %v3030
      %v3032 = vmul.f32 %v3026, %v3031
      %v3033 = vmul.f32 %v3027, %v3031
      %v3034 = vlaneseq
      %v3035 = vshrl.u32 %v3034, 7
      %v3036 = vsub.s32 2, %v3035
      %v3037 = vrot.slane %v2443, %v3036
      %v3038 = vadd.f32 %v3032, %v3037
      %v3039 = vadd.f32 %v3033, %v3037
      %v3040 = vmul.f32 %v3038, %v2225
      %v3041 = vmul.f32 %v3039, %v2230
      %v3042 = vadd.s32 %v1573, 8
      %v3043 = vrot.slane %v3040, 7
      %v3044 = vrot.slane %v3041, 7
      %vm3045 = vcmp.lt.s32.totalorder %v1573, 1
      %v3046 = vsel %vm3045, %v3043, %v3044
      %v3047 = vsel %vm3045, %v3044, %v3043
      %v3048 = vadd.s32 %v3042, 4294967295
      %vm3049 = vcmp.ge.s32.totalorder %v3048, 0
      %vm3050 = vcmp.lt.s32.totalorder %v1575, 16
      %vm3051 = vcmp.lt.s32.totalorder %v3048, 16
      %vm3052 = vmand %vm1576, %vm3050
      %vm3053 = vmand %vm3049, %vm3051
      %v3054 = vsel %vm3052, %v3047, 0.0
      %v3055 = vsel %vm3053, %v3046, 0.0
      %v3056 = vrot.slane %v3040, 1
      %v3057 = vrot.slane %v3041, 1
      %vm3058 = vcmp.lt.s32.totalorder %v1573, 7
      %v3059 = vsel %vm3058, %v3056, %v3057
      %v3060 = vsel %vm3058, %v3057, %v3056
      %v3061 = vadd.s32 %v3042, 1
      %vm3062 = vcmp.ge.s32.totalorder %v3061, 0
      %vm3063 = vcmp.lt.s32.totalorder %v1581, 16
      %vm3064 = vcmp.lt.s32.totalorder %v3061, 16
      %vm3065 = vmand %vm1582, %vm3063
      %vm3066 = vmand %vm3062, %vm3064
      %v3067 = vsel %vm3065, %v3059, 0.0
      %v3068 = vsel %vm3066, %v3060, 0.0
      %3071 = vrot.lane.b32.xlu0 %v3040, 32
      %v3072 = vpop.permute.xlu0 %3071
      %3073 = vrot.lane.b32.xlu0 %v3041, 32
      %v3074 = vpop.permute.xlu0 %3073
      %3079 = vrot.lane.b32.xlu0 %v3067, 64
      %v3080 = vpop.permute.xlu0 %3079
      %3081 = vrot.lane.b32.xlu0 %v3068, 64
      %v3082 = vpop.permute.xlu0 %3081
      %v3085 = vsel %vm1087, %v3054, %v3072
      %v3086 = vsel %vm1087, %v3055, %v3074
      %v3087 = vsel %vm1174, %v3085, %v3080
      %v3088 = vsel %vm1174, %v3086, %v3082
      %v3089 = vpack.c.bf16 %v3088, %v3087
      %v3091 = vlaneseq
      %v3092 = vshrl.u32 %v3091, 7
      %v3093 = vsub.s32 0, %v3092
      %v3094 = vrot.slane %v2458, %v3093
      %v3108 = vunpack.c.l.b16 %v2445
      %v3109 = vunpack.c.l.b16 %v2446
      %v3110 = vunpack.c.l.b16 %v2447
      %v3111 = vunpack.c.l.b16 %v2448
      %v3112 = vunpack.c.l.b16 %v2449
      %v3113 = vunpack.c.l.b16 %v2450
      %v3114 = vunpack.c.l.b16 %v2451
      %v3115 = vunpack.c.l.b16 %v2452
      %v3116 = vunpack.c.l.b16 %v2453
      %v3117 = vunpack.c.l.b16 %v2454
      %v3118 = vunpack.c.l.b16 %v2455
      %v3119 = vunpack.c.l.b16 %v2456
      %v3120 = vpack.c.b16 %v3109, %v3108
      %v3121 = vpack.c.b16 %v3111, %v3110
      %v3122 = vpack.c.b16 %v3113, %v3112
      %v3123 = vpack.c.b16 %v3115, %v3114
      %v3124 = vpack.c.b16 %v3117, %v3116
      %v3125 = vpack.c.b16 %v3119, %v3118
      %v3133 = vsel %vm1639, %v3089, 0
      %3135 = vmatprep.subr.bf16.mxu0 0
      %3136 = vmatpush1.bf16.msra.mxu0 %v3120
      %3137 = vmatprep.subr.bf16.mxu0 0
      %3138 = vmatpush1.bf16.msra.mxu0 %v3121
      %3139 = vmatprep.subr.bf16.mxu0 0
      %3140 = vmatpush1.bf16.msra.mxu0 %v3122
      %3141 = vmatprep.subr.bf16.mxu0 0
      %3142 = vmatpush1.bf16.msra.mxu0 %v3123
      %3143 = vmatprep.subr.bf16.mxu0 0
      %3144 = vmatpush1.bf16.msra.mxu0 %v3124
      %3145 = vmatprep.subr.bf16.mxu0 0
      %3146 = vmatpush1.bf16.msra.mxu0 %v3125
      %3147 = vmatprep.subr.bf16.mxu0 0
      %3148 = vmatpush1.bf16.msra.mxu0 0
      %3149 = vmatprep.subr.bf16.mxu0 0
      %3150 = vmatpush1.bf16.msra.mxu0 0
      %3151 = vmatprep.subr.bf16.mxu0 0
      %3152 = vmatpush1.bf16.msra.mxu0 0
      %3153 = vmatprep.subr.bf16.mxu0 0
      %3154 = vmatpush1.bf16.msra.mxu0 0
      %3155 = vmatprep.subr.bf16.mxu0 0
      %3156 = vmatpush1.bf16.msra.mxu0 0
      %3157 = vmatprep.subr.bf16.mxu0 0
      %3158 = vmatpush1.bf16.msra.mxu0 0
      %3159 = vmatprep.subr.bf16.mxu0 0
      %3160 = vmatpush1.bf16.msra.mxu0 0
      %3161 = vmatprep.subr.bf16.mxu0 0
      %3162 = vmatpush1.bf16.msra.mxu0 0
      %3163 = vmatprep.subr.bf16.mxu0 0
      %3164 = vmatpush1.bf16.msra.mxu0 0
      %3165 = vmatprep.subr.bf16.mxu0 0
      %3166 = vmatpush1.bf16.msra.mxu0 0
      %3167 = vmatprep.mubr.bf16.mxu0 0
      %3168 = vmatmul.mubr.bf16.gmra.mrb[0].mxu0 %v3133
      %v3169 = vpop.f32.mrb[0].mxu0
      %v3170 = vadd.f32 %v3094, %v3169
      %v3171 = vpop.f32.mrb[0].mxu0
      %v3172 = vpop.f32.mrb[0].mxu0
      %v3173 = vadd.f32 %v3094, %v3172
      %v3174 = vpop.f32.mrb[0].mxu0
      %3175 = vdwg.mxu0
      %v3176 = vmax.f32 %v3170, 0.0
      %v3177 = vmax.f32 %v3173, 0.0
      %v3178 = vpack.c.bf16 %v3177, %v3176
      %v3179 = vlaneseq
      %v3180 = vshrl.u32 %v3179, 7
      %v3181 = vsub.s32 3, %v3180
      %v3182 = vrot.slane %v2443, %v3181
      %v3191 = vunpack.c.l.b16 %v2460
      %v3192 = vunpack.c.l.b16 %v2461
      %v3193 = vunpack.c.l.b16 %v2462
      %v3194 = vunpack.c.l.b16 %v2463
      %v3195 = vunpack.c.l.b16 %v2464
      %v3196 = vunpack.c.l.b16 %v2465
      %v3197 = vunpack.c.l.b16 %v2466
      %v3198 = vunpack.c.l.b16 %v2467
      %v3199 = vpack.c.b16 %v3192, %v3191
      %v3200 = vpack.c.b16 %v3194, %v3193
      %v3201 = vpack.c.b16 %v3196, %v3195
      %v3202 = vpack.c.b16 %v3198, %v3197
      %v3208 = vsel %vm1174, %v3178, 0
      %3210 = vmatprep.subr.bf16.mxu0 0
      %3211 = vmatpush1.bf16.msra.mxu0 %v3199
      %3212 = vmatprep.subr.bf16.mxu0 0
      %3213 = vmatpush1.bf16.msra.mxu0 %v3200
      %3214 = vmatprep.subr.bf16.mxu0 0
      %3215 = vmatpush1.bf16.msra.mxu0 %v3201
      %3216 = vmatprep.subr.bf16.mxu0 0
      %3217 = vmatpush1.bf16.msra.mxu0 %v3202
      %3218 = vmatprep.subr.bf16.mxu0 0
      %3219 = vmatpush1.bf16.msra.mxu0 0
      %3220 = vmatprep.subr.bf16.mxu0 0
      %3221 = vmatpush1.bf16.msra.mxu0 0
      %3222 = vmatprep.subr.bf16.mxu0 0
      %3223 = vmatpush1.bf16.msra.mxu0 0
      %3224 = vmatprep.subr.bf16.mxu0 0
      %3225 = vmatpush1.bf16.msra.mxu0 0
      %3226 = vmatprep.subr.bf16.mxu0 0
      %3227 = vmatpush1.bf16.msra.mxu0 0
      %3228 = vmatprep.subr.bf16.mxu0 0
      %3229 = vmatpush1.bf16.msra.mxu0 0
      %3230 = vmatprep.subr.bf16.mxu0 0
      %3231 = vmatpush1.bf16.msra.mxu0 0
      %3232 = vmatprep.subr.bf16.mxu0 0
      %3233 = vmatpush1.bf16.msra.mxu0 0
      %3234 = vmatprep.subr.bf16.mxu0 0
      %3235 = vmatpush1.bf16.msra.mxu0 0
      %3236 = vmatprep.subr.bf16.mxu0 0
      %3237 = vmatpush1.bf16.msra.mxu0 0
      %3238 = vmatprep.subr.bf16.mxu0 0
      %3239 = vmatpush1.bf16.msra.mxu0 0
      %3240 = vmatprep.subr.bf16.mxu0 0
      %3241 = vmatpush1.bf16.msra.mxu0 0
      %3242 = vmatprep.mubr.bf16.mxu0 0
      %3243 = vmatmul.mubr.bf16.gmra.mrb[0].mxu0 %v3208
      %v3244 = vpop.f32.mrb[0].mxu0
      %v3245 = vadd.f32 %v3182, %v3244
      %v3246 = vpop.f32.mrb[0].mxu0
      %v3247 = vpop.f32.mrb[0].mxu0
      %v3248 = vadd.f32 %v3182, %v3247
      %v3249 = vpop.f32.mrb[0].mxu0
      %3250 = vdwg.mxu0
      %v3251 = vadd.f32 %v3245, %v3040
      %v3252 = vadd.f32 %v3248, %v3041
      %v3253 = vsel %vm1087, %v3251, 0.0
      %3254 = vadd.xlane.f32.xlu0 %v3253
      %v3255 = vpop.xlane.xlu0 %3254
      %v3256 = vsel %vm1087, %v3252, 0.0
      %3257 = vadd.xlane.f32.xlu0 %v3256
      %v3258 = vpop.xlane.xlu0 %3257
      %v3259 = vmul.f32 %v3255, %v1545
      %v3260 = vmul.f32 %v3258, %v1545
      %v3261 = vsub.f32 %v3251, %v3259
      %v3262 = vsub.f32 %v3252, %v3260
      %v3263 = vmul.f32 %v3261, %v3261
      %v3264 = vmul.f32 %v3262, %v3262
      %v3265 = vsel %vm1087, %v3263, 0.0
      %3266 = vadd.xlane.f32.xlu0 %v3265
      %v3267 = vpop.xlane.xlu0 %3266
      %v3268 = vsel %vm1087, %v3264, 0.0
      %3269 = vadd.xlane.f32.xlu0 %v3268
      %v3270 = vpop.xlane.xlu0 %3269
      %v3271 = vmul.f32 %v3267, %v1545
      %v3272 = vmul.f32 %v3270, %v1545
      %v3273 = vadd.f32 %v3271, 1e-05
      %v3274 = vadd.f32 %v3272, 1e-05
      %v3275 = vrsqrt.pop %v3273
      %v3276 = vrsqrt.pop %v3274
      %v3277 = vmul.f32 %v3261, %v3275
      %v3278 = vmul.f32 %v3262, %v3276
      %v3279 = vlaneseq
      %v3280 = vshrl.u32 %v3279, 7
      %v3281 = vsub.s32 4, %v3280
      %v3282 = vrot.slane %v2443, %v3281
      %v3283 = vmul.f32 %v3277, %v3282
      %v3284 = vmul.f32 %v3278, %v3282
      %v3285 = vlaneseq
      %v3286 = vshrl.u32 %v3285, 7
      %v3287 = vsub.s32 5, %v3286
      %v3288 = vrot.slane %v2443, %v3287
      %v3289 = vadd.f32 %v3283, %v3288
      %v3290 = vadd.f32 %v3284, %v3288
      %v3291 = vmul.f32 %v3289, %v2225
      %v3292 = vmul.f32 %v3290, %v2230
      %v3293 = vpack.c.bf16 %v3292, %v3291
      %v3294 = vld [vmem:[%s18] sm:$0xf]
      %v3295 = vld [vmem:[%s18 + $0x4] sm:$0xf]
      %v3296 = vld [vmem:[%s18 + $0x8] sm:$0xf]
      %v3297 = vld [vmem:[%s18 + $0xc] sm:$0xf]
      %v3298 = vld [vmem:[%s19] sm:$0x1]
      %v3300 = vlaneseq
      %v3301 = vshrl.u32 %v3300, 7
      %v3302 = vsub.s32 0, %v3301
      %v3303 = vrot.slane %v3298, %v3302
      %v3309 = vunpack.c.l.b16 %v3294
      %v3310 = vunpack.c.l.b16 %v3295
      %v3311 = vunpack.c.l.b16 %v3296
      %v3312 = vunpack.c.l.b16 %v3297
      %v3313 = vpack.c.b16 %v3310, %v3309
      %v3314 = vpack.c.b16 %v3312, %v3311
      %v3318 = vsel %vm1087, %v3293, 0
      %3320 = vmatprep.subr.bf16.mxu0 0
      %3321 = vmatpush1.bf16.msra.mxu0 %v3313
      %3322 = vmatprep.subr.bf16.mxu0 0
      %3323 = vmatpush1.bf16.msra.mxu0 %v3314
      %3324 = vmatprep.subr.bf16.mxu0 0
      %3325 = vmatpush1.bf16.msra.mxu0 0
      %3326 = vmatprep.subr.bf16.mxu0 0
      %3327 = vmatpush1.bf16.msra.mxu0 0
      %3328 = vmatprep.subr.bf16.mxu0 0
      %3329 = vmatpush1.bf16.msra.mxu0 0
      %3330 = vmatprep.subr.bf16.mxu0 0
      %3331 = vmatpush1.bf16.msra.mxu0 0
      %3332 = vmatprep.subr.bf16.mxu0 0
      %3333 = vmatpush1.bf16.msra.mxu0 0
      %3334 = vmatprep.subr.bf16.mxu0 0
      %3335 = vmatpush1.bf16.msra.mxu0 0
      %3336 = vmatprep.subr.bf16.mxu0 0
      %3337 = vmatpush1.bf16.msra.mxu0 0
      %3338 = vmatprep.subr.bf16.mxu0 0
      %3339 = vmatpush1.bf16.msra.mxu0 0
      %3340 = vmatprep.subr.bf16.mxu0 0
      %3341 = vmatpush1.bf16.msra.mxu0 0
      %3342 = vmatprep.subr.bf16.mxu0 0
      %3343 = vmatpush1.bf16.msra.mxu0 0
      %3344 = vmatprep.subr.bf16.mxu0 0
      %3345 = vmatpush1.bf16.msra.mxu0 0
      %3346 = vmatprep.subr.bf16.mxu0 0
      %3347 = vmatpush1.bf16.msra.mxu0 0
      %3348 = vmatprep.subr.bf16.mxu0 0
      %3349 = vmatpush1.bf16.msra.mxu0 0
      %3350 = vmatprep.subr.bf16.mxu0 0
      %3351 = vmatpush1.bf16.msra.mxu0 0
      %3352 = vmatprep.mubr.bf16.mxu0 0
      %3353 = vmatmul.mubr.bf16.gmra.mrb[0].mxu0 %v3318
      %v3354 = vpop.f32.mrb[0].mxu0
      %v3355 = vadd.f32 %v3303, %v3354
      %v3356 = vpop.f32.mrb[0].mxu0
      %v3357 = vpop.f32.mrb[0].mxu0
      %v3358 = vadd.f32 %v3303, %v3357
      %v3359 = vpop.f32.mrb[0].mxu0
      %3360 = vdwg.mxu0
      %3361 = vst [vmem:[%s717] sm:$0xff] %v3355
      %3362 = vst [vmem:[%s717 + $0x8] sm:$0xff] %v3358
      %p3363 = scmp.lt.s32.totalorder %s33, 1
      %s3364 = scalar_select %p3363, %s33, 1
      %s3365 = smul.addr %s3364, 2
      %s3366 = smul.addr %s3365, 8
      %s3367 = scalar_lea.vmem %s20, %s3366
      %p3368 = scmp.lt.s32.totalorder %s33, 1
      %s3369 = scalar_select %p3368, %s33, 1
      %s3370 = smul.addr %s3369, 8
      %s3371 = scalar_lea.vmem %s21, %s3370
      // Predicated region
      $region101: #{fastspeech_forward.1} parent=99 // pred_check
        %p3372 = pneg %p491
      $region102: #{fastspeech_forward.1} parent=99 // pred_check_branch
        %3374 = sbr.rel (%p3372) target = $region104
      $region103: #{fastspeech_forward.1} parent=99 // pred_region
        _
      $region104: #{fastspeech_forward.1} parent=99 // pred_fallthru
        _
      // Predicated region
      $region105: #{fastspeech_forward.1} parent=99 // pred_check
        %p3375 = pneg %p517
      $region106: #{fastspeech_forward.1} parent=99 // pred_check_branch
        %3377 = sbr.rel (%p3375) target = $region108
      $region107: #{fastspeech_forward.1} parent=99 // pred_region
        _
      $region108: #{fastspeech_forward.1} parent=99 // pred_fallthru
        _
    $region100: #{fastspeech_forward.1} parent=5 // pred_fallthru
      _
    %p3378 = scmp.le.s32.totalorder 2, %s28
    // Predicated region
    $region109: #{fastspeech_forward.1} parent=5 // pred_check
      %p3379 = pneg %p3378
    $region110: #{fastspeech_forward.1} parent=5 // pred_check_branch
      %3381 = sbr.rel (%p3379) target = $region112
    $region111: #{fastspeech_forward.1} parent=5 // pred_region
      %s3382 = ssub.s32 %s28, 2
      // Predicated region
      $region113: #{fastspeech_forward.1} parent=111 // pred_check
        %p3383 = pneg %p497
      $region114: #{fastspeech_forward.1} parent=111 // pred_check_branch
        %3385 = sbr.rel (%p3383) target = $region116
      $region115: #{fastspeech_forward.1} parent=111 // pred_region
        %p3386 = scmp.lt.s32.totalorder %s34, 1
        %s3387 = scalar_select %p3386, %s34, 1
        %s3388 = smul.addr %s3387, 2
        %s3389 = smul.addr %s3388, 8
        %s3390 = scalar_lea.vmem %s20, %s3389
      $region116: #{fastspeech_forward.1} parent=111 // pred_fallthru
        _
      // Predicated region
      $region117: #{fastspeech_forward.1} parent=111 // pred_check
        %p3391 = pneg %p523
      $region118: #{fastspeech_forward.1} parent=111 // pred_check_branch
        %3393 = sbr.rel (%p3391) target = $region120
      $region119: #{fastspeech_forward.1} parent=111 // pred_region
        %p3394 = scmp.lt.s32.totalorder %s34, 1
        %s3395 = scalar_select %p3394, %s34, 1
        %s3396 = smul.addr %s3395, 8
        %s3397 = scalar_lea.vmem %s21, %s3396
      $region120: #{fastspeech_forward.1} parent=111 // pred_fallthru
        _
    $region112: #{fastspeech_forward.1} parent=5 // pred_fallthru
      _
  $region6: #{fastspeech_forward.1} parent=0 // loop_footer
    %s32 = sadd.s32 1, %s28
  $region7: #{fastspeech_forward.1} parent=0 // loop_footer_branch
    %27 = sbr.rel target = $region3
  $region8: #{fastspeech_forward.1} parent=0 // loop_exit
    _

</llo_original>
